<compile_context>
chip_gen: v6e
topology: v6e:2x2x1
jax: 0.10.0
libtpu: 0.0.40
codegen_flags: <defaults>
</compile_context>

<pallas_src>
import math

import jax
import jax.numpy as jnp
from jax import lax
from jax.experimental import pallas as pl
from jax.experimental.pallas import tpu as pltpu

EPS = 1e-15
MXU_DTYPE = jnp.bfloat16   # MXU input dtype; accumulation stays float32


def _bf(v):
    return v if v.dtype == MXU_DTYPE else v.astype(MXU_DTYPE)


def _dot(a, b):          # a @ b        (bf16 in, f32 accumulate)
    return lax.dot_general(_bf(a), _bf(b), (((1,), (0,)), ((), ())),
                           preferred_element_type=jnp.float32)


def _dot_tn(a, b):       # a^T @ b      (contract leading dims)
    return lax.dot_general(_bf(a), _bf(b), (((0,), (0,)), ((), ())),
                           preferred_element_type=jnp.float32)


def _dot_nt(a, b):       # a @ b^T      (contract trailing dims)
    return lax.dot_general(_bf(a), _bf(b), (((1,), (1,)), ((), ())),
                           preferred_element_type=jnp.float32)


# ------------------------------------------------------------------ kernel ---

def _fused_kernel(x_ref, adj_ref,
                  w1_ref, b1_ref, w2_ref, b2_ref, wp_ref, bp_ref,
                  w3_ref, b3_ref, w4_ref, b4_ref, w5_ref, b5_ref,
                  xrec_ref, adjout_ref, mc_ref, ortho_ref):
    x = x_ref[...]            # (N, F)  f32
    adj = adj_ref[...]        # (N, N)  bf16 binary adjacency (zero diagonal)

    # ---- degrees of A_hat = A + I ------------------------------------------
    # Single N^2 reduction; adj is symmetric so column degrees == row degrees
    # and are never materialized as an (1, N) row vector.
    deg = jnp.sum(adj.astype(jnp.float32), axis=1, keepdims=True) + 1.0  # (N,1)
    rsq = lax.rsqrt(deg)                                                 # (N,1)

    # GCN layer with the D^-1/2 (A+I) D^-1/2 normalization folded into cheap
    # (N, f) row scalings.  The raw bf16 adjacency is the only N^2 operand:
    #     A_norm @ z = rsq * (adj @ (rsq*z) + rsq*z)
    # Matmul order: X@W first when fin >= fout (keeps the N^2 product narrow),
    # (A@X)@W when fin < fout.
    def gcn(h, w_ref_, b_ref_, act):
        w = w_ref_[...]
        b = b_ref_[...]
        fin, fout = w.shape                         # static
        hs = rsq * h                                # (N, fin)
        if fin >= fout:
            y = _dot(hs, w)                         # (N, fout)
            out = rsq * (_dot(adj, y) + y) + b
        else:
            ah = _dot(adj, hs) + hs                 # (N, fin)  = A_hat @ hs
            out = _dot(rsq * ah, w) + b
        return jnp.tanh(out) if act else out

    # ---- encoder ----
    h = gcn(x, w1_ref, b1_ref, True)                # conv1 + tanh  (N, H)
    h = gcn(h, w2_ref, b2_ref, True)                # conv2 + tanh  (N, H)

    # ---- pooling assignment: s = softmax(h @ Wp + bp), f32, exact recip ----
    logits = _dot(h, wp_ref[...]) + bp_ref[...]     # (N, K)
    m = jnp.max(logits, axis=-1, keepdims=True)
    e = jnp.exp(logits - m)
    s = e * pl.reciprocal(jnp.sum(e, axis=-1, keepdims=True), approx=False)

    # ---- dense mincut pool ----
    out = _dot_tn(s, h)                             # (K, H) = s^T h
    a_s = _dot(adj, s)                              # (N, K) = A s (raw bf16 adj)
    out_adj = _dot_tn(s, a_s)                       # (K, K) = s^T A s
    out_adj_t = _dot_tn(a_s, s)                     # exact transpose of out_adj

    k = out_adj.shape[0]
    row = lax.broadcasted_iota(jnp.int32, (k, k), 0)
    col = lax.broadcasted_iota(jnp.int32, (k, k), 1)
    eye_k = jnp.where(row == col, 1.0, 0.0)         # K x K only (tiny)

    # mincut loss:  trace(s^T A s) = sum((A s) * s)  -- no eye needed
    mincut_num = jnp.sum(a_s * s, keepdims=True)                 # (1, 1)
    d_flat = deg - 1.0                                           # rowsum(A)
    mincut_den = jnp.sum(d_flat * (s * s), keepdims=True) + EPS
    mc_ref[...] = -(mincut_num / mincut_den)

    # orthogonality loss (f32 throughout)
    ss = lax.dot_general(s, s, (((0,), (0,)), ((), ())),
                         preferred_element_type=jnp.float32)     # (K, K)
    ss_norm = jnp.sqrt(jnp.sum(ss * ss, keepdims=True))          # (1, 1)
    diff = ss * (1.0 / (ss_norm + EPS)) - eye_k * (1.0 / math.sqrt(k))
    ortho_ref[...] = jnp.sqrt(jnp.sum(diff * diff, keepdims=True))

    # zero diagonal + symmetric degree-normalization of pooled adjacency.
    # The reference normalizes BOTH sides with the ROW sums of out_adj; the
    # (1, K) copy of those row sums comes from the exactly-transposed matmul
    # (no transpose / relayout, no reliance on post-rounding symmetry).
    zadj = out_adj * (1.0 - eye_k)
    zadj_t = out_adj_t * (1.0 - eye_k)
    d_col = jnp.sqrt(jnp.sum(zadj, axis=1, keepdims=True)) + EPS    # (K, 1)
    d_row = jnp.sqrt(jnp.sum(zadj_t, axis=0, keepdims=True)) + EPS  # (1, K)
    out_adj_n = zadj * (1.0 / d_col) * (1.0 / d_row)

    # ---- decoder reconstruction ----
    x_out = _dot(s, out)                             # (N, H)
    tmp = _dot(s, out_adj_n)                         # (N, K)
    adjout_ref[...] = _dot_nt(tmp, s)                # (N, N)

    h = gcn(x_out, w3_ref, b3_ref, True)             # conv3 + tanh
    h = gcn(h, w4_ref, b4_ref, True)                 # conv4 + tanh
    xrec_ref[...] = gcn(h, w5_ref, b5_ref, False)    # conv5


# --------------------------------------------------------------- wrapper -----

def _cost(n, f, h, k):
    mm = lambda m, kk, nn: 2 * m * kk * nn
    flops = (
        mm(n, n, f) + mm(n, f, h)              # conv1
        + mm(n, h, h) + mm(n, n, h)            # conv2
        + mm(n, h, k)                          # pool linear
        + mm(n, h, k)                          # out = s^T h
        + mm(n, n, k)                          # a_s = A s
        + 2 * mm(n, k, k)                      # out_adj + exact transpose
        + mm(n, k, k)                          # ss = s^T s
        + mm(n, k, h)                          # x_out = s @ out
        + mm(n, k, k)                          # tmp = s @ out_adj
        + mm(n, k, n)                          # adj_out = tmp @ s^T
        + 2 * (mm(n, h, h) + mm(n, n, h))      # conv3, conv4
        + mm(n, h, f) + mm(n, n, f)            # conv5
    )
    transcendentals = 4 * n * h + n * k + n + 2 * k + 8     # tanh, exp, rsqrt, sqrt
    w_bytes = 4 * (f * h + 3 * h * h + h * k + h * f + 4 * h + k + f)
    bytes_accessed = (2 * n * n                # adj in (bf16)
                      + 4 * n * f              # x in
                      + w_bytes                # weights / biases
                      + 4 * n * n              # adj_out out (f32)
                      + 4 * n * f + 8)         # x_rec + losses
    return int(flops), int(transcendentals), int(bytes_accessed)


def mincutpool_ae_forward(x, adj, p):
    n, f = x.shape
    h = p["w1"].shape[1]
    k = p["wp"].shape[1]

    # Binary adjacency is exact in bf16 -> halves the dominant N^2 DMA + VMEM.
    # (A weighted adjacency would lose ~0.4% precision here.)
    adj_bf = adj.astype(MXU_DTYPE)

    vmem = pl.BlockSpec(memory_space=pltpu.MemorySpace.VMEM)
    args = (x, adj_bf,
            p["w1"], p["b1"], p["w2"], p["b2"], p["wp"], p["bp"],
            p["w3"], p["b3"], p["w4"], p["b4"], p["w5"], p["b5"])
    out_shape = (jax.ShapeDtypeStruct((n, f), jnp.float32),   # x_rec
                 jax.ShapeDtypeStruct((n, n), jnp.float32),   # adj_out
                 jax.ShapeDtypeStruct((1, 1), jnp.float32),   # mincut loss
                 jax.ShapeDtypeStruct((1, 1), jnp.float32))   # ortho loss

    flops, trans, bytes_accessed = _cost(n, f, h, k)
    # Live N^2 buffers: adj bf16 (2N^2) + adj_out f32 (4N^2) + one transient
    # f32 N^2 value (matmul result / degree upcast) -> ~10N^2, plus headroom.
    vmem_limit = int(min(100 * 1024 * 1024, 12 * n * n + (8 << 20)))

    x_rec, adj_out, mc, ortho = pl.pallas_call(
        _fused_kernel,
        out_shape=out_shape,
        in_specs=[vmem] * len(args),
        out_specs=(vmem, vmem, vmem, vmem),
        compiler_params=pltpu.CompilerParams(vmem_limit_bytes=vmem_limit),
        cost_estimate=pl.CostEstimate(flops=flops, transcendentals=trans,
                                      bytes_accessed=bytes_accessed),
    )(*args)
    # TODO(synk): args.recon_adj=True branch (dense_to_sparse of adj_out) not
    # implemented; decoder reuses the encoder graph (recon_adj=False path).
    # TODO(synk): emit adj_out as bf16 to halve the N^2 writeback if the
    # downstream reconstruction loss tolerates it.
    return x_rec, adj_out, mc[0, 0], ortho[0, 0]


# --------------------------------------------------------------- reference ---

def _ref_forward(x, adj, p):
    # Pure f32 JAX reference of the same math (PyG GCNConv + dense_mincut_pool).
    n = adj.shape[0]
    a_hat = adj + jnp.eye(n)
    dr = jnp.sum(a_hat, 1, keepdims=True)
    dc = jnp.sum(a_hat, 0, keepdims=True)
    a_norm = a_hat / jnp.sqrt(dr) / jnp.sqrt(dc)

    def gcn(w, b, h, act):
        o = a_norm @ h @ w + b
        return jnp.tanh(o) if act else o

    h = gcn(p["w1"], p["b1"], x, True)
    h = gcn(p["w2"], p["b2"], h, True)

    logits = h @ p["wp"] + p["bp"]
    s = jax.nn.softmax(logits, -1)
    k = s.shape[1]
    out = s.T @ h
    out_adj = s.T @ adj @ s
    mincut_num = jnp.trace(out_adj)
    d_flat = jnp.sum(adj, -1)
    mincut_den = jnp.trace(s.T @ jnp.diag(d_flat) @ s) + EPS
    mc = -(mincut_num / mincut_den)
    ss = s.T @ s
    ortho = jnp.linalg.norm(ss / (jnp.linalg.norm(ss) + EPS)
                            - jnp.eye(k) / jnp.linalg.norm(jnp.eye(k)))
    oa = out_adj * (1.0 - jnp.eye(k))
    d2 = jnp.sqrt(jnp.sum(oa, -1)) + EPS
    oa = oa / d2[None, :] / d2[:, None]
    x_out = s @ out
    adj_out = s @ oa @ s.T

    h = gcn(p["w3"], p["b3"], x_out, True)
    h = gcn(p["w4"], p["b4"], h, True)
    x_rec = gcn(p["w5"], p["b5"], h, False)
    return x_rec, adj_out, mc, ortho


# -------------------------------------------------------------------- main ---

if __name__ == "__main__":
    # N a multiple of 128 so adj / adj_out are lane-dense (see review);
    # still a small demo: 128 nodes, 8 features, hidden 16, ratio 0.5 -> K=64.
    N, F, H = 128, 8, 16
    K = int(N * 0.5)

    key = jax.random.PRNGKey(0)
    ks = jax.random.split(key, 12)

    # symmetric binary adjacency, zero diagonal, no isolated nodes (ring added)
    rnd = jax.random.uniform(ks[0], (N, N))
    upper = jnp.triu((rnd > 0.7).astype(jnp.float32), 1)
    ring = jnp.zeros((N, N)).at[jnp.arange(N - 1), jnp.arange(1, N)].set(1.0)
    adj = jnp.clip(upper + ring, 0.0, 1.0)
    adj = jnp.clip(adj + adj.T, 0.0, 1.0).astype(jnp.float32)

    x = jax.random.normal(ks[1], (N, F), dtype=jnp.float32)

    def _w(k_, fin, fout):
        return (jax.random.normal(k_, (fin, fout), dtype=jnp.float32)
                / jnp.sqrt(jnp.float32(fin)))

    params = {
        "w1": _w(ks[2], F, H), "b1": jnp.zeros((1, H), jnp.float32),
        "w2": _w(ks[3], H, H), "b2": jnp.zeros((1, H), jnp.float32),
        "wp": _w(ks[4], H, K),
        "bp": 0.1 * jax.random.normal(ks[5], (1, K), dtype=jnp.float32),
        "w3": _w(ks[6], H, H), "b3": jnp.zeros((1, H), jnp.float32),
        "w4": _w(ks[7], H, H), "b4": jnp.zeros((1, H), jnp.float32),
        "w5": _w(ks[8], H, F), "b5": jnp.zeros((1, F), jnp.float32),
    }

    x_rec, adj_out, mc_loss, o_loss = mincutpool_ae_forward(x, adj, params)
    jax.block_until_ready((x_rec, adj_out, mc_loss, o_loss))

    # correctness check vs. a pure-f32 JAX reference; tolerance accounts for
    # bf16 MXU inputs (f32 accumulation) compounding across the 6 fused layers.
    rx, radj, rmc, ro = _ref_forward(x, adj, params)
    TOL = 4e-2
    assert jnp.allclose(x_rec, rx, atol=TOL, rtol=TOL), "x_rec mismatch"
    assert jnp.allclose(adj_out, radj, atol=TOL, rtol=TOL), "adj_out mismatch"
    assert jnp.allclose(mc_loss, rmc, atol=TOL, rtol=TOL), "mincut loss mismatch"
    assert jnp.allclose(o_loss, ro, atol=TOL, rtol=TOL), "ortho loss mismatch"

    print("KERNEL_OK")
</pallas_src>

<mosaic_0001>
module attributes {stable_mosaic.version = 11 : i64} {
  func.func @_fused_kernel(%arg0: memref<128x8xf32, #tpu.memory_space<vmem>>, %arg1: memref<128x128xbf16, #tpu.memory_space<vmem>>, %arg2: memref<8x16xf32, #tpu.memory_space<vmem>>, %arg3: memref<1x16xf32, #tpu.memory_space<vmem>>, %arg4: memref<16x16xf32, #tpu.memory_space<vmem>>, %arg5: memref<1x16xf32, #tpu.memory_space<vmem>>, %arg6: memref<16x64xf32, #tpu.memory_space<vmem>>, %arg7: memref<1x64xf32, #tpu.memory_space<vmem>>, %arg8: memref<16x16xf32, #tpu.memory_space<vmem>>, %arg9: memref<1x16xf32, #tpu.memory_space<vmem>>, %arg10: memref<16x16xf32, #tpu.memory_space<vmem>>, %arg11: memref<1x16xf32, #tpu.memory_space<vmem>>, %arg12: memref<16x8xf32, #tpu.memory_space<vmem>>, %arg13: memref<1x8xf32, #tpu.memory_space<vmem>>, %arg14: memref<128x8xf32, #tpu.memory_space<vmem>>, %arg15: memref<128x128xf32, #tpu.memory_space<vmem>>, %arg16: memref<1x1xf32, #tpu.memory_space<vmem>>, %arg17: memref<1x1xf32, #tpu.memory_space<vmem>>) attributes {dimension_semantics = [], scalar_prefetch = 0 : i64, scratch_operands = 0 : i64, tpu.core_type = #tpu.core_type<tc>} {
    %c0 = arith.constant 0 : index
    %c0_0 = arith.constant 0 : index
    %0 = vector.load %arg0[%c0, %c0_0] : memref<128x8xf32, #tpu.memory_space<vmem>>, vector<128x8xf32>
    %c0_1 = arith.constant 0 : index
    %c0_2 = arith.constant 0 : index
    %1 = vector.load %arg1[%c0_1, %c0_2] : memref<128x128xbf16, #tpu.memory_space<vmem>>, vector<128x128xbf16>
    %2 = arith.extf %1 : vector<128x128xbf16> to vector<128x128xf32>
    %cst = arith.constant dense<0.000000e+00> : vector<128xf32>
    %3 = vector.multi_reduction <add>, %2, %cst [1] : vector<128x128xf32> to vector<128xf32>
    %4 = vector.shape_cast %3 : vector<128xf32> to vector<128x1xf32>
    %cst_3 = arith.constant 1.000000e+00 : f32
    %5 = vector.broadcast %cst_3 : f32 to vector<128x1xf32>
    %6 = arith.addf %4, %5 : vector<128x1xf32>
    %7 = math.rsqrt %6 : vector<128x1xf32>
    %c0_4 = arith.constant 0 : index
    %c0_5 = arith.constant 0 : index
    %8 = vector.load %arg2[%c0_4, %c0_5] : memref<8x16xf32, #tpu.memory_space<vmem>>, vector<8x16xf32>
    %c0_6 = arith.constant 0 : index
    %c0_7 = arith.constant 0 : index
    %9 = vector.load %arg3[%c0_6, %c0_7] : memref<1x16xf32, #tpu.memory_space<vmem>>, vector<1x16xf32>
    %10 = vector.broadcast %7 : vector<128x1xf32> to vector<128x8xf32>
    %11 = arith.mulf %10, %0 : vector<128x8xf32>
    %12 = arith.truncf %11 : vector<128x8xf32> to vector<128x8xbf16>
    %cst_8 = arith.constant dense<0.000000e+00> : vector<128x8xf32>
    %13 = tpu.matmul %1, %12, %cst_8 {dimension_numbers = #tpu.dot_dimension_numbers<[1], [0], [0], [1], [0, 0, 1, 1], [], []>} : vector<128x128xbf16>, vector<128x8xbf16>, vector<128x8xf32> -> vector<128x8xf32>
    %14 = arith.addf %13, %11 : vector<128x8xf32>
    %15 = vector.broadcast %7 : vector<128x1xf32> to vector<128x8xf32>
    %16 = arith.mulf %15, %14 : vector<128x8xf32>
    %17 = arith.truncf %16 : vector<128x8xf32> to vector<128x8xbf16>
    %18 = arith.truncf %8 : vector<8x16xf32> to vector<8x16xbf16>
    %cst_9 = arith.constant dense<0.000000e+00> : vector<128x16xf32>
    %19 = tpu.matmul %17, %18, %cst_9 {dimension_numbers = #tpu.dot_dimension_numbers<[1], [0], [0], [1], [0, 0, 1, 1], [], []>} : vector<128x8xbf16>, vector<8x16xbf16>, vector<128x16xf32> -> vector<128x16xf32>
    %20 = vector.broadcast %9 : vector<1x16xf32> to vector<128x16xf32>
    %21 = arith.addf %19, %20 : vector<128x16xf32>
    %22 = math.tanh %21 : vector<128x16xf32>
    %c0_10 = arith.constant 0 : index
    %c0_11 = arith.constant 0 : index
    %23 = vector.load %arg4[%c0_10, %c0_11] : memref<16x16xf32, #tpu.memory_space<vmem>>, vector<16x16xf32>
    %c0_12 = arith.constant 0 : index
    %c0_13 = arith.constant 0 : index
    %24 = vector.load %arg5[%c0_12, %c0_13] : memref<1x16xf32, #tpu.memory_space<vmem>>, vector<1x16xf32>
    %25 = vector.broadcast %7 : vector<128x1xf32> to vector<128x16xf32>
    %26 = arith.mulf %25, %22 : vector<128x16xf32>
    %27 = arith.truncf %26 : vector<128x16xf32> to vector<128x16xbf16>
    %28 = arith.truncf %23 : vector<16x16xf32> to vector<16x16xbf16>
    %cst_14 = arith.constant dense<0.000000e+00> : vector<128x16xf32>
    %29 = tpu.matmul %27, %28, %cst_14 {dimension_numbers = #tpu.dot_dimension_numbers<[1], [0], [0], [1], [0, 0, 1, 1], [], []>} : vector<128x16xbf16>, vector<16x16xbf16>, vector<128x16xf32> -> vector<128x16xf32>
    %30 = arith.truncf %29 : vector<128x16xf32> to vector<128x16xbf16>
    %cst_15 = arith.constant dense<0.000000e+00> : vector<128x16xf32>
    %31 = tpu.matmul %1, %30, %cst_15 {dimension_numbers = #tpu.dot_dimension_numbers<[1], [0], [0], [1], [0, 0, 1, 1], [], []>} : vector<128x128xbf16>, vector<128x16xbf16>, vector<128x16xf32> -> vector<128x16xf32>
    %32 = arith.addf %31, %29 : vector<128x16xf32>
    %33 = vector.broadcast %7 : vector<128x1xf32> to vector<128x16xf32>
    %34 = arith.mulf %33, %32 : vector<128x16xf32>
    %35 = vector.broadcast %24 : vector<1x16xf32> to vector<128x16xf32>
    %36 = arith.addf %34, %35 : vector<128x16xf32>
    %37 = math.tanh %36 : vector<128x16xf32>
    %c0_16 = arith.constant 0 : index
    %c0_17 = arith.constant 0 : index
    %38 = vector.load %arg6[%c0_16, %c0_17] : memref<16x64xf32, #tpu.memory_space<vmem>>, vector<16x64xf32>
    %39 = arith.truncf %37 : vector<128x16xf32> to vector<128x16xbf16>
    %40 = arith.truncf %38 : vector<16x64xf32> to vector<16x64xbf16>
    %cst_18 = arith.constant dense<0.000000e+00> : vector<128x64xf32>
    %41 = tpu.matmul %39, %40, %cst_18 {dimension_numbers = #tpu.dot_dimension_numbers<[1], [0], [0], [1], [0, 0, 1, 1], [], []>} : vector<128x16xbf16>, vector<16x64xbf16>, vector<128x64xf32> -> vector<128x64xf32>
    %c0_19 = arith.constant 0 : index
    %c0_20 = arith.constant 0 : index
    %42 = vector.load %arg7[%c0_19, %c0_20] : memref<1x64xf32, #tpu.memory_space<vmem>>, vector<1x64xf32>
    %43 = vector.broadcast %42 : vector<1x64xf32> to vector<128x64xf32>
    %44 = arith.addf %41, %43 : vector<128x64xf32>
    %cst_21 = arith.constant dense<0xFF800000> : vector<128xf32>
    %45 = vector.multi_reduction <maximumf>, %44, %cst_21 [1] : vector<128x64xf32> to vector<128xf32>
    %46 = vector.shape_cast %45 : vector<128xf32> to vector<128x1xf32>
    %47 = vector.broadcast %46 : vector<128x1xf32> to vector<128x64xf32>
    %48 = arith.subf %44, %47 : vector<128x64xf32>
    %49 = math.exp %48 : vector<128x64xf32>
    %cst_22 = arith.constant dense<0.000000e+00> : vector<128xf32>
    %50 = vector.multi_reduction <add>, %49, %cst_22 [1] : vector<128x64xf32> to vector<128xf32>
    %51 = vector.shape_cast %50 : vector<128xf32> to vector<128x1xf32>
    %52 = tpu.reciprocal %51 : vector<128x1xf32> -> vector<128x1xf32>
    %53 = vector.broadcast %52 : vector<128x1xf32> to vector<128x64xf32>
    %54 = arith.mulf %49, %53 : vector<128x64xf32>
    %55 = arith.truncf %54 : vector<128x64xf32> to vector<128x64xbf16>
    %56 = arith.truncf %37 : vector<128x16xf32> to vector<128x16xbf16>
    %cst_23 = arith.constant dense<0.000000e+00> : vector<64x16xf32>
    %57 = tpu.matmul %55, %56, %cst_23 {dimension_numbers = #tpu.dot_dimension_numbers<[0], [0], [1], [1], [0, 1, 1, 1], [], []>} : vector<128x64xbf16>, vector<128x16xbf16>, vector<64x16xf32> -> vector<64x16xf32>
    %58 = arith.truncf %54 : vector<128x64xf32> to vector<128x64xbf16>
    %cst_24 = arith.constant dense<0.000000e+00> : vector<128x64xf32>
    %59 = tpu.matmul %1, %58, %cst_24 {dimension_numbers = #tpu.dot_dimension_numbers<[1], [0], [0], [1], [0, 0, 1, 1], [], []>} : vector<128x128xbf16>, vector<128x64xbf16>, vector<128x64xf32> -> vector<128x64xf32>
    %60 = arith.truncf %54 : vector<128x64xf32> to vector<128x64xbf16>
    %61 = arith.truncf %59 : vector<128x64xf32> to vector<128x64xbf16>
    %cst_25 = arith.constant dense<0.000000e+00> : vector<64x64xf32>
    %62 = tpu.matmul %60, %61, %cst_25 {dimension_numbers = #tpu.dot_dimension_numbers<[0], [0], [1], [1], [0, 1, 1, 1], [], []>} : vector<128x64xbf16>, vector<128x64xbf16>, vector<64x64xf32> -> vector<64x64xf32>
    %63 = arith.truncf %59 : vector<128x64xf32> to vector<128x64xbf16>
    %64 = arith.truncf %54 : vector<128x64xf32> to vector<128x64xbf16>
    %cst_26 = arith.constant dense<0.000000e+00> : vector<64x64xf32>
    %65 = tpu.matmul %63, %64, %cst_26 {dimension_numbers = #tpu.dot_dimension_numbers<[0], [0], [1], [1], [0, 1, 1, 1], [], []>} : vector<128x64xbf16>, vector<128x64xbf16>, vector<64x64xf32> -> vector<64x64xf32>
    %66 = tpu.iota {dimensions = array<i32: 0>} : vector<64x64xi32>
    %67 = tpu.iota {dimensions = array<i32: 1>} : vector<64x64xi32>
    %68 = arith.cmpi eq, %66, %67 : vector<64x64xi32>
    %cst_27 = arith.constant 1.000000e+00 : f32
    %cst_28 = arith.constant 0.000000e+00 : f32
    %69 = vector.broadcast %cst_27 : f32 to vector<64x64xf32>
    %70 = vector.broadcast %cst_28 : f32 to vector<64x64xf32>
    %71 = arith.select %68, %69, %70 : vector<64x64xi1>, vector<64x64xf32>
    %72 = arith.mulf %59, %54 : vector<128x64xf32>
    %73 = vector.shape_cast %72 : vector<128x64xf32> to vector<1x128x64xf32>
    %cst_29 = arith.constant dense<0.000000e+00> : vector<1xf32>
    %74 = vector.multi_reduction <add>, %73, %cst_29 [1, 2] : vector<1x128x64xf32> to vector<1xf32>
    %75 = vector.shape_cast %74 : vector<1xf32> to vector<1x1x1xf32>
    %76 = vector.extract %75[0, 0, 0] : f32 from vector<1x1x1xf32>
    %77 = vector.broadcast %76 : f32 to vector<1x1xf32>
    %cst_30 = arith.constant 1.000000e+00 : f32
    %78 = vector.broadcast %cst_30 : f32 to vector<128x1xf32>
    %79 = arith.subf %6, %78 : vector<128x1xf32>
    %80 = arith.mulf %54, %54 : vector<128x64xf32>
    %81 = vector.broadcast %79 : vector<128x1xf32> to vector<128x64xf32>
    %82 = arith.mulf %81, %80 : vector<128x64xf32>
    %83 = vector.shape_cast %82 : vector<128x64xf32> to vector<1x128x64xf32>
    %cst_31 = arith.constant dense<0.000000e+00> : vector<1xf32>
    %84 = vector.multi_reduction <add>, %83, %cst_31 [1, 2] : vector<1x128x64xf32> to vector<1xf32>
    %85 = vector.shape_cast %84 : vector<1xf32> to vector<1x1x1xf32>
    %86 = vector.extract %85[0, 0, 0] : f32 from vector<1x1x1xf32>
    %87 = vector.broadcast %86 : f32 to vector<1x1xf32>
    %cst_32 = arith.constant 1.000000e-15 : f32
    %88 = vector.broadcast %cst_32 : f32 to vector<1x1xf32>
    %89 = arith.addf %87, %88 : vector<1x1xf32>
    %90 = arith.divf %77, %89 : vector<1x1xf32>
    %cst_33 = arith.constant 0.000000e+00 : f32
    %91 = vector.broadcast %cst_33 : f32 to vector<1x1xf32>
    %92 = arith.subf %91, %90 : vector<1x1xf32>
    %c0_34 = arith.constant 0 : index
    %c0_35 = arith.constant 0 : index
    %93 = vector.load %arg16[%c0_34, %c0_35] : memref<1x1xf32, #tpu.memory_space<vmem>>, vector<1x1xf32>
    tpu.vector_store %arg16[%c0_34, %c0_35], %92 {strides = array<i32>} : memref<1x1xf32, #tpu.memory_space<vmem>>, vector<1x1xf32>,
    %cst_36 = arith.constant dense<0.000000e+00> : vector<64x64xf32>
    %94 = tpu.matmul %54, %54, %cst_36 {dimension_numbers = #tpu.dot_dimension_numbers<[0], [0], [1], [1], [0, 1, 1, 1], [], []>} : vector<128x64xf32>, vector<128x64xf32>, vector<64x64xf32> -> vector<64x64xf32>
    %95 = arith.mulf %94, %94 : vector<64x64xf32>
    %96 = vector.shape_cast %95 : vector<64x64xf32> to vector<1x64x64xf32>
    %cst_37 = arith.constant dense<0.000000e+00> : vector<1xf32>
    %97 = vector.multi_reduction <add>, %96, %cst_37 [1, 2] : vector<1x64x64xf32> to vector<1xf32>
    %98 = vector.shape_cast %97 : vector<1xf32> to vector<1x1x1xf32>
    %99 = vector.extract %98[0, 0, 0] : f32 from vector<1x1x1xf32>
    %100 = vector.broadcast %99 : f32 to vector<1x1xf32>
    %101 = math.sqrt %100 : vector<1x1xf32>
    %cst_38 = arith.constant 1.000000e-15 : f32
    %102 = vector.broadcast %cst_38 : f32 to vector<1x1xf32>
    %103 = arith.addf %101, %102 : vector<1x1xf32>
    %cst_39 = arith.constant 1.000000e+00 : f32
    %104 = vector.broadcast %cst_39 : f32 to vector<1x1xf32>
    %105 = arith.divf %104, %103 : vector<1x1xf32>
    %106 = vector.broadcast %105 : vector<1x1xf32> to vector<64x64xf32>
    %107 = arith.mulf %94, %106 : vector<64x64xf32>
    %cst_40 = arith.constant 1.250000e-01 : f32
    %108 = vector.broadcast %cst_40 : f32 to vector<64x64xf32>
    %109 = arith.mulf %71, %108 : vector<64x64xf32>
    %110 = arith.subf %107, %109 : vector<64x64xf32>
    %111 = arith.mulf %110, %110 : vector<64x64xf32>
    %112 = vector.shape_cast %111 : vector<64x64xf32> to vector<1x64x64xf32>
    %cst_41 = arith.constant dense<0.000000e+00> : vector<1xf32>
    %113 = vector.multi_reduction <add>, %112, %cst_41 [1, 2] : vector<1x64x64xf32> to vector<1xf32>
    %114 = vector.shape_cast %113 : vector<1xf32> to vector<1x1x1xf32>
    %115 = vector.extract %114[0, 0, 0] : f32 from vector<1x1x1xf32>
    %116 = vector.broadcast %115 : f32 to vector<1x1xf32>
    %117 = math.sqrt %116 : vector<1x1xf32>
    %c0_42 = arith.constant 0 : index
    %c0_43 = arith.constant 0 : index
    %118 = vector.load %arg17[%c0_42, %c0_43] : memref<1x1xf32, #tpu.memory_space<vmem>>, vector<1x1xf32>
    tpu.vector_store %arg17[%c0_42, %c0_43], %117 {strides = array<i32>} : memref<1x1xf32, #tpu.memory_space<vmem>>, vector<1x1xf32>,
    %cst_44 = arith.constant 1.000000e+00 : f32
    %119 = vector.broadcast %cst_44 : f32 to vector<64x64xf32>
    %120 = arith.subf %119, %71 : vector<64x64xf32>
    %121 = arith.mulf %62, %120 : vector<64x64xf32>
    %cst_45 = arith.constant 1.000000e+00 : f32
    %122 = vector.broadcast %cst_45 : f32 to vector<64x64xf32>
    %123 = arith.subf %122, %71 : vector<64x64xf32>
    %124 = arith.mulf %65, %123 : vector<64x64xf32>
    %cst_46 = arith.constant dense<0.000000e+00> : vector<64xf32>
    %125 = vector.multi_reduction <add>, %121, %cst_46 [1] : vector<64x64xf32> to vector<64xf32>
    %126 = vector.shape_cast %125 : vector<64xf32> to vector<64x1xf32>
    %127 = math.sqrt %126 : vector<64x1xf32>
    %cst_47 = arith.constant 1.000000e-15 : f32
    %128 = vector.broadcast %cst_47 : f32 to vector<64x1xf32>
    %129 = arith.addf %127, %128 : vector<64x1xf32>
    %cst_48 = arith.constant dense<0.000000e+00> : vector<64xf32>
    %130 = vector.multi_reduction <add>, %124, %cst_48 [0] : vector<64x64xf32> to vector<64xf32>
    %131 = vector.shape_cast %130 : vector<64xf32> to vector<1x64xf32>
    %132 = math.sqrt %131 : vector<1x64xf32>
    %cst_49 = arith.constant 1.000000e-15 : f32
    %133 = vector.broadcast %cst_49 : f32 to vector<1x64xf32>
    %134 = arith.addf %132, %133 : vector<1x64xf32>
    %cst_50 = arith.constant 1.000000e+00 : f32
    %135 = vector.broadcast %cst_50 : f32 to vector<64x1xf32>
    %136 = arith.divf %135, %129 : vector<64x1xf32>
    %137 = vector.broadcast %136 : vector<64x1xf32> to vector<64x64xf32>
    %138 = arith.mulf %121, %137 : vector<64x64xf32>
    %cst_51 = arith.constant 1.000000e+00 : f32
    %139 = vector.broadcast %cst_51 : f32 to vector<1x64xf32>
    %140 = arith.divf %139, %134 : vector<1x64xf32>
    %141 = vector.broadcast %140 : vector<1x64xf32> to vector<64x64xf32>
    %142 = arith.mulf %138, %141 : vector<64x64xf32>
    %143 = arith.truncf %54 : vector<128x64xf32> to vector<128x64xbf16>
    %144 = arith.truncf %57 : vector<64x16xf32> to vector<64x16xbf16>
    %cst_52 = arith.constant dense<0.000000e+00> : vector<128x16xf32>
    %145 = tpu.matmul %143, %144, %cst_52 {dimension_numbers = #tpu.dot_dimension_numbers<[1], [0], [0], [1], [0, 0, 1, 1], [], []>} : vector<128x64xbf16>, vector<64x16xbf16>, vector<128x16xf32> -> vector<128x16xf32>
    %146 = arith.truncf %54 : vector<128x64xf32> to vector<128x64xbf16>
    %147 = arith.truncf %142 : vector<64x64xf32> to vector<64x64xbf16>
    %cst_53 = arith.constant dense<0.000000e+00> : vector<128x64xf32>
    %148 = tpu.matmul %146, %147, %cst_53 {dimension_numbers = #tpu.dot_dimension_numbers<[1], [0], [0], [1], [0, 0, 1, 1], [], []>} : vector<128x64xbf16>, vector<64x64xbf16>, vector<128x64xf32> -> vector<128x64xf32>
    %149 = arith.truncf %148 : vector<128x64xf32> to vector<128x64xbf16>
    %150 = arith.truncf %54 : vector<128x64xf32> to vector<128x64xbf16>
    %cst_54 = arith.constant dense<0.000000e+00> : vector<128x128xf32>
    %151 = tpu.matmul %149, %150, %cst_54 {dimension_numbers = #tpu.dot_dimension_numbers<[1], [1], [0], [0], [0, 0, 1, 0], [], []>} : vector<128x64xbf16>, vector<128x64xbf16>, vector<128x128xf32> -> vector<128x128xf32>
    %c0_55 = arith.constant 0 : index
    %c0_56 = arith.constant 0 : index
    %152 = vector.load %arg15[%c0_55, %c0_56] : memref<128x128xf32, #tpu.memory_space<vmem>>, vector<128x128xf32>
    tpu.vector_store %arg15[%c0_55, %c0_56], %151 {strides = array<i32>} : memref<128x128xf32, #tpu.memory_space<vmem>>, vector<128x128xf32>,
    %c0_57 = arith.constant 0 : index
    %c0_58 = arith.constant 0 : index
    %153 = vector.load %arg8[%c0_57, %c0_58] : memref<16x16xf32, #tpu.memory_space<vmem>>, vector<16x16xf32>
    %c0_59 = arith.constant 0 : index
    %c0_60 = arith.constant 0 : index
    %154 = vector.load %arg9[%c0_59, %c0_60] : memref<1x16xf32, #tpu.memory_space<vmem>>, vector<1x16xf32>
    %155 = vector.broadcast %7 : vector<128x1xf32> to vector<128x16xf32>
    %156 = arith.mulf %155, %145 : vector<128x16xf32>
    %157 = arith.truncf %156 : vector<128x16xf32> to vector<128x16xbf16>
    %158 = arith.truncf %153 : vector<16x16xf32> to vector<16x16xbf16>
    %cst_61 = arith.constant dense<0.000000e+00> : vector<128x16xf32>
    %159 = tpu.matmul %157, %158, %cst_61 {dimension_numbers = #tpu.dot_dimension_numbers<[1], [0], [0], [1], [0, 0, 1, 1], [], []>} : vector<128x16xbf16>, vector<16x16xbf16>, vector<128x16xf32> -> vector<128x16xf32>
    %160 = arith.truncf %159 : vector<128x16xf32> to vector<128x16xbf16>
    %cst_62 = arith.constant dense<0.000000e+00> : vector<128x16xf32>
    %161 = tpu.matmul %1, %160, %cst_62 {dimension_numbers = #tpu.dot_dimension_numbers<[1], [0], [0], [1], [0, 0, 1, 1], [], []>} : vector<128x128xbf16>, vector<128x16xbf16>, vector<128x16xf32> -> vector<128x16xf32>
    %162 = arith.addf %161, %159 : vector<128x16xf32>
    %163 = vector.broadcast %7 : vector<128x1xf32> to vector<128x16xf32>
    %164 = arith.mulf %163, %162 : vector<128x16xf32>
    %165 = vector.broadcast %154 : vector<1x16xf32> to vector<128x16xf32>
    %166 = arith.addf %164, %165 : vector<128x16xf32>
    %167 = math.tanh %166 : vector<128x16xf32>
    %c0_63 = arith.constant 0 : index
    %c0_64 = arith.constant 0 : index
    %168 = vector.load %arg10[%c0_63, %c0_64] : memref<16x16xf32, #tpu.memory_space<vmem>>, vector<16x16xf32>
    %c0_65 = arith.constant 0 : index
    %c0_66 = arith.constant 0 : index
    %169 = vector.load %arg11[%c0_65, %c0_66] : memref<1x16xf32, #tpu.memory_space<vmem>>, vector<1x16xf32>
    %170 = vector.broadcast %7 : vector<128x1xf32> to vector<128x16xf32>
    %171 = arith.mulf %170, %167 : vector<128x16xf32>
    %172 = arith.truncf %171 : vector<128x16xf32> to vector<128x16xbf16>
    %173 = arith.truncf %168 : vector<16x16xf32> to vector<16x16xbf16>
    %cst_67 = arith.constant dense<0.000000e+00> : vector<128x16xf32>
    %174 = tpu.matmul %172, %173, %cst_67 {dimension_numbers = #tpu.dot_dimension_numbers<[1], [0], [0], [1], [0, 0, 1, 1], [], []>} : vector<128x16xbf16>, vector<16x16xbf16>, vector<128x16xf32> -> vector<128x16xf32>
    %175 = arith.truncf %174 : vector<128x16xf32> to vector<128x16xbf16>
    %cst_68 = arith.constant dense<0.000000e+00> : vector<128x16xf32>
    %176 = tpu.matmul %1, %175, %cst_68 {dimension_numbers = #tpu.dot_dimension_numbers<[1], [0], [0], [1], [0, 0, 1, 1], [], []>} : vector<128x128xbf16>, vector<128x16xbf16>, vector<128x16xf32> -> vector<128x16xf32>
    %177 = arith.addf %176, %174 : vector<128x16xf32>
    %178 = vector.broadcast %7 : vector<128x1xf32> to vector<128x16xf32>
    %179 = arith.mulf %178, %177 : vector<128x16xf32>
    %180 = vector.broadcast %169 : vector<1x16xf32> to vector<128x16xf32>
    %181 = arith.addf %179, %180 : vector<128x16xf32>
    %182 = math.tanh %181 : vector<128x16xf32>
    %c0_69 = arith.constant 0 : index
    %c0_70 = arith.constant 0 : index
    %183 = vector.load %arg12[%c0_69, %c0_70] : memref<16x8xf32, #tpu.memory_space<vmem>>, vector<16x8xf32>
    %c0_71 = arith.constant 0 : index
    %c0_72 = arith.constant 0 : index
    %184 = vector.load %arg13[%c0_71, %c0_72] : memref<1x8xf32, #tpu.memory_space<vmem>>, vector<1x8xf32>
    %185 = vector.broadcast %7 : vector<128x1xf32> to vector<128x16xf32>
    %186 = arith.mulf %185, %182 : vector<128x16xf32>
    %187 = arith.truncf %186 : vector<128x16xf32> to vector<128x16xbf16>
    %188 = arith.truncf %183 : vector<16x8xf32> to vector<16x8xbf16>
    %cst_73 = arith.constant dense<0.000000e+00> : vector<128x8xf32>
    %189 = tpu.matmul %187, %188, %cst_73 {dimension_numbers = #tpu.dot_dimension_numbers<[1], [0], [0], [1], [0, 0, 1, 1], [], []>} : vector<128x16xbf16>, vector<16x8xbf16>, vector<128x8xf32> -> vector<128x8xf32>
    %190 = arith.truncf %189 : vector<128x8xf32> to vector<128x8xbf16>
    %cst_74 = arith.constant dense<0.000000e+00> : vector<128x8xf32>
    %191 = tpu.matmul %1, %190, %cst_74 {dimension_numbers = #tpu.dot_dimension_numbers<[1], [0], [0], [1], [0, 0, 1, 1], [], []>} : vector<128x128xbf16>, vector<128x8xbf16>, vector<128x8xf32> -> vector<128x8xf32>
    %192 = arith.addf %191, %189 : vector<128x8xf32>
    %193 = vector.broadcast %7 : vector<128x1xf32> to vector<128x8xf32>
    %194 = arith.mulf %193, %192 : vector<128x8xf32>
    %195 = vector.broadcast %184 : vector<1x8xf32> to vector<128x8xf32>
    %196 = arith.addf %194, %195 : vector<128x8xf32>
    %c0_75 = arith.constant 0 : index
    %c0_76 = arith.constant 0 : index
    %197 = vector.load %arg14[%c0_75, %c0_76] : memref<128x8xf32, #tpu.memory_space<vmem>>, vector<128x8xf32>
    tpu.vector_store %arg14[%c0_75, %c0_76], %196 {strides = array<i32>} : memref<128x8xf32, #tpu.memory_space<vmem>>, vector<128x8xf32>,
    return
  }
}

</mosaic_0001>

<llo_original>
// kernel: tpu_custom_call.1
$region0: #{tpu_custom_call.1}
  #allocation0 [shape = 'u32[]', space=smem, size = 0x4, offset = 0x4, fixed_abs, tag = 'smem constant byte address 0x4 - core index']
  #allocation1 [shape = 'u32[144,128]{1,0:T(1,128)}', space=vmem, size = 0x12000, scoped, tag = 'internal scratch']
  %s0 = inlined_call_operand.vmem [shape: f32[128,8], index: 0, kind: input, shape index: {}]
  %s1 = inlined_call_operand.vmem [shape: bf16[128,128], index: 1, kind: input, shape index: {}]
  %s2 = inlined_call_operand.vmem [shape: f32[8,16], index: 2, kind: input, shape index: {}]
  %s3 = inlined_call_operand.vmem [shape: f32[1,16], index: 3, kind: input, shape index: {}]
  %s4 = inlined_call_operand.vmem [shape: f32[16,16], index: 4, kind: input, shape index: {}]
  %s5 = inlined_call_operand.vmem [shape: f32[1,16], index: 5, kind: input, shape index: {}]
  %s6 = inlined_call_operand.vmem [shape: f32[16,64], index: 6, kind: input, shape index: {}]
  %s7 = inlined_call_operand.vmem [shape: f32[1,64], index: 7, kind: input, shape index: {}]
  %s8 = inlined_call_operand.vmem [shape: f32[16,16], index: 8, kind: input, shape index: {}]
  %s9 = inlined_call_operand.vmem [shape: f32[1,16], index: 9, kind: input, shape index: {}]
  %s10 = inlined_call_operand.vmem [shape: f32[16,16], index: 10, kind: input, shape index: {}]
  %s11 = inlined_call_operand.vmem [shape: f32[1,16], index: 11, kind: input, shape index: {}]
  %s12 = inlined_call_operand.vmem [shape: f32[16,8], index: 12, kind: input, shape index: {}]
  %s13 = inlined_call_operand.vmem [shape: f32[1,8], index: 13, kind: input, shape index: {}]
  %s14 = inlined_call_operand.vmem [shape: f32[128,8], index: 14, kind: output, shape index: {0}]
  %s15 = inlined_call_operand.hbm [shape: f32[128,128], index: 15, kind: output, shape index: {1}]
  %s16 = inlined_call_operand.hbm [shape: f32[1,1], index: 16, kind: output, shape index: {2}]
  %s17 = inlined_call_operand.hbm [shape: f32[1,1], index: 17, kind: output, shape index: {3}]
  %18 = xla_tuple %s14, %s15, %s16, %s17
  %s19 = sld [smem:[#allocation0]]
  $region90: #{tpu_custom_call.1} parent=0
    _
  %s21 = ssub.s32 1, %s19
  %s22 = scalar_select 0, %s21, %s19
  $region1: #{tpu_custom_call.1} parent=0
    #allocation2 [shape = 'u8[65536]{0}', space=vmem, size = 0x10000, scoped, tag = 'output window, operand 1, single buffered']
    #allocation3 [shape = 's32[1]{0}', space=sflag, size = 0x4, scoped, tag = 'scoped memory for tpu_custom_call.1']
    #allocation4 [shape = 'u8[512]{0}', space=vmem, size = 0x400, scoped, tag = 'output window, operand 2, single buffered']
    #allocation5 [shape = 's32[1]{0}', space=sflag, size = 0x4, scoped, tag = 'scoped memory for tpu_custom_call.1']
    #allocation6 [shape = 'u8[512]{0}', space=vmem, size = 0x400, scoped, tag = 'output window, operand 3, single buffered']
    %23 = vsyncpa [#allocation3], 0
    %24 = vsyncpa [#allocation5], 0
    // Predicated region
    $region2: #{tpu_custom_call.1} parent=1 // pred_check
      _
    $region3: #{tpu_custom_call.1} parent=1 // pred_check_branch
      %26 = sbr.rel (0) target = $region5
    $region4: #{tpu_custom_call.1} parent=1 // pred_region
      _
    $region5: #{tpu_custom_call.1} parent=1 // pred_fallthru
      _
    // Predicated region
    $region6: #{tpu_custom_call.1} parent=1 // pred_check
      _
    $region7: #{tpu_custom_call.1} parent=1 // pred_check_branch
      %28 = sbr.rel (0) target = $region9
    $region8: #{tpu_custom_call.1} parent=1 // pred_region
      _
    $region9: #{tpu_custom_call.1} parent=1 // pred_fallthru
      _
    // Predicated region
    $region10: #{tpu_custom_call.1} parent=1 // pred_check
      _
    $region11: #{tpu_custom_call.1} parent=1 // pred_check_branch
      %30 = sbr.rel (0) target = $region13
    $region12: #{tpu_custom_call.1} parent=1 // pred_region
      _
    $region13: #{tpu_custom_call.1} parent=1 // pred_fallthru
      _
    // Predicated region
    $region14: #{tpu_custom_call.1} parent=1 // pred_check
      _
    $region15: #{tpu_custom_call.1} parent=1 // pred_check_branch
      %32 = sbr.rel (0) target = $region17
    $region16: #{tpu_custom_call.1} parent=1 // pred_region
      _
    $region17: #{tpu_custom_call.1} parent=1 // pred_fallthru
      _
    // Predicated region
    $region18: #{tpu_custom_call.1} parent=1 // pred_check
      _
    $region19: #{tpu_custom_call.1} parent=1 // pred_check_branch
      %34 = sbr.rel (0) target = $region21
    $region20: #{tpu_custom_call.1} parent=1 // pred_region
      _
    $region21: #{tpu_custom_call.1} parent=1 // pred_fallthru
      _
    // Predicated region
    $region22: #{tpu_custom_call.1} parent=1 // pred_check
      _
    $region23: #{tpu_custom_call.1} parent=1 // pred_check_branch
      %36 = sbr.rel (0) target = $region25
    $region24: #{tpu_custom_call.1} parent=1 // pred_region
      _
    $region25: #{tpu_custom_call.1} parent=1 // pred_fallthru
      _
    // Predicated region
    $region26: #{tpu_custom_call.1} parent=1 // pred_check
      _
    $region27: #{tpu_custom_call.1} parent=1 // pred_check_branch
      %38 = sbr.rel (0) target = $region29
    $region28: #{tpu_custom_call.1} parent=1 // pred_region
      _
    $region29: #{tpu_custom_call.1} parent=1 // pred_fallthru
      _
    // Predicated region
    $region30: #{tpu_custom_call.1} parent=1 // pred_check
      _
    $region31: #{tpu_custom_call.1} parent=1 // pred_check_branch
      %40 = sbr.rel (0) target = $region33
    $region32: #{tpu_custom_call.1} parent=1 // pred_region
      _
    $region33: #{tpu_custom_call.1} parent=1 // pred_fallthru
      _
    // Predicated region
    $region34: #{tpu_custom_call.1} parent=1 // pred_check
      _
    $region35: #{tpu_custom_call.1} parent=1 // pred_check_branch
      %42 = sbr.rel (0) target = $region37
    $region36: #{tpu_custom_call.1} parent=1 // pred_region
      _
    $region37: #{tpu_custom_call.1} parent=1 // pred_fallthru
      _
    // Predicated region
    $region38: #{tpu_custom_call.1} parent=1 // pred_check
      _
    $region39: #{tpu_custom_call.1} parent=1 // pred_check_branch
      %44 = sbr.rel (0) target = $region41
    $region40: #{tpu_custom_call.1} parent=1 // pred_region
      _
    $region41: #{tpu_custom_call.1} parent=1 // pred_fallthru
      _
    // Predicated region
    $region42: #{tpu_custom_call.1} parent=1 // pred_check
      _
    $region43: #{tpu_custom_call.1} parent=1 // pred_check_branch
      %46 = sbr.rel (0) target = $region45
    $region44: #{tpu_custom_call.1} parent=1 // pred_region
      _
    $region45: #{tpu_custom_call.1} parent=1 // pred_fallthru
      _
    // Predicated region
    $region46: #{tpu_custom_call.1} parent=1 // pred_check
      _
    $region47: #{tpu_custom_call.1} parent=1 // pred_check_branch
      %48 = sbr.rel (0) target = $region49
    $region48: #{tpu_custom_call.1} parent=1 // pred_region
      _
    $region49: #{tpu_custom_call.1} parent=1 // pred_fallthru
      _
    // Predicated region
    $region50: #{tpu_custom_call.1} parent=1 // pred_check
      _
    $region51: #{tpu_custom_call.1} parent=1 // pred_check_branch
      %50 = sbr.rel (0) target = $region53
    $region52: #{tpu_custom_call.1} parent=1 // pred_region
      _
    $region53: #{tpu_custom_call.1} parent=1 // pred_fallthru
      _
    // Predicated region
    $region54: #{tpu_custom_call.1} parent=1 // pred_check
      _
    $region55: #{tpu_custom_call.1} parent=1 // pred_check_branch
      %52 = sbr.rel (0) target = $region57
    $region56: #{tpu_custom_call.1} parent=1 // pred_region
      _
    $region57: #{tpu_custom_call.1} parent=1 // pred_fallthru
      _
    %v54 = vld [vmem:[%s0] sm:$0xff]
    %v55 = vld [vmem:[%s0 + $0x8] sm:$0xff]
    %v56 = vld [vmem:[%s0 + $0x10] sm:$0xff]
    %v57 = vld [vmem:[%s0 + $0x18] sm:$0xff]
    %v58 = vld [vmem:[%s0 + $0x20] sm:$0xff]
    %v59 = vld [vmem:[%s0 + $0x28] sm:$0xff]
    %v60 = vld [vmem:[%s0 + $0x30] sm:$0xff]
    %v61 = vld [vmem:[%s0 + $0x38] sm:$0xff]
    %v62 = vld [vmem:[%s0 + $0x40] sm:$0xff]
    %v63 = vld [vmem:[%s0 + $0x48] sm:$0xff]
    %v64 = vld [vmem:[%s0 + $0x50] sm:$0xff]
    %v65 = vld [vmem:[%s0 + $0x58] sm:$0xff]
    %v66 = vld [vmem:[%s0 + $0x60] sm:$0xff]
    %v67 = vld [vmem:[%s0 + $0x68] sm:$0xff]
    %v68 = vld [vmem:[%s0 + $0x70] sm:$0xff]
    %v69 = vld [vmem:[%s0 + $0x78] sm:$0xff]
    %v70 = vld [vmem:[%s1] sm:$0xf]
    %v71 = vld [vmem:[%s1 + $0x4] sm:$0xf]
    %v72 = vld [vmem:[%s1 + $0x8] sm:$0xf]
    %v73 = vld [vmem:[%s1 + $0xc] sm:$0xf]
    %v74 = vld [vmem:[%s1 + $0x10] sm:$0xf]
    %v75 = vld [vmem:[%s1 + $0x14] sm:$0xf]
    %v76 = vld [vmem:[%s1 + $0x18] sm:$0xf]
    %v77 = vld [vmem:[%s1 + $0x1c] sm:$0xf]
    %v78 = vld [vmem:[%s1 + $0x20] sm:$0xf]
    %v79 = vld [vmem:[%s1 + $0x24] sm:$0xf]
    %v80 = vld [vmem:[%s1 + $0x28] sm:$0xf]
    %v81 = vld [vmem:[%s1 + $0x2c] sm:$0xf]
    %v82 = vld [vmem:[%s1 + $0x30] sm:$0xf]
    %v83 = vld [vmem:[%s1 + $0x34] sm:$0xf]
    %v84 = vld [vmem:[%s1 + $0x38] sm:$0xf]
    %v85 = vld [vmem:[%s1 + $0x3c] sm:$0xf]
    %v86 = vunpack.c.l.bf16 %v70
    %v87 = vunpack.c.l.bf16 %v71
    %v88 = vunpack.c.l.bf16 %v72
    %v89 = vunpack.c.l.bf16 %v73
    %v90 = vunpack.c.l.bf16 %v74
    %v91 = vunpack.c.l.bf16 %v75
    %v92 = vunpack.c.l.bf16 %v76
    %v93 = vunpack.c.l.bf16 %v77
    %v94 = vunpack.c.l.bf16 %v78
    %v95 = vunpack.c.l.bf16 %v79
    %v96 = vunpack.c.l.bf16 %v80
    %v97 = vunpack.c.l.bf16 %v81
    %v98 = vunpack.c.l.bf16 %v82
    %v99 = vunpack.c.l.bf16 %v83
    %v100 = vunpack.c.l.bf16 %v84
    %v101 = vunpack.c.l.bf16 %v85
    %102 = vadd.xlane.f32.xlu0 %v86
    %v103 = vpop.xlane.xlu0 %102
    %104 = vadd.xlane.f32.xlu0 %v87
    %v105 = vpop.xlane.xlu0 %104
    %106 = vadd.xlane.f32.xlu0 %v88
    %v107 = vpop.xlane.xlu0 %106
    %108 = vadd.xlane.f32.xlu0 %v89
    %v109 = vpop.xlane.xlu0 %108
    %110 = vadd.xlane.f32.xlu0 %v90
    %v111 = vpop.xlane.xlu0 %110
    %112 = vadd.xlane.f32.xlu0 %v91
    %v113 = vpop.xlane.xlu0 %112
    %114 = vadd.xlane.f32.xlu0 %v92
    %v115 = vpop.xlane.xlu0 %114
    %116 = vadd.xlane.f32.xlu0 %v93
    %v117 = vpop.xlane.xlu0 %116
    %118 = vadd.xlane.f32.xlu0 %v94
    %v119 = vpop.xlane.xlu0 %118
    %120 = vadd.xlane.f32.xlu0 %v95
    %v121 = vpop.xlane.xlu0 %120
    %122 = vadd.xlane.f32.xlu0 %v96
    %v123 = vpop.xlane.xlu0 %122
    %124 = vadd.xlane.f32.xlu0 %v97
    %v125 = vpop.xlane.xlu0 %124
    %126 = vadd.xlane.f32.xlu0 %v98
    %v127 = vpop.xlane.xlu0 %126
    %128 = vadd.xlane.f32.xlu0 %v99
    %v129 = vpop.xlane.xlu0 %128
    %130 = vadd.xlane.f32.xlu0 %v100
    %v131 = vpop.xlane.xlu0 %130
    %132 = vadd.xlane.f32.xlu0 %v101
    %v133 = vpop.xlane.xlu0 %132
    %v134 = vadd.f32 %v103, 1.0
    %v135 = vadd.f32 %v105, 1.0
    %v136 = vadd.f32 %v107, 1.0
    %v137 = vadd.f32 %v109, 1.0
    %v138 = vadd.f32 %v111, 1.0
    %v139 = vadd.f32 %v113, 1.0
    %v140 = vadd.f32 %v115, 1.0
    %v141 = vadd.f32 %v117, 1.0
    %v142 = vadd.f32 %v119, 1.0
    %v143 = vadd.f32 %v121, 1.0
    %v144 = vadd.f32 %v123, 1.0
    %v145 = vadd.f32 %v125, 1.0
    %v146 = vadd.f32 %v127, 1.0
    %v147 = vadd.f32 %v129, 1.0
    %v148 = vadd.f32 %v131, 1.0
    %v149 = vadd.f32 %v133, 1.0
    %v150 = vrsqrt.pop %v134
    %v151 = vrsqrt.pop %v135
    %v152 = vrsqrt.pop %v136
    %v153 = vrsqrt.pop %v137
    %v154 = vrsqrt.pop %v138
    %v155 = vrsqrt.pop %v139
    %v156 = vrsqrt.pop %v140
    %v157 = vrsqrt.pop %v141
    %v158 = vrsqrt.pop %v142
    %v159 = vrsqrt.pop %v143
    %v160 = vrsqrt.pop %v144
    %v161 = vrsqrt.pop %v145
    %v162 = vrsqrt.pop %v146
    %v163 = vrsqrt.pop %v147
    %v164 = vrsqrt.pop %v148
    %v165 = vrsqrt.pop %v149
    %v166 = vld [vmem:[%s2] sm:$0xff]
    %v167 = vld [vmem:[%s3] sm:$0x1]
    %v168 = vmul.f32 %v150, %v54
    %v169 = vmul.f32 %v151, %v55
    %v170 = vmul.f32 %v152, %v56
    %v171 = vmul.f32 %v153, %v57
    %v172 = vmul.f32 %v154, %v58
    %v173 = vmul.f32 %v155, %v59
    %v174 = vmul.f32 %v156, %v60
    %v175 = vmul.f32 %v157, %v61
    %v176 = vmul.f32 %v158, %v62
    %v177 = vmul.f32 %v159, %v63
    %v178 = vmul.f32 %v160, %v64
    %v179 = vmul.f32 %v161, %v65
    %v180 = vmul.f32 %v162, %v66
    %v181 = vmul.f32 %v163, %v67
    %v182 = vmul.f32 %v164, %v68
    %v183 = vmul.f32 %v165, %v69
    %v184 = vpack.c.bf16 %v169, %v168
    %v185 = vpack.c.bf16 %v171, %v170
    %v186 = vpack.c.bf16 %v173, %v172
    %v187 = vpack.c.bf16 %v175, %v174
    %v188 = vpack.c.bf16 %v177, %v176
    %v189 = vpack.c.bf16 %v179, %v178
    %v190 = vpack.c.bf16 %v181, %v180
    %v191 = vpack.c.bf16 %v183, %v182
    %v208 = vunpack.c.l.b16 %v70
    %v209 = vunpack.c.l.b16 %v71
    %v210 = vunpack.c.l.b16 %v72
    %v211 = vunpack.c.l.b16 %v73
    %v212 = vunpack.c.l.b16 %v74
    %v213 = vunpack.c.l.b16 %v75
    %v214 = vunpack.c.l.b16 %v76
    %v215 = vunpack.c.l.b16 %v77
    %v216 = vunpack.c.l.b16 %v78
    %v217 = vunpack.c.l.b16 %v79
    %v218 = vunpack.c.l.b16 %v80
    %v219 = vunpack.c.l.b16 %v81
    %v220 = vunpack.c.l.b16 %v82
    %v221 = vunpack.c.l.b16 %v83
    %v222 = vunpack.c.l.b16 %v84
    %v223 = vunpack.c.l.b16 %v85
    %v224 = vpack.c.b16 %v209, %v208
    %v225 = vpack.c.b16 %v211, %v210
    %v226 = vpack.c.b16 %v213, %v212
    %v227 = vpack.c.b16 %v215, %v214
    %v228 = vpack.c.b16 %v217, %v216
    %v229 = vpack.c.b16 %v219, %v218
    %v230 = vpack.c.b16 %v221, %v220
    %v231 = vpack.c.b16 %v223, %v222
    %240 = vmatprep.subr.bf16.mxu0 0
    %241 = vmatpush1.bf16.msra.mxu0 %v191
    %242 = vmatprep.subr.bf16.mxu0 0
    %243 = vmatpush1.bf16.msra.mxu0 %v190
    %244 = vmatprep.subr.bf16.mxu0 0
    %245 = vmatpush1.bf16.msra.mxu0 %v189
    %246 = vmatprep.subr.bf16.mxu0 0
    %247 = vmatpush1.bf16.msra.mxu0 %v188
    %248 = vmatprep.subr.bf16.mxu0 0
    %249 = vmatpush1.bf16.msra.mxu0 %v187
    %250 = vmatprep.subr.bf16.mxu0 0
    %251 = vmatpush1.bf16.msra.mxu0 %v186
    %252 = vmatprep.subr.bf16.mxu0 0
    %253 = vmatpush1.bf16.msra.mxu0 %v185
    %254 = vmatprep.subr.bf16.mxu0 0
    %255 = vmatpush1.bf16.msra.mxu0 %v184
    %256 = vmatprep.subr.bf16.mxu0 0
    %257 = vmatpush2.bf16.msra.mxu0 0
    %258 = vmatprep.subr.bf16.mxu0 0
    %259 = vmatpush2.bf16.msra.mxu0 0
    %260 = vmatprep.subr.bf16.mxu0 0
    %261 = vmatpush2.bf16.msra.mxu0 0
    %262 = vmatprep.subr.bf16.mxu0 0
    %263 = vmatpush2.bf16.msra.mxu0 0
    %264 = vmatprep.subr.bf16.mxu0 0
    %265 = vmatpush2.bf16.msra.mxu0 0
    %266 = vmatprep.subr.bf16.mxu0 0
    %267 = vmatpush2.bf16.msra.mxu0 0
    %268 = vmatprep.subr.bf16.mxu0 0
    %269 = vmatpush2.bf16.msra.mxu0 0
    %270 = vmatprep.subr.bf16.mxu0 0
    %271 = vmatpush2.bf16.msra.mxu0 0
    %272 = vmatprep.mubr.bf16.mxu0 0
    %273 = vmatmul.mubr.bf16.gmra.mxu0 %v224
    %v274 = vpop.f32.mrf.mxu0
    %v275 = vadd.f32 %v168, %v274
    %v276 = vpop.f32.mrf.mxu0
    %v277 = vpop.f32.mrf.mxu0
    %v278 = vadd.f32 %v169, %v277
    %v279 = vpop.f32.mrf.mxu0
    %280 = vmatprep.mubr.bf16.mxu0 0
    %281 = vmatmul.mubr.bf16.gmra.mxu0 %v225
    %v282 = vpop.f32.mrf.mxu0
    %v283 = vadd.f32 %v170, %v282
    %v284 = vpop.f32.mrf.mxu0
    %v285 = vpop.f32.mrf.mxu0
    %v286 = vadd.f32 %v171, %v285
    %v287 = vpop.f32.mrf.mxu0
    %288 = vmatprep.mubr.bf16.mxu0 0
    %289 = vmatmul.mubr.bf16.gmra.mxu0 %v226
    %v290 = vpop.f32.mrf.mxu0
    %v291 = vadd.f32 %v172, %v290
    %v292 = vpop.f32.mrf.mxu0
    %v293 = vpop.f32.mrf.mxu0
    %v294 = vadd.f32 %v173, %v293
    %v295 = vpop.f32.mrf.mxu0
    %296 = vmatprep.mubr.bf16.mxu0 0
    %297 = vmatmul.mubr.bf16.gmra.mxu0 %v227
    %v298 = vpop.f32.mrf.mxu0
    %v299 = vadd.f32 %v174, %v298
    %v300 = vpop.f32.mrf.mxu0
    %v301 = vpop.f32.mrf.mxu0
    %v302 = vadd.f32 %v175, %v301
    %v303 = vpop.f32.mrf.mxu0
    %304 = vmatprep.mubr.bf16.mxu0 0
    %305 = vmatmul.mubr.bf16.gmra.mxu0 %v228
    %v306 = vpop.f32.mrf.mxu0
    %v307 = vadd.f32 %v176, %v306
    %v308 = vpop.f32.mrf.mxu0
    %v309 = vpop.f32.mrf.mxu0
    %v310 = vadd.f32 %v177, %v309
    %v311 = vpop.f32.mrf.mxu0
    %312 = vmatprep.mubr.bf16.mxu0 0
    %313 = vmatmul.mubr.bf16.gmra.mxu0 %v229
    %v314 = vpop.f32.mrf.mxu0
    %v315 = vadd.f32 %v178, %v314
    %v316 = vpop.f32.mrf.mxu0
    %v317 = vpop.f32.mrf.mxu0
    %v318 = vadd.f32 %v179, %v317
    %v319 = vpop.f32.mrf.mxu0
    %320 = vmatprep.mubr.bf16.mxu0 0
    %321 = vmatmul.mubr.bf16.gmra.mxu0 %v230
    %v322 = vpop.f32.mrf.mxu0
    %v323 = vadd.f32 %v180, %v322
    %v324 = vpop.f32.mrf.mxu0
    %v325 = vpop.f32.mrf.mxu0
    %v326 = vadd.f32 %v181, %v325
    %v327 = vpop.f32.mrf.mxu0
    %328 = vmatprep.mubr.bf16.mxu0 0
    %329 = vmatmul.mubr.bf16.gmra.mxu0 %v231
    %v330 = vpop.f32.mrf.mxu0
    %v331 = vadd.f32 %v182, %v330
    %v332 = vpop.f32.mrf.mxu0
    %v333 = vpop.f32.mrf.mxu0
    %v334 = vadd.f32 %v183, %v333
    %v335 = vpop.f32.mrf.mxu0
    %336 = vdwg.mxu0
    %v337 = vmul.f32 %v150, %v275
    %v338 = vmul.f32 %v151, %v278
    %v339 = vmul.f32 %v152, %v283
    %v340 = vmul.f32 %v153, %v286
    %v341 = vmul.f32 %v154, %v291
    %v342 = vmul.f32 %v155, %v294
    %v343 = vmul.f32 %v156, %v299
    %v344 = vmul.f32 %v157, %v302
    %v345 = vmul.f32 %v158, %v307
    %v346 = vmul.f32 %v159, %v310
    %v347 = vmul.f32 %v160, %v315
    %v348 = vmul.f32 %v161, %v318
    %v349 = vmul.f32 %v162, %v323
    %v350 = vmul.f32 %v163, %v326
    %v351 = vmul.f32 %v164, %v331
    %v352 = vmul.f32 %v165, %v334
    %v353 = vpack.c.bf16 %v338, %v337
    %v354 = vpack.c.bf16 %v340, %v339
    %v355 = vpack.c.bf16 %v342, %v341
    %v356 = vpack.c.bf16 %v344, %v343
    %v357 = vpack.c.bf16 %v346, %v345
    %v358 = vpack.c.bf16 %v348, %v347
    %v359 = vpack.c.bf16 %v350, %v349
    %v360 = vpack.c.bf16 %v352, %v351
    %v361 = vpack.c.bf16 %v166, %v166
    %v363 = vlaneseq
    %v364 = vshrl.u32 %v363, 7
    %v365 = vsub.s32 0, %v364
    %v366 = vrot.slane %v167, %v365
    %vm368 = vcmask 64512
    %v370 = vsel %vm368, %v353, 0
    %v373 = vsel %vm368, %v354, 0
    %v376 = vsel %vm368, %v355, 0
    %v379 = vsel %vm368, %v356, 0
    %v382 = vsel %vm368, %v357, 0
    %v385 = vsel %vm368, %v358, 0
    %v388 = vsel %vm368, %v359, 0
    %v391 = vsel %vm368, %v360, 0
    %vm393 = vcmask 1043456
    %v395 = vsel %vm393, %v361, 0
    %397 = vmatprep.subr.bf16.mxu0 0
    %398 = vmatpush1.bf16.msra.mxu0 0
    %399 = vmatprep.subr.bf16.mxu0 0
    %400 = vmatpush1.bf16.msra.mxu0 0
    %401 = vmatprep.subr.bf16.mxu0 0
    %402 = vmatpush1.bf16.msra.mxu0 0
    %403 = vmatprep.subr.bf16.mxu0 0
    %404 = vmatpush1.bf16.msra.mxu0 0
    %405 = vmatprep.subr.bf16.mxu0 0
    %406 = vmatpush1.bf16.msra.mxu0 0
    %407 = vmatprep.subr.bf16.mxu0 0
    %408 = vmatpush1.bf16.msra.mxu0 0
    %409 = vmatprep.subr.bf16.mxu0 0
    %410 = vmatpush1.bf16.msra.mxu0 0
    %411 = vmatprep.subr.bf16.mxu0 0
    %412 = vmatpush1.bf16.msra.mxu0 %v395
    %413 = vmatprep.subr.bf16.mxu0 0
    %414 = vmatpush2.bf16.msra.mxu0 0
    %415 = vmatprep.subr.bf16.mxu0 0
    %416 = vmatpush2.bf16.msra.mxu0 0
    %417 = vmatprep.subr.bf16.mxu0 0
    %418 = vmatpush2.bf16.msra.mxu0 0
    %419 = vmatprep.subr.bf16.mxu0 0
    %420 = vmatpush2.bf16.msra.mxu0 0
    %421 = vmatprep.subr.bf16.mxu0 0
    %422 = vmatpush2.bf16.msra.mxu0 0
    %423 = vmatprep.subr.bf16.mxu0 0
    %424 = vmatpush2.bf16.msra.mxu0 0
    %425 = vmatprep.subr.bf16.mxu0 0
    %426 = vmatpush2.bf16.msra.mxu0 0
    %427 = vmatprep.subr.bf16.mxu0 0
    %428 = vmatpush2.bf16.msra.mxu0 0
    %429 = vmatprep.mubr.bf16.mxu0 0
    %430 = vmatmul.mubr.bf16.gmra.mxu0 %v370
    %v431 = vpop.f32.mrf.mxu0
    %v432 = vadd.f32 %v366, %v431
    %v433 = vpop.f32.mrf.mxu0
    %v434 = vpop.f32.mrf.mxu0
    %v435 = vadd.f32 %v366, %v434
    %v436 = vpop.f32.mrf.mxu0
    %437 = vmatprep.mubr.bf16.mxu0 0
    %438 = vmatmul.mubr.bf16.gmra.mxu0 %v373
    %v439 = vpop.f32.mrf.mxu0
    %v440 = vadd.f32 %v366, %v439
    %v441 = vpop.f32.mrf.mxu0
    %v442 = vpop.f32.mrf.mxu0
    %v443 = vadd.f32 %v366, %v442
    %v444 = vpop.f32.mrf.mxu0
    %445 = vmatprep.mubr.bf16.mxu0 0
    %446 = vmatmul.mubr.bf16.gmra.mxu0 %v376
    %v447 = vpop.f32.mrf.mxu0
    %v448 = vadd.f32 %v366, %v447
    %v449 = vpop.f32.mrf.mxu0
    %v450 = vpop.f32.mrf.mxu0
    %v451 = vadd.f32 %v366, %v450
    %v452 = vpop.f32.mrf.mxu0
    %453 = vmatprep.mubr.bf16.mxu0 0
    %454 = vmatmul.mubr.bf16.gmra.mxu0 %v379
    %v455 = vpop.f32.mrf.mxu0
    %v456 = vadd.f32 %v366, %v455
    %v457 = vpop.f32.mrf.mxu0
    %v458 = vpop.f32.mrf.mxu0
    %v459 = vadd.f32 %v366, %v458
    %v460 = vpop.f32.mrf.mxu0
    %461 = vmatprep.mubr.bf16.mxu0 0
    %462 = vmatmul.mubr.bf16.gmra.mxu0 %v382
    %v463 = vpop.f32.mrf.mxu0
    %v464 = vadd.f32 %v366, %v463
    %v465 = vpop.f32.mrf.mxu0
    %v466 = vpop.f32.mrf.mxu0
    %v467 = vadd.f32 %v366, %v466
    %v468 = vpop.f32.mrf.mxu0
    %469 = vmatprep.mubr.bf16.mxu0 0
    %470 = vmatmul.mubr.bf16.gmra.mxu0 %v385
    %v471 = vpop.f32.mrf.mxu0
    %v472 = vadd.f32 %v366, %v471
    %v473 = vpop.f32.mrf.mxu0
    %v474 = vpop.f32.mrf.mxu0
    %v475 = vadd.f32 %v366, %v474
    %v476 = vpop.f32.mrf.mxu0
    %477 = vmatprep.mubr.bf16.mxu0 0
    %478 = vmatmul.mubr.bf16.gmra.mxu0 %v388
    %v479 = vpop.f32.mrf.mxu0
    %v480 = vadd.f32 %v366, %v479
    %v481 = vpop.f32.mrf.mxu0
    %v482 = vpop.f32.mrf.mxu0
    %v483 = vadd.f32 %v366, %v482
    %v484 = vpop.f32.mrf.mxu0
    %485 = vmatprep.mubr.bf16.mxu0 0
    %486 = vmatmul.mubr.bf16.gmra.mxu0 %v391
    %v487 = vpop.f32.mrf.mxu0
    %v488 = vadd.f32 %v366, %v487
    %v489 = vpop.f32.mrf.mxu0
    %v490 = vpop.f32.mrf.mxu0
    %v491 = vadd.f32 %v366, %v490
    %v492 = vpop.f32.mrf.mxu0
    %493 = vdwg.mxu0
    %v494 = vtanh.pop %v432
    %v495 = vtanh.pop %v435
    %v496 = vtanh.pop %v440
    %v497 = vtanh.pop %v443
    %v498 = vtanh.pop %v448
    %v499 = vtanh.pop %v451
    %v500 = vtanh.pop %v456
    %v501 = vtanh.pop %v459
    %v502 = vtanh.pop %v464
    %v503 = vtanh.pop %v467
    %v504 = vtanh.pop %v472
    %v505 = vtanh.pop %v475
    %v506 = vtanh.pop %v480
    %v507 = vtanh.pop %v483
    %v508 = vtanh.pop %v488
    %v509 = vtanh.pop %v491
    %v510 = vld [vmem:[%s4] sm:$0xff]
    %v511 = vld [vmem:[%s4 + $0x8] sm:$0xff]
    %v512 = vld [vmem:[%s5] sm:$0x1]
    %v513 = vmul.f32 %v150, %v494
    %v514 = vmul.f32 %v151, %v495
    %v515 = vmul.f32 %v152, %v496
    %v516 = vmul.f32 %v153, %v497
    %v517 = vmul.f32 %v154, %v498
    %v518 = vmul.f32 %v155, %v499
    %v519 = vmul.f32 %v156, %v500
    %v520 = vmul.f32 %v157, %v501
    %v521 = vmul.f32 %v158, %v502
    %v522 = vmul.f32 %v159, %v503
    %v523 = vmul.f32 %v160, %v504
    %v524 = vmul.f32 %v161, %v505
    %v525 = vmul.f32 %v162, %v506
    %v526 = vmul.f32 %v163, %v507
    %v527 = vmul.f32 %v164, %v508
    %v528 = vmul.f32 %v165, %v509
    %v529 = vpack.c.bf16 %v514, %v513
    %v530 = vpack.c.bf16 %v516, %v515
    %v531 = vpack.c.bf16 %v518, %v517
    %v532 = vpack.c.bf16 %v520, %v519
    %v533 = vpack.c.bf16 %v522, %v521
    %v534 = vpack.c.bf16 %v524, %v523
    %v535 = vpack.c.bf16 %v526, %v525
    %v536 = vpack.c.bf16 %v528, %v527
    %v537 = vpack.c.bf16 %v511, %v510
    %vm538 = vcmask 130048
    %v540 = vsel %vm538, %v529, 0
    %v543 = vsel %vm538, %v530, 0
    %v546 = vsel %vm538, %v531, 0
    %v549 = vsel %vm538, %v532, 0
    %v552 = vsel %vm538, %v533, 0
    %v555 = vsel %vm538, %v534, 0
    %v558 = vsel %vm538, %v535, 0
    %v561 = vsel %vm538, %v536, 0
    %563 = vmatprep.subr.bf16.mxu0 0
    %564 = vmatpush1.bf16.msra.mxu0 0
    %565 = vmatprep.subr.bf16.mxu0 0
    %566 = vmatpush1.bf16.msra.mxu0 0
    %567 = vmatprep.subr.bf16.mxu0 0
    %568 = vmatpush1.bf16.msra.mxu0 0
    %569 = vmatprep.subr.bf16.mxu0 0
    %570 = vmatpush1.bf16.msra.mxu0 0
    %571 = vmatprep.subr.bf16.mxu0 0
    %572 = vmatpush1.bf16.msra.mxu0 0
    %573 = vmatprep.subr.bf16.mxu0 0
    %574 = vmatpush1.bf16.msra.mxu0 0
    %575 = vmatprep.subr.bf16.mxu0 0
    %576 = vmatpush1.bf16.msra.mxu0 0
    %577 = vmatprep.subr.bf16.mxu0 0
    %578 = vmatpush1.bf16.msra.mxu0 %v537
    %579 = vmatprep.subr.bf16.mxu0 0
    %580 = vmatpush2.bf16.msra.mxu0 0
    %581 = vmatprep.subr.bf16.mxu0 0
    %582 = vmatpush2.bf16.msra.mxu0 0
    %583 = vmatprep.subr.bf16.mxu0 0
    %584 = vmatpush2.bf16.msra.mxu0 0
    %585 = vmatprep.subr.bf16.mxu0 0
    %586 = vmatpush2.bf16.msra.mxu0 0
    %587 = vmatprep.subr.bf16.mxu0 0
    %588 = vmatpush2.bf16.msra.mxu0 0
    %589 = vmatprep.subr.bf16.mxu0 0
    %590 = vmatpush2.bf16.msra.mxu0 0
    %591 = vmatprep.subr.bf16.mxu0 0
    %592 = vmatpush2.bf16.msra.mxu0 0
    %593 = vmatprep.subr.bf16.mxu0 0
    %594 = vmatpush2.bf16.msra.mxu0 0
    %595 = vmatprep.mubr.bf16.mxu0 0
    %596 = vmatmul.mubr.bf16.gmra.mxu0 %v540
    %v597 = vpop.f32.mrf.mxu0
    %v598 = vadd.f32 0.0, %v597
    %v599 = vpop.f32.mrf.mxu0
    %v600 = vpop.f32.mrf.mxu0
    %v601 = vadd.f32 0.0, %v600
    %v602 = vpop.f32.mrf.mxu0
    %603 = vmatprep.mubr.bf16.mxu0 0
    %604 = vmatmul.mubr.bf16.gmra.mxu0 %v543
    %v605 = vpop.f32.mrf.mxu0
    %v606 = vadd.f32 0.0, %v605
    %v607 = vpop.f32.mrf.mxu0
    %v608 = vpop.f32.mrf.mxu0
    %v609 = vadd.f32 0.0, %v608
    %v610 = vpop.f32.mrf.mxu0
    %611 = vmatprep.mubr.bf16.mxu0 0
    %612 = vmatmul.mubr.bf16.gmra.mxu0 %v546
    %v613 = vpop.f32.mrf.mxu0
    %v614 = vadd.f32 0.0, %v613
    %v615 = vpop.f32.mrf.mxu0
    %v616 = vpop.f32.mrf.mxu0
    %v617 = vadd.f32 0.0, %v616
    %v618 = vpop.f32.mrf.mxu0
    %619 = vmatprep.mubr.bf16.mxu0 0
    %620 = vmatmul.mubr.bf16.gmra.mxu0 %v549
    %v621 = vpop.f32.mrf.mxu0
    %v622 = vadd.f32 0.0, %v621
    %v623 = vpop.f32.mrf.mxu0
    %v624 = vpop.f32.mrf.mxu0
    %v625 = vadd.f32 0.0, %v624
    %v626 = vpop.f32.mrf.mxu0
    %627 = vmatprep.mubr.bf16.mxu0 0
    %628 = vmatmul.mubr.bf16.gmra.mxu0 %v552
    %v629 = vpop.f32.mrf.mxu0
    %v630 = vadd.f32 0.0, %v629
    %v631 = vpop.f32.mrf.mxu0
    %v632 = vpop.f32.mrf.mxu0
    %v633 = vadd.f32 0.0, %v632
    %v634 = vpop.f32.mrf.mxu0
    %635 = vmatprep.mubr.bf16.mxu0 0
    %636 = vmatmul.mubr.bf16.gmra.mxu0 %v555
    %v637 = vpop.f32.mrf.mxu0
    %v638 = vadd.f32 0.0, %v637
    %v639 = vpop.f32.mrf.mxu0
    %v640 = vpop.f32.mrf.mxu0
    %v641 = vadd.f32 0.0, %v640
    %v642 = vpop.f32.mrf.mxu0
    %643 = vmatprep.mubr.bf16.mxu0 0
    %644 = vmatmul.mubr.bf16.gmra.mxu0 %v558
    %v645 = vpop.f32.mrf.mxu0
    %v646 = vadd.f32 0.0, %v645
    %v647 = vpop.f32.mrf.mxu0
    %v648 = vpop.f32.mrf.mxu0
    %v649 = vadd.f32 0.0, %v648
    %v650 = vpop.f32.mrf.mxu0
    %651 = vmatprep.mubr.bf16.mxu0 0
    %652 = vmatmul.mubr.bf16.gmra.mxu0 %v561
    %v653 = vpop.f32.mrf.mxu0
    %v654 = vadd.f32 0.0, %v653
    %v655 = vpop.f32.mrf.mxu0
    %v656 = vpop.f32.mrf.mxu0
    %v657 = vadd.f32 0.0, %v656
    %v658 = vpop.f32.mrf.mxu0
    %659 = vdwg.mxu0
    %v660 = vpack.c.bf16 %v601, %v598
    %v661 = vpack.c.bf16 %v609, %v606
    %v662 = vpack.c.bf16 %v617, %v614
    %v663 = vpack.c.bf16 %v625, %v622
    %v664 = vpack.c.bf16 %v633, %v630
    %v665 = vpack.c.bf16 %v641, %v638
    %v666 = vpack.c.bf16 %v649, %v646
    %v667 = vpack.c.bf16 %v657, %v654
    %668 = vmatprep.subr.bf16.mxu0 0
    %669 = vmatpush1.bf16.msra.mxu0 %v667
    %670 = vmatprep.subr.bf16.mxu0 0
    %671 = vmatpush1.bf16.msra.mxu0 %v666
    %672 = vmatprep.subr.bf16.mxu0 0
    %673 = vmatpush1.bf16.msra.mxu0 %v665
    %674 = vmatprep.subr.bf16.mxu0 0
    %675 = vmatpush1.bf16.msra.mxu0 %v664
    %676 = vmatprep.subr.bf16.mxu0 0
    %677 = vmatpush1.bf16.msra.mxu0 %v663
    %678 = vmatprep.subr.bf16.mxu0 0
    %679 = vmatpush1.bf16.msra.mxu0 %v662
    %680 = vmatprep.subr.bf16.mxu0 0
    %681 = vmatpush1.bf16.msra.mxu0 %v661
    %682 = vmatprep.subr.bf16.mxu0 0
    %683 = vmatpush1.bf16.msra.mxu0 %v660
    %684 = vmatprep.subr.bf16.mxu0 0
    %685 = vmatpush2.bf16.msra.mxu0 0
    %686 = vmatprep.subr.bf16.mxu0 0
    %687 = vmatpush2.bf16.msra.mxu0 0
    %688 = vmatprep.subr.bf16.mxu0 0
    %689 = vmatpush2.bf16.msra.mxu0 0
    %690 = vmatprep.subr.bf16.mxu0 0
    %691 = vmatpush2.bf16.msra.mxu0 0
    %692 = vmatprep.subr.bf16.mxu0 0
    %693 = vmatpush2.bf16.msra.mxu0 0
    %694 = vmatprep.subr.bf16.mxu0 0
    %695 = vmatpush2.bf16.msra.mxu0 0
    %696 = vmatprep.subr.bf16.mxu0 0
    %697 = vmatpush2.bf16.msra.mxu0 0
    %698 = vmatprep.subr.bf16.mxu0 0
    %699 = vmatpush2.bf16.msra.mxu0 0
    %700 = vmatprep.mubr.bf16.mxu0 0
    %701 = vmatmul.mubr.bf16.gmra.mxu0 %v224
    %v702 = vpop.f32.mrf.mxu0
    %v703 = vadd.f32 %v598, %v702
    %v704 = vpop.f32.mrf.mxu0
    %v705 = vpop.f32.mrf.mxu0
    %v706 = vadd.f32 %v601, %v705
    %v707 = vpop.f32.mrf.mxu0
    %708 = vmatprep.mubr.bf16.mxu0 0
    %709 = vmatmul.mubr.bf16.gmra.mxu0 %v225
    %v710 = vpop.f32.mrf.mxu0
    %v711 = vadd.f32 %v606, %v710
    %v712 = vpop.f32.mrf.mxu0
    %v713 = vpop.f32.mrf.mxu0
    %v714 = vadd.f32 %v609, %v713
    %v715 = vpop.f32.mrf.mxu0
    %716 = vmatprep.mubr.bf16.mxu0 0
    %717 = vmatmul.mubr.bf16.gmra.mxu0 %v226
    %v718 = vpop.f32.mrf.mxu0
    %v719 = vadd.f32 %v614, %v718
    %v720 = vpop.f32.mrf.mxu0
    %v721 = vpop.f32.mrf.mxu0
    %v722 = vadd.f32 %v617, %v721
    %v723 = vpop.f32.mrf.mxu0
    %724 = vmatprep.mubr.bf16.mxu0 0
    %725 = vmatmul.mubr.bf16.gmra.mxu0 %v227
    %v726 = vpop.f32.mrf.mxu0
    %v727 = vadd.f32 %v622, %v726
    %v728 = vpop.f32.mrf.mxu0
    %v729 = vpop.f32.mrf.mxu0
    %v730 = vadd.f32 %v625, %v729
    %v731 = vpop.f32.mrf.mxu0
    %732 = vmatprep.mubr.bf16.mxu0 0
    %733 = vmatmul.mubr.bf16.gmra.mxu0 %v228
    %v734 = vpop.f32.mrf.mxu0
    %v735 = vadd.f32 %v630, %v734
    %v736 = vpop.f32.mrf.mxu0
    %v737 = vpop.f32.mrf.mxu0
    %v738 = vadd.f32 %v633, %v737
    %v739 = vpop.f32.mrf.mxu0
    %740 = vmatprep.mubr.bf16.mxu0 0
    %741 = vmatmul.mubr.bf16.gmra.mxu0 %v229
    %v742 = vpop.f32.mrf.mxu0
    %v743 = vadd.f32 %v638, %v742
    %v744 = vpop.f32.mrf.mxu0
    %v745 = vpop.f32.mrf.mxu0
    %v746 = vadd.f32 %v641, %v745
    %v747 = vpop.f32.mrf.mxu0
    %748 = vmatprep.mubr.bf16.mxu0 0
    %749 = vmatmul.mubr.bf16.gmra.mxu0 %v230
    %v750 = vpop.f32.mrf.mxu0
    %v751 = vadd.f32 %v646, %v750
    %v752 = vpop.f32.mrf.mxu0
    %v753 = vpop.f32.mrf.mxu0
    %v754 = vadd.f32 %v649, %v753
    %v755 = vpop.f32.mrf.mxu0
    %756 = vmatprep.mubr.bf16.mxu0 0
    %757 = vmatmul.mubr.bf16.gmra.mxu0 %v231
    %v758 = vpop.f32.mrf.mxu0
    %v759 = vadd.f32 %v654, %v758
    %v760 = vpop.f32.mrf.mxu0
    %v761 = vpop.f32.mrf.mxu0
    %v762 = vadd.f32 %v657, %v761
    %v763 = vpop.f32.mrf.mxu0
    %764 = vdwg.mxu0
    %v765 = vmul.f32 %v150, %v703
    %v766 = vmul.f32 %v151, %v706
    %v767 = vmul.f32 %v152, %v711
    %v768 = vmul.f32 %v153, %v714
    %v769 = vmul.f32 %v154, %v719
    %v770 = vmul.f32 %v155, %v722
    %v771 = vmul.f32 %v156, %v727
    %v772 = vmul.f32 %v157, %v730
    %v773 = vmul.f32 %v158, %v735
    %v774 = vmul.f32 %v159, %v738
    %v775 = vmul.f32 %v160, %v743
    %v776 = vmul.f32 %v161, %v746
    %v777 = vmul.f32 %v162, %v751
    %v778 = vmul.f32 %v163, %v754
    %v779 = vmul.f32 %v164, %v759
    %v780 = vmul.f32 %v165, %v762
    %v782 = vlaneseq
    %v783 = vshrl.u32 %v782, 7
    %v784 = vsub.s32 0, %v783
    %v785 = vrot.slane %v512, %v784
    %v787 = vadd.f32 %v765, %v785
    %v788 = vadd.f32 %v766, %v785
    %v789 = vadd.f32 %v767, %v785
    %v790 = vadd.f32 %v768, %v785
    %v791 = vadd.f32 %v769, %v785
    %v792 = vadd.f32 %v770, %v785
    %v793 = vadd.f32 %v771, %v785
    %v794 = vadd.f32 %v772, %v785
    %v795 = vadd.f32 %v773, %v785
    %v796 = vadd.f32 %v774, %v785
    %v797 = vadd.f32 %v775, %v785
    %v798 = vadd.f32 %v776, %v785
    %v799 = vadd.f32 %v777, %v785
    %v800 = vadd.f32 %v778, %v785
    %v801 = vadd.f32 %v779, %v785
    %v802 = vadd.f32 %v780, %v785
    %v803 = vtanh.pop %v787
    %v804 = vtanh.pop %v788
    %v805 = vtanh.pop %v789
    %v806 = vtanh.pop %v790
    %v807 = vtanh.pop %v791
    %v808 = vtanh.pop %v792
    %v809 = vtanh.pop %v793
    %v810 = vtanh.pop %v794
    %v811 = vtanh.pop %v795
    %v812 = vtanh.pop %v796
    %v813 = vtanh.pop %v797
    %v814 = vtanh.pop %v798
    %v815 = vtanh.pop %v799
    %v816 = vtanh.pop %v800
    %v817 = vtanh.pop %v801
    %v818 = vtanh.pop %v802
    %v819 = vld [vmem:[%s6] sm:$0xff]
    %v820 = vld [vmem:[%s6 + $0x8] sm:$0xff]
    %v821 = vpack.c.bf16 %v804, %v803
    %v822 = vpack.c.bf16 %v806, %v805
    %v823 = vpack.c.bf16 %v808, %v807
    %v824 = vpack.c.bf16 %v810, %v809
    %v825 = vpack.c.bf16 %v812, %v811
    %v826 = vpack.c.bf16 %v814, %v813
    %v827 = vpack.c.bf16 %v816, %v815
    %v828 = vpack.c.bf16 %v818, %v817
    %v829 = vpack.c.bf16 %v820, %v819
    %v830 = vld [vmem:[%s7] sm:$0x1]
    %v832 = vlaneseq
    %v833 = vshrl.u32 %v832, 7
    %v834 = vsub.s32 0, %v833
    %v835 = vrot.slane %v830, %v834
    %v838 = vsel %vm538, %v821, 0
    %v841 = vsel %vm538, %v822, 0
    %v844 = vsel %vm538, %v823, 0
    %v847 = vsel %vm538, %v824, 0
    %v850 = vsel %vm538, %v825, 0
    %v853 = vsel %vm538, %v826, 0
    %v856 = vsel %vm538, %v827, 0
    %v859 = vsel %vm538, %v828, 0
    %861 = vmatprep.subr.bf16.mxu0 0
    %862 = vmatpush1.bf16.msra.mxu0 0
    %863 = vmatprep.subr.bf16.mxu0 0
    %864 = vmatpush1.bf16.msra.mxu0 0
    %865 = vmatprep.subr.bf16.mxu0 0
    %866 = vmatpush1.bf16.msra.mxu0 0
    %867 = vmatprep.subr.bf16.mxu0 0
    %868 = vmatpush1.bf16.msra.mxu0 0
    %869 = vmatprep.subr.bf16.mxu0 0
    %870 = vmatpush1.bf16.msra.mxu0 0
    %871 = vmatprep.subr.bf16.mxu0 0
    %872 = vmatpush1.bf16.msra.mxu0 0
    %873 = vmatprep.subr.bf16.mxu0 0
    %874 = vmatpush1.bf16.msra.mxu0 0
    %875 = vmatprep.subr.bf16.mxu0 0
    %876 = vmatpush1.bf16.msra.mxu0 %v829
    %877 = vmatprep.subr.bf16.mxu0 0
    %878 = vmatpush2.bf16.msra.mxu0 0
    %879 = vmatprep.subr.bf16.mxu0 0
    %880 = vmatpush2.bf16.msra.mxu0 0
    %881 = vmatprep.subr.bf16.mxu0 0
    %882 = vmatpush2.bf16.msra.mxu0 0
    %883 = vmatprep.subr.bf16.mxu0 0
    %884 = vmatpush2.bf16.msra.mxu0 0
    %885 = vmatprep.subr.bf16.mxu0 0
    %886 = vmatpush2.bf16.msra.mxu0 0
    %887 = vmatprep.subr.bf16.mxu0 0
    %888 = vmatpush2.bf16.msra.mxu0 0
    %889 = vmatprep.subr.bf16.mxu0 0
    %890 = vmatpush2.bf16.msra.mxu0 0
    %891 = vmatprep.subr.bf16.mxu0 0
    %892 = vmatpush2.bf16.msra.mxu0 0
    %893 = vmatprep.mubr.bf16.mxu0 0
    %894 = vmatmul.mubr.bf16.gmra.mxu0 %v838
    %v895 = vpop.f32.mrf.mxu0
    %v896 = vadd.f32 %v835, %v895
    %v897 = vpop.f32.mrf.mxu0
    %v898 = vpop.f32.mrf.mxu0
    %v899 = vadd.f32 %v835, %v898
    %v900 = vpop.f32.mrf.mxu0
    %901 = vmatprep.mubr.bf16.mxu0 0
    %902 = vmatmul.mubr.bf16.gmra.mxu0 %v841
    %v903 = vpop.f32.mrf.mxu0
    %v904 = vadd.f32 %v835, %v903
    %v905 = vpop.f32.mrf.mxu0
    %v906 = vpop.f32.mrf.mxu0
    %v907 = vadd.f32 %v835, %v906
    %v908 = vpop.f32.mrf.mxu0
    %909 = vmatprep.mubr.bf16.mxu0 0
    %910 = vmatmul.mubr.bf16.gmra.mxu0 %v844
    %v911 = vpop.f32.mrf.mxu0
    %v912 = vadd.f32 %v835, %v911
    %v913 = vpop.f32.mrf.mxu0
    %v914 = vpop.f32.mrf.mxu0
    %v915 = vadd.f32 %v835, %v914
    %v916 = vpop.f32.mrf.mxu0
    %917 = vmatprep.mubr.bf16.mxu0 0
    %918 = vmatmul.mubr.bf16.gmra.mxu0 %v847
    %v919 = vpop.f32.mrf.mxu0
    %v920 = vadd.f32 %v835, %v919
    %v921 = vpop.f32.mrf.mxu0
    %v922 = vpop.f32.mrf.mxu0
    %v923 = vadd.f32 %v835, %v922
    %v924 = vpop.f32.mrf.mxu0
    %925 = vmatprep.mubr.bf16.mxu0 0
    %926 = vmatmul.mubr.bf16.gmra.mxu0 %v850
    %v927 = vpop.f32.mrf.mxu0
    %v928 = vadd.f32 %v835, %v927
    %v929 = vpop.f32.mrf.mxu0
    %v930 = vpop.f32.mrf.mxu0
    %v931 = vadd.f32 %v835, %v930
    %v932 = vpop.f32.mrf.mxu0
    %933 = vmatprep.mubr.bf16.mxu0 0
    %934 = vmatmul.mubr.bf16.gmra.mxu0 %v853
    %v935 = vpop.f32.mrf.mxu0
    %v936 = vadd.f32 %v835, %v935
    %v937 = vpop.f32.mrf.mxu0
    %v938 = vpop.f32.mrf.mxu0
    %v939 = vadd.f32 %v835, %v938
    %v940 = vpop.f32.mrf.mxu0
    %941 = vmatprep.mubr.bf16.mxu0 0
    %942 = vmatmul.mubr.bf16.gmra.mxu0 %v856
    %v943 = vpop.f32.mrf.mxu0
    %v944 = vadd.f32 %v835, %v943
    %v945 = vpop.f32.mrf.mxu0
    %v946 = vpop.f32.mrf.mxu0
    %v947 = vadd.f32 %v835, %v946
    %v948 = vpop.f32.mrf.mxu0
    %949 = vmatprep.mubr.bf16.mxu0 0
    %950 = vmatmul.mubr.bf16.gmra.mxu0 %v859
    %v951 = vpop.f32.mrf.mxu0
    %v952 = vadd.f32 %v835, %v951
    %v953 = vpop.f32.mrf.mxu0
    %v954 = vpop.f32.mrf.mxu0
    %v955 = vadd.f32 %v835, %v954
    %v956 = vpop.f32.mrf.mxu0
    %957 = vdwg.mxu0
    %vm958 = vcmask 523264
    %v959 = vsel %vm958, %v896, -inf
    %960 = vmax.xlane.f32.xlu0 %v959
    %v961 = vpop.xlane.xlu0 %960
    %v962 = vsel %vm958, %v899, -inf
    %963 = vmax.xlane.f32.xlu0 %v962
    %v964 = vpop.xlane.xlu0 %963
    %v965 = vsel %vm958, %v904, -inf
    %966 = vmax.xlane.f32.xlu0 %v965
    %v967 = vpop.xlane.xlu0 %966
    %v968 = vsel %vm958, %v907, -inf
    %969 = vmax.xlane.f32.xlu0 %v968
    %v970 = vpop.xlane.xlu0 %969
    %v971 = vsel %vm958, %v912, -inf
    %972 = vmax.xlane.f32.xlu0 %v971
    %v973 = vpop.xlane.xlu0 %972
    %v974 = vsel %vm958, %v915, -inf
    %975 = vmax.xlane.f32.xlu0 %v974
    %v976 = vpop.xlane.xlu0 %975
    %v977 = vsel %vm958, %v920, -inf
    %978 = vmax.xlane.f32.xlu0 %v977
    %v979 = vpop.xlane.xlu0 %978
    %v980 = vsel %vm958, %v923, -inf
    %981 = vmax.xlane.f32.xlu0 %v980
    %v982 = vpop.xlane.xlu0 %981
    %v983 = vsel %vm958, %v928, -inf
    %984 = vmax.xlane.f32.xlu0 %v983
    %v985 = vpop.xlane.xlu0 %984
    %v986 = vsel %vm958, %v931, -inf
    %987 = vmax.xlane.f32.xlu0 %v986
    %v988 = vpop.xlane.xlu0 %987
    %v989 = vsel %vm958, %v936, -inf
    %990 = vmax.xlane.f32.xlu0 %v989
    %v991 = vpop.xlane.xlu0 %990
    %v992 = vsel %vm958, %v939, -inf
    %993 = vmax.xlane.f32.xlu0 %v992
    %v994 = vpop.xlane.xlu0 %993
    %v995 = vsel %vm958, %v944, -inf
    %996 = vmax.xlane.f32.xlu0 %v995
    %v997 = vpop.xlane.xlu0 %996
    %v998 = vsel %vm958, %v947, -inf
    %999 = vmax.xlane.f32.xlu0 %v998
    %v1000 = vpop.xlane.xlu0 %999
    %v1001 = vsel %vm958, %v952, -inf
    %1002 = vmax.xlane.f32.xlu0 %v1001
    %v1003 = vpop.xlane.xlu0 %1002
    %v1004 = vsel %vm958, %v955, -inf
    %1005 = vmax.xlane.f32.xlu0 %v1004
    %v1006 = vpop.xlane.xlu0 %1005
    %v1007 = vsub.f32 %v896, %v961
    %v1008 = vsub.f32 %v899, %v964
    %v1009 = vsub.f32 %v904, %v967
    %v1010 = vsub.f32 %v907, %v970
    %v1011 = vsub.f32 %v912, %v973
    %v1012 = vsub.f32 %v915, %v976
    %v1013 = vsub.f32 %v920, %v979
    %v1014 = vsub.f32 %v923, %v982
    %v1015 = vsub.f32 %v928, %v985
    %v1016 = vsub.f32 %v931, %v988
    %v1017 = vsub.f32 %v936, %v991
    %v1018 = vsub.f32 %v939, %v994
    %v1019 = vsub.f32 %v944, %v997
    %v1020 = vsub.f32 %v947, %v1000
    %v1021 = vsub.f32 %v952, %v1003
    %v1022 = vsub.f32 %v955, %v1006
    %v1023 = vmul.f32 %v1007, 1.442695
    %v1024 = vpow.pop %v1023
    %v1025 = vmul.f32 %v1008, 1.442695
    %v1026 = vpow.pop %v1025
    %v1027 = vmul.f32 %v1009, 1.442695
    %v1028 = vpow.pop %v1027
    %v1029 = vmul.f32 %v1010, 1.442695
    %v1030 = vpow.pop %v1029
    %v1031 = vmul.f32 %v1011, 1.442695
    %v1032 = vpow.pop %v1031
    %v1033 = vmul.f32 %v1012, 1.442695
    %v1034 = vpow.pop %v1033
    %v1035 = vmul.f32 %v1013, 1.442695
    %v1036 = vpow.pop %v1035
    %v1037 = vmul.f32 %v1014, 1.442695
    %v1038 = vpow.pop %v1037
    %v1039 = vmul.f32 %v1015, 1.442695
    %v1040 = vpow.pop %v1039
    %v1041 = vmul.f32 %v1016, 1.442695
    %v1042 = vpow.pop %v1041
    %v1043 = vmul.f32 %v1017, 1.442695
    %v1044 = vpow.pop %v1043
    %v1045 = vmul.f32 %v1018, 1.442695
    %v1046 = vpow.pop %v1045
    %v1047 = vmul.f32 %v1019, 1.442695
    %v1048 = vpow.pop %v1047
    %v1049 = vmul.f32 %v1020, 1.442695
    %v1050 = vpow.pop %v1049
    %v1051 = vmul.f32 %v1021, 1.442695
    %v1052 = vpow.pop %v1051
    %v1053 = vmul.f32 %v1022, 1.442695
    %v1054 = vpow.pop %v1053
    %v1055 = vsel %vm958, %v1024, 0.0
    %1056 = vadd.xlane.f32.xlu0 %v1055
    %v1057 = vpop.xlane.xlu0 %1056
    %v1058 = vsel %vm958, %v1026, 0.0
    %1059 = vadd.xlane.f32.xlu0 %v1058
    %v1060 = vpop.xlane.xlu0 %1059
    %v1061 = vsel %vm958, %v1028, 0.0
    %1062 = vadd.xlane.f32.xlu0 %v1061
    %v1063 = vpop.xlane.xlu0 %1062
    %v1064 = vsel %vm958, %v1030, 0.0
    %1065 = vadd.xlane.f32.xlu0 %v1064
    %v1066 = vpop.xlane.xlu0 %1065
    %v1067 = vsel %vm958, %v1032, 0.0
    %1068 = vadd.xlane.f32.xlu0 %v1067
    %v1069 = vpop.xlane.xlu0 %1068
    %v1070 = vsel %vm958, %v1034, 0.0
    %1071 = vadd.xlane.f32.xlu0 %v1070
    %v1072 = vpop.xlane.xlu0 %1071
    %v1073 = vsel %vm958, %v1036, 0.0
    %1074 = vadd.xlane.f32.xlu0 %v1073
    %v1075 = vpop.xlane.xlu0 %1074
    %v1076 = vsel %vm958, %v1038, 0.0
    %1077 = vadd.xlane.f32.xlu0 %v1076
    %v1078 = vpop.xlane.xlu0 %1077
    %v1079 = vsel %vm958, %v1040, 0.0
    %1080 = vadd.xlane.f32.xlu0 %v1079
    %v1081 = vpop.xlane.xlu0 %1080
    %v1082 = vsel %vm958, %v1042, 0.0
    %1083 = vadd.xlane.f32.xlu0 %v1082
    %v1084 = vpop.xlane.xlu0 %1083
    %v1085 = vsel %vm958, %v1044, 0.0
    %1086 = vadd.xlane.f32.xlu0 %v1085
    %v1087 = vpop.xlane.xlu0 %1086
    %v1088 = vsel %vm958, %v1046, 0.0
    %1089 = vadd.xlane.f32.xlu0 %v1088
    %v1090 = vpop.xlane.xlu0 %1089
    %v1091 = vsel %vm958, %v1048, 0.0
    %1092 = vadd.xlane.f32.xlu0 %v1091
    %v1093 = vpop.xlane.xlu0 %1092
    %v1094 = vsel %vm958, %v1050, 0.0
    %1095 = vadd.xlane.f32.xlu0 %v1094
    %v1096 = vpop.xlane.xlu0 %1095
    %v1097 = vsel %vm958, %v1052, 0.0
    %1098 = vadd.xlane.f32.xlu0 %v1097
    %v1099 = vpop.xlane.xlu0 %1098
    %v1100 = vsel %vm958, %v1054, 0.0
    %1101 = vadd.xlane.f32.xlu0 %v1100
    %v1102 = vpop.xlane.xlu0 %1101
    %v1103 = vrcp.pop %v1057
    %v1104 = vrcp.pop %v1060
    %v1105 = vrcp.pop %v1063
    %v1106 = vrcp.pop %v1066
    %v1107 = vrcp.pop %v1069
    %v1108 = vrcp.pop %v1072
    %v1109 = vrcp.pop %v1075
    %v1110 = vrcp.pop %v1078
    %v1111 = vrcp.pop %v1081
    %v1112 = vrcp.pop %v1084
    %v1113 = vrcp.pop %v1087
    %v1114 = vrcp.pop %v1090
    %v1115 = vrcp.pop %v1093
    %v1116 = vrcp.pop %v1096
    %v1117 = vrcp.pop %v1099
    %v1118 = vrcp.pop %v1102
    %v1119 = vmul.f32 %v1024, %v1103
    %v1120 = vmul.f32 %v1026, %v1104
    %v1121 = vmul.f32 %v1028, %v1105
    %v1122 = vmul.f32 %v1030, %v1106
    %v1123 = vmul.f32 %v1032, %v1107
    %v1124 = vmul.f32 %v1034, %v1108
    %v1125 = vmul.f32 %v1036, %v1109
    %v1126 = vmul.f32 %v1038, %v1110
    %v1127 = vmul.f32 %v1040, %v1111
    %v1128 = vmul.f32 %v1042, %v1112
    %v1129 = vmul.f32 %v1044, %v1113
    %v1130 = vmul.f32 %v1046, %v1114
    %v1131 = vmul.f32 %v1048, %v1115
    %v1132 = vmul.f32 %v1050, %v1116
    %v1133 = vmul.f32 %v1052, %v1117
    %v1134 = vmul.f32 %v1054, %v1118
    %v1135 = vpack.c.bf16 %v1120, %v1119
    %v1136 = vpack.c.bf16 %v1122, %v1121
    %v1137 = vpack.c.bf16 %v1124, %v1123
    %v1138 = vpack.c.bf16 %v1126, %v1125
    %v1139 = vpack.c.bf16 %v1128, %v1127
    %v1140 = vpack.c.bf16 %v1130, %v1129
    %v1141 = vpack.c.bf16 %v1132, %v1131
    %v1142 = vpack.c.bf16 %v1134, %v1133
    %1143 = vxpose.xlu0.c.b16.start [1/8] %v1135, 128
    %1144 = vxpose.xlu0.c.b16.cont [2/8] %v1136, 128
    %1145 = vxpose.xlu0.c.b16.cont [3/8] %v1137, 128
    %1146 = vxpose.xlu0.c.b16.cont [4/8] %v1138, 128
    %1147 = vxpose.xlu0.c.b16.cont [5/8] %v1139, 128
    %1148 = vxpose.xlu0.c.b16.cont [6/8] %v1140, 128
    %1149 = vxpose.xlu0.c.b16.cont [7/8] %v1141, 128
    %1150 = vxpose.xlu0.c.b16.end [8/8] %v1142, 128
    %v1151 = vpop.trf.xlu0
    %v1152 = vpop.trf.xlu0
    %v1153 = vpop.trf.xlu0
    %v1154 = vpop.trf.xlu0
    %v1155 = vpop.trf.xlu0
    %v1156 = vpop.trf.xlu0
    %v1157 = vpop.trf.xlu0
    %v1158 = vpop.trf.xlu0
    %1159 = vmatprep.subr.bf16.mxu0 0
    %1160 = vmatpush1.bf16.msra.mxu0 %v828
    %1161 = vmatprep.subr.bf16.mxu0 0
    %1162 = vmatpush1.bf16.msra.mxu0 %v827
    %1163 = vmatprep.subr.bf16.mxu0 0
    %1164 = vmatpush1.bf16.msra.mxu0 %v826
    %1165 = vmatprep.subr.bf16.mxu0 0
    %1166 = vmatpush1.bf16.msra.mxu0 %v825
    %1167 = vmatprep.subr.bf16.mxu0 0
    %1168 = vmatpush1.bf16.msra.mxu0 %v824
    %1169 = vmatprep.subr.bf16.mxu0 0
    %1170 = vmatpush1.bf16.msra.mxu0 %v823
    %1171 = vmatprep.subr.bf16.mxu0 0
    %1172 = vmatpush1.bf16.msra.mxu0 %v822
    %1173 = vmatprep.subr.bf16.mxu0 0
    %1174 = vmatpush1.bf16.msra.mxu0 %v821
    %1175 = vmatprep.subr.bf16.mxu0 0
    %1176 = vmatpush2.bf16.msra.mxu0 0
    %1177 = vmatprep.subr.bf16.mxu0 0
    %1178 = vmatpush2.bf16.msra.mxu0 0
    %1179 = vmatprep.subr.bf16.mxu0 0
    %1180 = vmatpush2.bf16.msra.mxu0 0
    %1181 = vmatprep.subr.bf16.mxu0 0
    %1182 = vmatpush2.bf16.msra.mxu0 0
    %1183 = vmatprep.subr.bf16.mxu0 0
    %1184 = vmatpush2.bf16.msra.mxu0 0
    %1185 = vmatprep.subr.bf16.mxu0 0
    %1186 = vmatpush2.bf16.msra.mxu0 0
    %1187 = vmatprep.subr.bf16.mxu0 0
    %1188 = vmatpush2.bf16.msra.mxu0 0
    %1189 = vmatprep.subr.bf16.mxu0 0
    %1190 = vmatpush2.bf16.msra.mxu0 0
    %1191 = vmatprep.mubr.bf16.mxu0 0
    %1192 = vmatmul.mubr.bf16.gmra.mxu0 %v1151
    %v1193 = vpop.f32.mrf.mxu0
    %v1194 = vadd.f32 0.0, %v1193
    %v1195 = vpop.f32.mrf.mxu0
    %v1196 = vpop.f32.mrf.mxu0
    %v1197 = vadd.f32 0.0, %v1196
    %v1198 = vpop.f32.mrf.mxu0
    %1199 = vmatprep.mubr.bf16.mxu0 0
    %1200 = vmatmul.mubr.bf16.gmra.mxu0 %v1152
    %v1201 = vpop.f32.mrf.mxu0
    %v1202 = vadd.f32 0.0, %v1201
    %v1203 = vpop.f32.mrf.mxu0
    %v1204 = vpop.f32.mrf.mxu0
    %v1205 = vadd.f32 0.0, %v1204
    %v1206 = vpop.f32.mrf.mxu0
    %1207 = vmatprep.mubr.bf16.mxu0 0
    %1208 = vmatmul.mubr.bf16.gmra.mxu0 %v1153
    %v1209 = vpop.f32.mrf.mxu0
    %v1210 = vadd.f32 0.0, %v1209
    %v1211 = vpop.f32.mrf.mxu0
    %v1212 = vpop.f32.mrf.mxu0
    %v1213 = vadd.f32 0.0, %v1212
    %v1214 = vpop.f32.mrf.mxu0
    %1215 = vmatprep.mubr.bf16.mxu0 0
    %1216 = vmatmul.mubr.bf16.gmra.mxu0 %v1154
    %v1217 = vpop.f32.mrf.mxu0
    %v1218 = vadd.f32 0.0, %v1217
    %v1219 = vpop.f32.mrf.mxu0
    %v1220 = vpop.f32.mrf.mxu0
    %v1221 = vadd.f32 0.0, %v1220
    %v1222 = vpop.f32.mrf.mxu0
    %1223 = vdwg.mxu0
    %1224 = vmatprep.subr.bf16.mxu0 0
    %1225 = vmatpush1.bf16.msra.mxu0 %v1142
    %1226 = vmatprep.subr.bf16.mxu0 0
    %1227 = vmatpush1.bf16.msra.mxu0 %v1141
    %1228 = vmatprep.subr.bf16.mxu0 0
    %1229 = vmatpush1.bf16.msra.mxu0 %v1140
    %1230 = vmatprep.subr.bf16.mxu0 0
    %1231 = vmatpush1.bf16.msra.mxu0 %v1139
    %1232 = vmatprep.subr.bf16.mxu0 0
    %1233 = vmatpush1.bf16.msra.mxu0 %v1138
    %1234 = vmatprep.subr.bf16.mxu0 0
    %1235 = vmatpush1.bf16.msra.mxu0 %v1137
    %1236 = vmatprep.subr.bf16.mxu0 0
    %1237 = vmatpush1.bf16.msra.mxu0 %v1136
    %1238 = vmatprep.subr.bf16.mxu0 0
    %1239 = vmatpush1.bf16.msra.mxu0 %v1135
    %1240 = vmatprep.subr.bf16.mxu0 0
    %1241 = vmatpush2.bf16.msra.mxu0 0
    %1242 = vmatprep.subr.bf16.mxu0 0
    %1243 = vmatpush2.bf16.msra.mxu0 0
    %1244 = vmatprep.subr.bf16.mxu0 0
    %1245 = vmatpush2.bf16.msra.mxu0 0
    %1246 = vmatprep.subr.bf16.mxu0 0
    %1247 = vmatpush2.bf16.msra.mxu0 0
    %1248 = vmatprep.subr.bf16.mxu0 0
    %1249 = vmatpush2.bf16.msra.mxu0 0
    %1250 = vmatprep.subr.bf16.mxu0 0
    %1251 = vmatpush2.bf16.msra.mxu0 0
    %1252 = vmatprep.subr.bf16.mxu0 0
    %1253 = vmatpush2.bf16.msra.mxu0 0
    %1254 = vmatprep.subr.bf16.mxu0 0
    %1255 = vmatpush2.bf16.msra.mxu0 0
    %1256 = vmatprep.mubr.bf16.mxu0 0
    %1257 = vmatmul.mubr.bf16.gmra.mxu0 %v224
    %v1258 = vpop.f32.mrf.mxu0
    %v1259 = vadd.f32 0.0, %v1258
    %v1260 = vpop.f32.mrf.mxu0
    %v1261 = vpop.f32.mrf.mxu0
    %v1262 = vadd.f32 0.0, %v1261
    %v1263 = vpop.f32.mrf.mxu0
    %1264 = vmatprep.mubr.bf16.mxu0 0
    %1265 = vmatmul.mubr.bf16.gmra.mxu0 %v225
    %v1266 = vpop.f32.mrf.mxu0
    %v1267 = vadd.f32 0.0, %v1266
    %v1268 = vpop.f32.mrf.mxu0
    %v1269 = vpop.f32.mrf.mxu0
    %v1270 = vadd.f32 0.0, %v1269
    %v1271 = vpop.f32.mrf.mxu0
    %1272 = vmatprep.mubr.bf16.mxu0 0
    %1273 = vmatmul.mubr.bf16.gmra.mxu0 %v226
    %v1274 = vpop.f32.mrf.mxu0
    %v1275 = vadd.f32 0.0, %v1274
    %v1276 = vpop.f32.mrf.mxu0
    %v1277 = vpop.f32.mrf.mxu0
    %v1278 = vadd.f32 0.0, %v1277
    %v1279 = vpop.f32.mrf.mxu0
    %1280 = vmatprep.mubr.bf16.mxu0 0
    %1281 = vmatmul.mubr.bf16.gmra.mxu0 %v227
    %v1282 = vpop.f32.mrf.mxu0
    %v1283 = vadd.f32 0.0, %v1282
    %v1284 = vpop.f32.mrf.mxu0
    %v1285 = vpop.f32.mrf.mxu0
    %v1286 = vadd.f32 0.0, %v1285
    %v1287 = vpop.f32.mrf.mxu0
    %1288 = vmatprep.mubr.bf16.mxu0 0
    %1289 = vmatmul.mubr.bf16.gmra.mxu0 %v228
    %v1290 = vpop.f32.mrf.mxu0
    %v1291 = vadd.f32 0.0, %v1290
    %v1292 = vpop.f32.mrf.mxu0
    %v1293 = vpop.f32.mrf.mxu0
    %v1294 = vadd.f32 0.0, %v1293
    %v1295 = vpop.f32.mrf.mxu0
    %1296 = vmatprep.mubr.bf16.mxu0 0
    %1297 = vmatmul.mubr.bf16.gmra.mxu0 %v229
    %v1298 = vpop.f32.mrf.mxu0
    %v1299 = vadd.f32 0.0, %v1298
    %v1300 = vpop.f32.mrf.mxu0
    %v1301 = vpop.f32.mrf.mxu0
    %v1302 = vadd.f32 0.0, %v1301
    %v1303 = vpop.f32.mrf.mxu0
    %1304 = vmatprep.mubr.bf16.mxu0 0
    %1305 = vmatmul.mubr.bf16.gmra.mxu0 %v230
    %v1306 = vpop.f32.mrf.mxu0
    %v1307 = vadd.f32 0.0, %v1306
    %v1308 = vpop.f32.mrf.mxu0
    %v1309 = vpop.f32.mrf.mxu0
    %v1310 = vadd.f32 0.0, %v1309
    %v1311 = vpop.f32.mrf.mxu0
    %1312 = vmatprep.mubr.bf16.mxu0 0
    %1313 = vmatmul.mubr.bf16.gmra.mxu0 %v231
    %v1314 = vpop.f32.mrf.mxu0
    %v1315 = vadd.f32 0.0, %v1314
    %v1316 = vpop.f32.mrf.mxu0
    %v1317 = vpop.f32.mrf.mxu0
    %v1318 = vadd.f32 0.0, %v1317
    %v1319 = vpop.f32.mrf.mxu0
    %1320 = vdwg.mxu0
    %v1321 = vpack.c.bf16 %v1262, %v1259
    %v1322 = vpack.c.bf16 %v1270, %v1267
    %v1323 = vpack.c.bf16 %v1278, %v1275
    %v1324 = vpack.c.bf16 %v1286, %v1283
    %v1325 = vpack.c.bf16 %v1294, %v1291
    %v1326 = vpack.c.bf16 %v1302, %v1299
    %v1327 = vpack.c.bf16 %v1310, %v1307
    %v1328 = vpack.c.bf16 %v1318, %v1315
    %1329 = vmatprep.subr.bf16.mxu0 0
    %1330 = vmatpush1.bf16.msra.mxu0 %v1328
    %1331 = vmatprep.subr.bf16.mxu0 0
    %1332 = vmatpush1.bf16.msra.mxu0 %v1327
    %1333 = vmatprep.subr.bf16.mxu0 0
    %1334 = vmatpush1.bf16.msra.mxu0 %v1326
    %1335 = vmatprep.subr.bf16.mxu0 0
    %1336 = vmatpush1.bf16.msra.mxu0 %v1325
    %1337 = vmatprep.subr.bf16.mxu0 0
    %1338 = vmatpush1.bf16.msra.mxu0 %v1324
    %1339 = vmatprep.subr.bf16.mxu0 0
    %1340 = vmatpush1.bf16.msra.mxu0 %v1323
    %1341 = vmatprep.subr.bf16.mxu0 0
    %1342 = vmatpush1.bf16.msra.mxu0 %v1322
    %1343 = vmatprep.subr.bf16.mxu0 0
    %1344 = vmatpush1.bf16.msra.mxu0 %v1321
    %1345 = vmatprep.subr.bf16.mxu0 0
    %1346 = vmatpush2.bf16.msra.mxu0 0
    %1347 = vmatprep.subr.bf16.mxu0 0
    %1348 = vmatpush2.bf16.msra.mxu0 0
    %1349 = vmatprep.subr.bf16.mxu0 0
    %1350 = vmatpush2.bf16.msra.mxu0 0
    %1351 = vmatprep.subr.bf16.mxu0 0
    %1352 = vmatpush2.bf16.msra.mxu0 0
    %1353 = vmatprep.subr.bf16.mxu0 0
    %1354 = vmatpush2.bf16.msra.mxu0 0
    %1355 = vmatprep.subr.bf16.mxu0 0
    %1356 = vmatpush2.bf16.msra.mxu0 0
    %1357 = vmatprep.subr.bf16.mxu0 0
    %1358 = vmatpush2.bf16.msra.mxu0 0
    %1359 = vmatprep.subr.bf16.mxu0 0
    %1360 = vmatpush2.bf16.msra.mxu0 0
    %1361 = vmatprep.mubr.bf16.mxu0 0
    %1362 = vmatmul.mubr.bf16.gmra.mxu0 %v1151
    %v1363 = vpop.f32.mrf.mxu0
    %v1364 = vadd.f32 0.0, %v1363
    %v1365 = vpop.f32.mrf.mxu0
    %v1366 = vpop.f32.mrf.mxu0
    %v1367 = vadd.f32 0.0, %v1366
    %v1368 = vpop.f32.mrf.mxu0
    %1369 = vmatprep.mubr.bf16.mxu0 0
    %1370 = vmatmul.mubr.bf16.gmra.mxu0 %v1152
    %v1371 = vpop.f32.mrf.mxu0
    %v1372 = vadd.f32 0.0, %v1371
    %v1373 = vpop.f32.mrf.mxu0
    %v1374 = vpop.f32.mrf.mxu0
    %v1375 = vadd.f32 0.0, %v1374
    %v1376 = vpop.f32.mrf.mxu0
    %1377 = vmatprep.mubr.bf16.mxu0 0
    %1378 = vmatmul.mubr.bf16.gmra.mxu0 %v1153
    %v1379 = vpop.f32.mrf.mxu0
    %v1380 = vadd.f32 0.0, %v1379
    %v1381 = vpop.f32.mrf.mxu0
    %v1382 = vpop.f32.mrf.mxu0
    %v1383 = vadd.f32 0.0, %v1382
    %v1384 = vpop.f32.mrf.mxu0
    %1385 = vmatprep.mubr.bf16.mxu0 0
    %1386 = vmatmul.mubr.bf16.gmra.mxu0 %v1154
    %v1387 = vpop.f32.mrf.mxu0
    %v1388 = vadd.f32 0.0, %v1387
    %v1389 = vpop.f32.mrf.mxu0
    %v1390 = vpop.f32.mrf.mxu0
    %v1391 = vadd.f32 0.0, %v1390
    %v1392 = vpop.f32.mrf.mxu0
    %1393 = vdwg.mxu0
    %1394 = vxpose.xlu0.c.b16.start [1/8] %v1321, 128
    %1395 = vxpose.xlu0.c.b16.cont [2/8] %v1322, 128
    %1396 = vxpose.xlu0.c.b16.cont [3/8] %v1323, 128
    %1397 = vxpose.xlu0.c.b16.cont [4/8] %v1324, 128
    %1398 = vxpose.xlu0.c.b16.cont [5/8] %v1325, 128
    %1399 = vxpose.xlu0.c.b16.cont [6/8] %v1326, 128
    %1400 = vxpose.xlu0.c.b16.cont [7/8] %v1327, 128
    %1401 = vxpose.xlu0.c.b16.end [8/8] %v1328, 128
    %v1402 = vpop.trf.xlu0
    %v1403 = vpop.trf.xlu0
    %v1404 = vpop.trf.xlu0
    %v1405 = vpop.trf.xlu0
    %v1406 = vpop.trf.xlu0
    %v1407 = vpop.trf.xlu0
    %v1408 = vpop.trf.xlu0
    %v1409 = vpop.trf.xlu0
    %1410 = vmatprep.subr.bf16.mxu0 0
    %1411 = vmatpush1.bf16.msra.mxu0 %v1142
    %1412 = vmatprep.subr.bf16.mxu0 0
    %1413 = vmatpush1.bf16.msra.mxu0 %v1141
    %1414 = vmatprep.subr.bf16.mxu0 0
    %1415 = vmatpush1.bf16.msra.mxu0 %v1140
    %1416 = vmatprep.subr.bf16.mxu0 0
    %1417 = vmatpush1.bf16.msra.mxu0 %v1139
    %1418 = vmatprep.subr.bf16.mxu0 0
    %1419 = vmatpush1.bf16.msra.mxu0 %v1138
    %1420 = vmatprep.subr.bf16.mxu0 0
    %1421 = vmatpush1.bf16.msra.mxu0 %v1137
    %1422 = vmatprep.subr.bf16.mxu0 0
    %1423 = vmatpush1.bf16.msra.mxu0 %v1136
    %1424 = vmatprep.subr.bf16.mxu0 0
    %1425 = vmatpush1.bf16.msra.mxu0 %v1135
    %1426 = vmatprep.subr.bf16.mxu0 0
    %1427 = vmatpush2.bf16.msra.mxu0 0
    %1428 = vmatprep.subr.bf16.mxu0 0
    %1429 = vmatpush2.bf16.msra.mxu0 0
    %1430 = vmatprep.subr.bf16.mxu0 0
    %1431 = vmatpush2.bf16.msra.mxu0 0
    %1432 = vmatprep.subr.bf16.mxu0 0
    %1433 = vmatpush2.bf16.msra.mxu0 0
    %1434 = vmatprep.subr.bf16.mxu0 0
    %1435 = vmatpush2.bf16.msra.mxu0 0
    %1436 = vmatprep.subr.bf16.mxu0 0
    %1437 = vmatpush2.bf16.msra.mxu0 0
    %1438 = vmatprep.subr.bf16.mxu0 0
    %1439 = vmatpush2.bf16.msra.mxu0 0
    %1440 = vmatprep.subr.bf16.mxu0 0
    %1441 = vmatpush2.bf16.msra.mxu0 0
    %1442 = vmatprep.mubr.bf16.mxu0 0
    %1443 = vmatmul.mubr.bf16.gmra.mxu0 %v1402
    %v1444 = vpop.f32.mrf.mxu0
    %v1445 = vadd.f32 0.0, %v1444
    %v1446 = vpop.f32.mrf.mxu0
    %v1447 = vpop.f32.mrf.mxu0
    %v1448 = vadd.f32 0.0, %v1447
    %v1449 = vpop.f32.mrf.mxu0
    %1450 = vmatprep.mubr.bf16.mxu0 0
    %1451 = vmatmul.mubr.bf16.gmra.mxu0 %v1403
    %v1452 = vpop.f32.mrf.mxu0
    %v1453 = vadd.f32 0.0, %v1452
    %v1454 = vpop.f32.mrf.mxu0
    %v1455 = vpop.f32.mrf.mxu0
    %v1456 = vadd.f32 0.0, %v1455
    %v1457 = vpop.f32.mrf.mxu0
    %1458 = vmatprep.mubr.bf16.mxu0 0
    %1459 = vmatmul.mubr.bf16.gmra.mxu0 %v1404
    %v1460 = vpop.f32.mrf.mxu0
    %v1461 = vadd.f32 0.0, %v1460
    %v1462 = vpop.f32.mrf.mxu0
    %v1463 = vpop.f32.mrf.mxu0
    %v1464 = vadd.f32 0.0, %v1463
    %v1465 = vpop.f32.mrf.mxu0
    %1466 = vmatprep.mubr.bf16.mxu0 0
    %1467 = vmatmul.mubr.bf16.gmra.mxu0 %v1405
    %v1468 = vpop.f32.mrf.mxu0
    %v1469 = vadd.f32 0.0, %v1468
    %v1470 = vpop.f32.mrf.mxu0
    %v1471 = vpop.f32.mrf.mxu0
    %v1472 = vadd.f32 0.0, %v1471
    %v1473 = vpop.f32.mrf.mxu0
    %1474 = vdwg.mxu0
    %v1475 = vlaneseq
    %v1476 = vshrl.u32 %v1475, 7
    %v1477 = vadd.s32 %v1476, 8
    %v1478 = vadd.s32 %v1476, 16
    %v1479 = vadd.s32 %v1476, 24
    %v1480 = vadd.s32 %v1476, 32
    %v1481 = vadd.s32 %v1476, 40
    %v1482 = vadd.s32 %v1476, 48
    %v1483 = vadd.s32 %v1476, 56
    %v1484 = vlaneseq
    %v1485 = vand.u32 %v1484, 127
    %vm1486 = vcmp.eq.s32.totalorder %v1476, %v1485
    %vm1487 = vcmp.eq.s32.totalorder %v1477, %v1485
    %vm1488 = vcmp.eq.s32.totalorder %v1478, %v1485
    %vm1489 = vcmp.eq.s32.totalorder %v1479, %v1485
    %vm1490 = vcmp.eq.s32.totalorder %v1480, %v1485
    %vm1491 = vcmp.eq.s32.totalorder %v1481, %v1485
    %vm1492 = vcmp.eq.s32.totalorder %v1482, %v1485
    %vm1493 = vcmp.eq.s32.totalorder %v1483, %v1485
    %v1494 = vsel %vm1486, 1.0, 0.0
    %v1495 = vsel %vm1487, 1.0, 0.0
    %v1496 = vsel %vm1488, 1.0, 0.0
    %v1497 = vsel %vm1489, 1.0, 0.0
    %v1498 = vsel %vm1490, 1.0, 0.0
    %v1499 = vsel %vm1491, 1.0, 0.0
    %v1500 = vsel %vm1492, 1.0, 0.0
    %v1501 = vsel %vm1493, 1.0, 0.0
    %v1502 = vmul.f32 %v1259, %v1119
    %v1503 = vmul.f32 %v1262, %v1120
    %v1504 = vmul.f32 %v1267, %v1121
    %v1505 = vmul.f32 %v1270, %v1122
    %v1506 = vmul.f32 %v1275, %v1123
    %v1507 = vmul.f32 %v1278, %v1124
    %v1508 = vmul.f32 %v1283, %v1125
    %v1509 = vmul.f32 %v1286, %v1126
    %v1510 = vmul.f32 %v1291, %v1127
    %v1511 = vmul.f32 %v1294, %v1128
    %v1512 = vmul.f32 %v1299, %v1129
    %v1513 = vmul.f32 %v1302, %v1130
    %v1514 = vmul.f32 %v1307, %v1131
    %v1515 = vmul.f32 %v1310, %v1132
    %v1516 = vmul.f32 %v1315, %v1133
    %v1517 = vmul.f32 %v1318, %v1134
    %v1518 = vsel %vm958, %v1502, 0.0
    %v1519 = vsel %vm958, %v1503, 0.0
    %v1520 = vadd.f32 %v1518, %v1519
    %v1521 = vsel %vm958, %v1504, 0.0
    %v1522 = vadd.f32 %v1520, %v1521
    %v1523 = vsel %vm958, %v1505, 0.0
    %v1524 = vadd.f32 %v1522, %v1523
    %v1525 = vsel %vm958, %v1506, 0.0
    %v1526 = vadd.f32 %v1524, %v1525
    %v1527 = vsel %vm958, %v1507, 0.0
    %v1528 = vadd.f32 %v1526, %v1527
    %v1529 = vsel %vm958, %v1508, 0.0
    %v1530 = vadd.f32 %v1528, %v1529
    %v1531 = vsel %vm958, %v1509, 0.0
    %v1532 = vadd.f32 %v1530, %v1531
    %v1533 = vsel %vm958, %v1510, 0.0
    %v1534 = vadd.f32 %v1532, %v1533
    %v1535 = vsel %vm958, %v1511, 0.0
    %v1536 = vadd.f32 %v1534, %v1535
    %v1537 = vsel %vm958, %v1512, 0.0
    %v1538 = vadd.f32 %v1536, %v1537
    %v1539 = vsel %vm958, %v1513, 0.0
    %v1540 = vadd.f32 %v1538, %v1539
    %v1541 = vsel %vm958, %v1514, 0.0
    %v1542 = vadd.f32 %v1540, %v1541
    %v1543 = vsel %vm958, %v1515, 0.0
    %v1544 = vadd.f32 %v1542, %v1543
    %v1545 = vsel %vm958, %v1516, 0.0
    %v1546 = vadd.f32 %v1544, %v1545
    %v1547 = vsel %vm958, %v1517, 0.0
    %v1548 = vadd.f32 %v1546, %v1547
    %1549 = vadd.xlane.f32.xlu0 %v1548
    %v1550 = vpop.xlane.xlu0 %1549
    %v1551 = vrot.slane %v1550, 4
    %v1552 = vadd.f32 %v1550, %v1551
    %v1553 = vrot.slane %v1552, 2
    %v1554 = vadd.f32 %v1552, %v1553
    %v1555 = vrot.slane %v1554, 1
    %v1556 = vadd.f32 %v1554, %v1555
    %s1557 = vtos %v1556
    %v1558 = vstv %s1557
    %v1559 = vsub.f32 %v134, 1.0
    %v1560 = vsub.f32 %v135, 1.0
    %v1561 = vsub.f32 %v136, 1.0
    %v1562 = vsub.f32 %v137, 1.0
    %v1563 = vsub.f32 %v138, 1.0
    %v1564 = vsub.f32 %v139, 1.0
    %v1565 = vsub.f32 %v140, 1.0
    %v1566 = vsub.f32 %v141, 1.0
    %v1567 = vsub.f32 %v142, 1.0
    %v1568 = vsub.f32 %v143, 1.0
    %v1569 = vsub.f32 %v144, 1.0
    %v1570 = vsub.f32 %v145, 1.0
    %v1571 = vsub.f32 %v146, 1.0
    %v1572 = vsub.f32 %v147, 1.0
    %v1573 = vsub.f32 %v148, 1.0
    %v1574 = vsub.f32 %v149, 1.0
    %v1575 = vmul.f32 %v1119, %v1119
    %v1576 = vmul.f32 %v1120, %v1120
    %v1577 = vmul.f32 %v1121, %v1121
    %v1578 = vmul.f32 %v1122, %v1122
    %v1579 = vmul.f32 %v1123, %v1123
    %v1580 = vmul.f32 %v1124, %v1124
    %v1581 = vmul.f32 %v1125, %v1125
    %v1582 = vmul.f32 %v1126, %v1126
    %v1583 = vmul.f32 %v1127, %v1127
    %v1584 = vmul.f32 %v1128, %v1128
    %v1585 = vmul.f32 %v1129, %v1129
    %v1586 = vmul.f32 %v1130, %v1130
    %v1587 = vmul.f32 %v1131, %v1131
    %v1588 = vmul.f32 %v1132, %v1132
    %v1589 = vmul.f32 %v1133, %v1133
    %v1590 = vmul.f32 %v1134, %v1134
    %v1591 = vmul.f32 %v1559, %v1575
    %v1592 = vmul.f32 %v1560, %v1576
    %v1593 = vmul.f32 %v1561, %v1577
    %v1594 = vmul.f32 %v1562, %v1578
    %v1595 = vmul.f32 %v1563, %v1579
    %v1596 = vmul.f32 %v1564, %v1580
    %v1597 = vmul.f32 %v1565, %v1581
    %v1598 = vmul.f32 %v1566, %v1582
    %v1599 = vmul.f32 %v1567, %v1583
    %v1600 = vmul.f32 %v1568, %v1584
    %v1601 = vmul.f32 %v1569, %v1585
    %v1602 = vmul.f32 %v1570, %v1586
    %v1603 = vmul.f32 %v1571, %v1587
    %v1604 = vmul.f32 %v1572, %v1588
    %v1605 = vmul.f32 %v1573, %v1589
    %v1606 = vmul.f32 %v1574, %v1590
    %v1607 = vsel %vm958, %v1591, 0.0
    %v1608 = vsel %vm958, %v1592, 0.0
    %v1609 = vadd.f32 %v1607, %v1608
    %v1610 = vsel %vm958, %v1593, 0.0
    %v1611 = vadd.f32 %v1609, %v1610
    %v1612 = vsel %vm958, %v1594, 0.0
    %v1613 = vadd.f32 %v1611, %v1612
    %v1614 = vsel %vm958, %v1595, 0.0
    %v1615 = vadd.f32 %v1613, %v1614
    %v1616 = vsel %vm958, %v1596, 0.0
    %v1617 = vadd.f32 %v1615, %v1616
    %v1618 = vsel %vm958, %v1597, 0.0
    %v1619 = vadd.f32 %v1617, %v1618
    %v1620 = vsel %vm958, %v1598, 0.0
    %v1621 = vadd.f32 %v1619, %v1620
    %v1622 = vsel %vm958, %v1599, 0.0
    %v1623 = vadd.f32 %v1621, %v1622
    %v1624 = vsel %vm958, %v1600, 0.0
    %v1625 = vadd.f32 %v1623, %v1624
    %v1626 = vsel %vm958, %v1601, 0.0
    %v1627 = vadd.f32 %v1625, %v1626
    %v1628 = vsel %vm958, %v1602, 0.0
    %v1629 = vadd.f32 %v1627, %v1628
    %v1630 = vsel %vm958, %v1603, 0.0
    %v1631 = vadd.f32 %v1629, %v1630
    %v1632 = vsel %vm958, %v1604, 0.0
    %v1633 = vadd.f32 %v1631, %v1632
    %v1634 = vsel %vm958, %v1605, 0.0
    %v1635 = vadd.f32 %v1633, %v1634
    %v1636 = vsel %vm958, %v1606, 0.0
    %v1637 = vadd.f32 %v1635, %v1636
    %1638 = vadd.xlane.f32.xlu0 %v1637
    %v1639 = vpop.xlane.xlu0 %1638
    %v1640 = vrot.slane %v1639, 4
    %v1641 = vadd.f32 %v1639, %v1640
    %v1642 = vrot.slane %v1641, 2
    %v1643 = vadd.f32 %v1641, %v1642
    %v1644 = vrot.slane %v1643, 1
    %v1645 = vadd.f32 %v1643, %v1644
    %s1646 = vtos %v1645
    %v1647 = vstv %s1646
    %v1648 = vadd.f32 %v1647, 1e-15
    %v1649 = vrcp.pop %v1648
    %v1650 = vmul.f32 %v1558, %v1649
    %v1651 = vsub.f32 0.0, %v1650
    %vm1652 = vcmask 0
    %1653 = vst.msk [vmem:[#allocation4] sm:$0x1] %vm1652, %v1651
    %1654 = vxpose.xlu0.b32.start [1/16] %v1119, 128
    %1655 = vxpose.xlu0.b32.cont [2/16] %v1120, 128
    %1656 = vxpose.xlu0.b32.cont [3/16] %v1121, 128
    %1657 = vxpose.xlu0.b32.cont [4/16] %v1122, 128
    %1658 = vxpose.xlu0.b32.cont [5/16] %v1123, 128
    %1659 = vxpose.xlu0.b32.cont [6/16] %v1124, 128
    %1660 = vxpose.xlu0.b32.cont [7/16] %v1125, 128
    %1661 = vxpose.xlu0.b32.cont [8/16] %v1126, 128
    %1662 = vxpose.xlu0.b32.cont [9/16] %v1127, 128
    %1663 = vxpose.xlu0.b32.cont [10/16] %v1128, 128
    %1664 = vxpose.xlu0.b32.cont [11/16] %v1129, 128
    %1665 = vxpose.xlu0.b32.cont [12/16] %v1130, 128
    %1666 = vxpose.xlu0.b32.cont [13/16] %v1131, 128
    %1667 = vxpose.xlu0.b32.cont [14/16] %v1132, 128
    %1668 = vxpose.xlu0.b32.cont [15/16] %v1133, 128
    %1669 = vxpose.xlu0.b32.end [16/16] %v1134, 128
    %v1670 = vpop.trf.xlu0
    %v1671 = vpop.trf.xlu0
    %v1672 = vpop.trf.xlu0
    %v1673 = vpop.trf.xlu0
    %v1674 = vpop.trf.xlu0
    %v1675 = vpop.trf.xlu0
    %v1676 = vpop.trf.xlu0
    %v1677 = vpop.trf.xlu0
    %v1678 = vpop.trf.xlu0
    %v1679 = vpop.trf.xlu0
    %v1680 = vpop.trf.xlu0
    %v1681 = vpop.trf.xlu0
    %v1682 = vpop.trf.xlu0
    %v1683 = vpop.trf.xlu0
    %v1684 = vpop.trf.xlu0
    %v1685 = vpop.trf.xlu0
    %1686 = vmatprep.subr.mxu0 0.0
    %1687 = vmatpush1.msra.mxu0 %v1134
    %1688 = vmatprep.subr.mxu0 0.0
    %1689 = vmatpush1.msra.mxu0 %v1133
    %1690 = vmatprep.subr.mxu0 0.0
    %1691 = vmatpush1.msra.mxu0 %v1132
    %1692 = vmatprep.subr.mxu0 0.0
    %1693 = vmatpush1.msra.mxu0 %v1131
    %1694 = vmatprep.subr.mxu0 0.0
    %1695 = vmatpush1.msra.mxu0 %v1130
    %1696 = vmatprep.subr.mxu0 0.0
    %1697 = vmatpush1.msra.mxu0 %v1129
    %1698 = vmatprep.subr.mxu0 0.0
    %1699 = vmatpush1.msra.mxu0 %v1128
    %1700 = vmatprep.subr.mxu0 0.0
    %1701 = vmatpush1.msra.mxu0 %v1127
    %1702 = vmatprep.subr.mxu0 0.0
    %1703 = vmatpush1.msra.mxu0 %v1126
    %1704 = vmatprep.subr.mxu0 0.0
    %1705 = vmatpush1.msra.mxu0 %v1125
    %1706 = vmatprep.subr.mxu0 0.0
    %1707 = vmatpush1.msra.mxu0 %v1124
    %1708 = vmatprep.subr.mxu0 0.0
    %1709 = vmatpush1.msra.mxu0 %v1123
    %1710 = vmatprep.subr.mxu0 0.0
    %1711 = vmatpush1.msra.mxu0 %v1122
    %1712 = vmatprep.subr.mxu0 0.0
    %1713 = vmatpush1.msra.mxu0 %v1121
    %1714 = vmatprep.subr.mxu0 0.0
    %1715 = vmatpush1.msra.mxu0 %v1120
    %1716 = vmatprep.subr.mxu0 0.0
    %1717 = vmatpush1.msra.mxu0 %v1119
    %1718 = vmatprep.subr.mxu0 0.0
    %1719 = vmatpush2.msra.mxu0 0.0
    %1720 = vmatprep.subr.mxu0 0.0
    %1721 = vmatpush2.msra.mxu0 0.0
    %1722 = vmatprep.subr.mxu0 0.0
    %1723 = vmatpush2.msra.mxu0 0.0
    %1724 = vmatprep.subr.mxu0 0.0
    %1725 = vmatpush2.msra.mxu0 0.0
    %1726 = vmatprep.subr.mxu0 0.0
    %1727 = vmatpush2.msra.mxu0 0.0
    %1728 = vmatprep.subr.mxu0 0.0
    %1729 = vmatpush2.msra.mxu0 0.0
    %1730 = vmatprep.subr.mxu0 0.0
    %1731 = vmatpush2.msra.mxu0 0.0
    %1732 = vmatprep.subr.mxu0 0.0
    %1733 = vmatpush2.msra.mxu0 0.0
    %1734 = vmatprep.subr.mxu0 0.0
    %1735 = vmatpush2.msra.mxu0 0.0
    %1736 = vmatprep.subr.mxu0 0.0
    %1737 = vmatpush2.msra.mxu0 0.0
    %1738 = vmatprep.subr.mxu0 0.0
    %1739 = vmatpush2.msra.mxu0 0.0
    %1740 = vmatprep.subr.mxu0 0.0
    %1741 = vmatpush2.msra.mxu0 0.0
    %1742 = vmatprep.subr.mxu0 0.0
    %1743 = vmatpush2.msra.mxu0 0.0
    %1744 = vmatprep.subr.mxu0 0.0
    %1745 = vmatpush2.msra.mxu0 0.0
    %1746 = vmatprep.subr.mxu0 0.0
    %1747 = vmatpush2.msra.mxu0 0.0
    %1748 = vmatprep.subr.mxu0 0.0
    %1749 = vmatpush2.msra.mxu0 0.0
    %1750 = vmatprep.mubr.f32.mxu0 0.0
    %1751 = vmatmul.mubr.f32.gmra.mxu0 %v1670
    %v1752 = vpop.f32.mrf.mxu0
    %v1753 = vadd.f32 0.0, %v1752
    %v1754 = vpop.f32.mrf.mxu0
    %1755 = vmatprep.mubr.f32.mxu0 0.0
    %1756 = vmatmul.mubr.f32.gmra.mxu0 %v1671
    %v1757 = vpop.f32.mrf.mxu0
    %v1758 = vadd.f32 0.0, %v1757
    %v1759 = vpop.f32.mrf.mxu0
    %1760 = vmatprep.mubr.f32.mxu0 0.0
    %1761 = vmatmul.mubr.f32.gmra.mxu0 %v1672
    %v1762 = vpop.f32.mrf.mxu0
    %v1763 = vadd.f32 0.0, %v1762
    %v1764 = vpop.f32.mrf.mxu0
    %1765 = vmatprep.mubr.f32.mxu0 0.0
    %1766 = vmatmul.mubr.f32.gmra.mxu0 %v1673
    %v1767 = vpop.f32.mrf.mxu0
    %v1768 = vadd.f32 0.0, %v1767
    %v1769 = vpop.f32.mrf.mxu0
    %1770 = vmatprep.mubr.f32.mxu0 0.0
    %1771 = vmatmul.mubr.f32.gmra.mxu0 %v1674
    %v1772 = vpop.f32.mrf.mxu0
    %v1773 = vadd.f32 0.0, %v1772
    %v1774 = vpop.f32.mrf.mxu0
    %1775 = vmatprep.mubr.f32.mxu0 0.0
    %1776 = vmatmul.mubr.f32.gmra.mxu0 %v1675
    %v1777 = vpop.f32.mrf.mxu0
    %v1778 = vadd.f32 0.0, %v1777
    %v1779 = vpop.f32.mrf.mxu0
    %1780 = vmatprep.mubr.f32.mxu0 0.0
    %1781 = vmatmul.mubr.f32.gmra.mxu0 %v1676
    %v1782 = vpop.f32.mrf.mxu0
    %v1783 = vadd.f32 0.0, %v1782
    %v1784 = vpop.f32.mrf.mxu0
    %1785 = vmatprep.mubr.f32.mxu0 0.0
    %1786 = vmatmul.mubr.f32.gmra.mxu0 %v1677
    %v1787 = vpop.f32.mrf.mxu0
    %v1788 = vadd.f32 0.0, %v1787
    %v1789 = vpop.f32.mrf.mxu0
    %1790 = vdwg.mxu0
    %v1791 = vmul.f32 %v1753, %v1753
    %v1792 = vmul.f32 %v1758, %v1758
    %v1793 = vmul.f32 %v1763, %v1763
    %v1794 = vmul.f32 %v1768, %v1768
    %v1795 = vmul.f32 %v1773, %v1773
    %v1796 = vmul.f32 %v1778, %v1778
    %v1797 = vmul.f32 %v1783, %v1783
    %v1798 = vmul.f32 %v1788, %v1788
    %v1799 = vsel %vm958, %v1791, 0.0
    %v1800 = vsel %vm958, %v1792, 0.0
    %v1801 = vadd.f32 %v1799, %v1800
    %v1802 = vsel %vm958, %v1793, 0.0
    %v1803 = vadd.f32 %v1801, %v1802
    %v1804 = vsel %vm958, %v1794, 0.0
    %v1805 = vadd.f32 %v1803, %v1804
    %v1806 = vsel %vm958, %v1795, 0.0
    %v1807 = vadd.f32 %v1805, %v1806
    %v1808 = vsel %vm958, %v1796, 0.0
    %v1809 = vadd.f32 %v1807, %v1808
    %v1810 = vsel %vm958, %v1797, 0.0
    %v1811 = vadd.f32 %v1809, %v1810
    %v1812 = vsel %vm958, %v1798, 0.0
    %v1813 = vadd.f32 %v1811, %v1812
    %1814 = vadd.xlane.f32.xlu0 %v1813
    %v1815 = vpop.xlane.xlu0 %1814
    %v1816 = vrot.slane %v1815, 4
    %v1817 = vadd.f32 %v1815, %v1816
    %v1818 = vrot.slane %v1817, 2
    %v1819 = vadd.f32 %v1817, %v1818
    %v1820 = vrot.slane %v1819, 1
    %v1821 = vadd.f32 %v1819, %v1820
    %s1822 = vtos %v1821
    %v1823 = vstv %s1822
    %v1824 = vrsqrt.pop %v1823
    %v1825 = vmul.f32 %v1823, %v1824
    %vm1826 = vcmp.eq.f32.partialorder %v1823, inf
    %v1827 = vsel %vm1826, %v1823, %v1825
    %vm1828 = vcmp.eq.f32.partialorder %v1823, 0.0
    %v1829 = vand.u32 %v1823, 2147483648
    %v1830 = vsel %vm1828, %v1829, %v1827
    %v1831 = vadd.f32 %v1830, 1e-15
    %v1832 = vrcp.pop %v1831
    %v1833 = vmul.f32 1.0, %v1832
    %v1834 = vmul.f32 %v1753, %v1833
    %v1835 = vmul.f32 %v1758, %v1833
    %v1836 = vmul.f32 %v1763, %v1833
    %v1837 = vmul.f32 %v1768, %v1833
    %v1838 = vmul.f32 %v1773, %v1833
    %v1839 = vmul.f32 %v1778, %v1833
    %v1840 = vmul.f32 %v1783, %v1833
    %v1841 = vmul.f32 %v1788, %v1833
    %v1842 = vmul.f32 %v1494, 0.125
    %v1843 = vmul.f32 %v1495, 0.125
    %v1844 = vmul.f32 %v1496, 0.125
    %v1845 = vmul.f32 %v1497, 0.125
    %v1846 = vmul.f32 %v1498, 0.125
    %v1847 = vmul.f32 %v1499, 0.125
    %v1848 = vmul.f32 %v1500, 0.125
    %v1849 = vmul.f32 %v1501, 0.125
    %v1850 = vsub.f32 %v1834, %v1842
    %v1851 = vsub.f32 %v1835, %v1843
    %v1852 = vsub.f32 %v1836, %v1844
    %v1853 = vsub.f32 %v1837, %v1845
    %v1854 = vsub.f32 %v1838, %v1846
    %v1855 = vsub.f32 %v1839, %v1847
    %v1856 = vsub.f32 %v1840, %v1848
    %v1857 = vsub.f32 %v1841, %v1849
    %v1858 = vmul.f32 %v1850, %v1850
    %v1859 = vmul.f32 %v1851, %v1851
    %v1860 = vmul.f32 %v1852, %v1852
    %v1861 = vmul.f32 %v1853, %v1853
    %v1862 = vmul.f32 %v1854, %v1854
    %v1863 = vmul.f32 %v1855, %v1855
    %v1864 = vmul.f32 %v1856, %v1856
    %v1865 = vmul.f32 %v1857, %v1857
    %v1866 = vsel %vm958, %v1858, 0.0
    %v1867 = vsel %vm958, %v1859, 0.0
    %v1868 = vadd.f32 %v1866, %v1867
    %v1869 = vsel %vm958, %v1860, 0.0
    %v1870 = vadd.f32 %v1868, %v1869
    %v1871 = vsel %vm958, %v1861, 0.0
    %v1872 = vadd.f32 %v1870, %v1871
    %v1873 = vsel %vm958, %v1862, 0.0
    %v1874 = vadd.f32 %v1872, %v1873
    %v1875 = vsel %vm958, %v1863, 0.0
    %v1876 = vadd.f32 %v1874, %v1875
    %v1877 = vsel %vm958, %v1864, 0.0
    %v1878 = vadd.f32 %v1876, %v1877
    %v1879 = vsel %vm958, %v1865, 0.0
    %v1880 = vadd.f32 %v1878, %v1879
    %1881 = vadd.xlane.f32.xlu0 %v1880
    %v1882 = vpop.xlane.xlu0 %1881
    %v1883 = vrot.slane %v1882, 4
    %v1884 = vadd.f32 %v1882, %v1883
    %v1885 = vrot.slane %v1884, 2
    %v1886 = vadd.f32 %v1884, %v1885
    %v1887 = vrot.slane %v1886, 1
    %v1888 = vadd.f32 %v1886, %v1887
    %s1889 = vtos %v1888
    %v1890 = vstv %s1889
    %v1891 = vrsqrt.pop %v1890
    %v1892 = vmul.f32 %v1890, %v1891
    %vm1893 = vcmp.eq.f32.partialorder %v1890, inf
    %v1894 = vsel %vm1893, %v1890, %v1892
    %vm1895 = vcmp.eq.f32.partialorder %v1890, 0.0
    %v1896 = vand.u32 %v1890, 2147483648
    %v1897 = vsel %vm1895, %v1896, %v1894
    %1898 = vst.msk [vmem:[#allocation6] sm:$0x1] %vm1652, %v1897
    %v1899 = vsub.f32 1.0, %v1494
    %v1900 = vsub.f32 1.0, %v1495
    %v1901 = vsub.f32 1.0, %v1496
    %v1902 = vsub.f32 1.0, %v1497
    %v1903 = vsub.f32 1.0, %v1498
    %v1904 = vsub.f32 1.0, %v1499
    %v1905 = vsub.f32 1.0, %v1500
    %v1906 = vsub.f32 1.0, %v1501
    %v1907 = vmul.f32 %v1364, %v1899
    %v1908 = vmul.f32 %v1367, %v1900
    %v1909 = vmul.f32 %v1372, %v1901
    %v1910 = vmul.f32 %v1375, %v1902
    %v1911 = vmul.f32 %v1380, %v1903
    %v1912 = vmul.f32 %v1383, %v1904
    %v1913 = vmul.f32 %v1388, %v1905
    %v1914 = vmul.f32 %v1391, %v1906
    %v1915 = vmul.f32 %v1445, %v1899
    %v1916 = vmul.f32 %v1448, %v1900
    %v1917 = vmul.f32 %v1453, %v1901
    %v1918 = vmul.f32 %v1456, %v1902
    %v1919 = vmul.f32 %v1461, %v1903
    %v1920 = vmul.f32 %v1464, %v1904
    %v1921 = vmul.f32 %v1469, %v1905
    %v1922 = vmul.f32 %v1472, %v1906
    %v1923 = vsel %vm958, %v1907, 0.0
    %1924 = vadd.xlane.f32.xlu0 %v1923
    %v1925 = vpop.xlane.xlu0 %1924
    %v1926 = vsel %vm958, %v1908, 0.0
    %1927 = vadd.xlane.f32.xlu0 %v1926
    %v1928 = vpop.xlane.xlu0 %1927
    %v1929 = vsel %vm958, %v1909, 0.0
    %1930 = vadd.xlane.f32.xlu0 %v1929
    %v1931 = vpop.xlane.xlu0 %1930
    %v1932 = vsel %vm958, %v1910, 0.0
    %1933 = vadd.xlane.f32.xlu0 %v1932
    %v1934 = vpop.xlane.xlu0 %1933
    %v1935 = vsel %vm958, %v1911, 0.0
    %1936 = vadd.xlane.f32.xlu0 %v1935
    %v1937 = vpop.xlane.xlu0 %1936
    %v1938 = vsel %vm958, %v1912, 0.0
    %1939 = vadd.xlane.f32.xlu0 %v1938
    %v1940 = vpop.xlane.xlu0 %1939
    %v1941 = vsel %vm958, %v1913, 0.0
    %1942 = vadd.xlane.f32.xlu0 %v1941
    %v1943 = vpop.xlane.xlu0 %1942
    %v1944 = vsel %vm958, %v1914, 0.0
    %1945 = vadd.xlane.f32.xlu0 %v1944
    %v1946 = vpop.xlane.xlu0 %1945
    %v1947 = vrsqrt.pop %v1925
    %v1948 = vmul.f32 %v1925, %v1947
    %vm1949 = vcmp.eq.f32.partialorder %v1925, inf
    %v1950 = vsel %vm1949, %v1925, %v1948
    %vm1951 = vcmp.eq.f32.partialorder %v1925, 0.0
    %v1952 = vand.u32 %v1925, 2147483648
    %v1953 = vsel %vm1951, %v1952, %v1950
    %v1954 = vrsqrt.pop %v1928
    %v1955 = vmul.f32 %v1928, %v1954
    %vm1956 = vcmp.eq.f32.partialorder %v1928, inf
    %v1957 = vsel %vm1956, %v1928, %v1955
    %vm1958 = vcmp.eq.f32.partialorder %v1928, 0.0
    %v1959 = vand.u32 %v1928, 2147483648
    %v1960 = vsel %vm1958, %v1959, %v1957
    %v1961 = vrsqrt.pop %v1931
    %v1962 = vmul.f32 %v1931, %v1961
    %vm1963 = vcmp.eq.f32.partialorder %v1931, inf
    %v1964 = vsel %vm1963, %v1931, %v1962
    %vm1965 = vcmp.eq.f32.partialorder %v1931, 0.0
    %v1966 = vand.u32 %v1931, 2147483648
    %v1967 = vsel %vm1965, %v1966, %v1964
    %v1968 = vrsqrt.pop %v1934
    %v1969 = vmul.f32 %v1934, %v1968
    %vm1970 = vcmp.eq.f32.partialorder %v1934, inf
    %v1971 = vsel %vm1970, %v1934, %v1969
    %vm1972 = vcmp.eq.f32.partialorder %v1934, 0.0
    %v1973 = vand.u32 %v1934, 2147483648
    %v1974 = vsel %vm1972, %v1973, %v1971
    %v1975 = vrsqrt.pop %v1937
    %v1976 = vmul.f32 %v1937, %v1975
    %vm1977 = vcmp.eq.f32.partialorder %v1937, inf
    %v1978 = vsel %vm1977, %v1937, %v1976
    %vm1979 = vcmp.eq.f32.partialorder %v1937, 0.0
    %v1980 = vand.u32 %v1937, 2147483648
    %v1981 = vsel %vm1979, %v1980, %v1978
    %v1982 = vrsqrt.pop %v1940
    %v1983 = vmul.f32 %v1940, %v1982
    %vm1984 = vcmp.eq.f32.partialorder %v1940, inf
    %v1985 = vsel %vm1984, %v1940, %v1983
    %vm1986 = vcmp.eq.f32.partialorder %v1940, 0.0
    %v1987 = vand.u32 %v1940, 2147483648
    %v1988 = vsel %vm1986, %v1987, %v1985
    %v1989 = vrsqrt.pop %v1943
    %v1990 = vmul.f32 %v1943, %v1989
    %vm1991 = vcmp.eq.f32.partialorder %v1943, inf
    %v1992 = vsel %vm1991, %v1943, %v1990
    %vm1993 = vcmp.eq.f32.partialorder %v1943, 0.0
    %v1994 = vand.u32 %v1943, 2147483648
    %v1995 = vsel %vm1993, %v1994, %v1992
    %v1996 = vrsqrt.pop %v1946
    %v1997 = vmul.f32 %v1946, %v1996
    %vm1998 = vcmp.eq.f32.partialorder %v1946, inf
    %v1999 = vsel %vm1998, %v1946, %v1997
    %vm2000 = vcmp.eq.f32.partialorder %v1946, 0.0
    %v2001 = vand.u32 %v1946, 2147483648
    %v2002 = vsel %vm2000, %v2001, %v1999
    %v2003 = vadd.f32 %v1953, 1e-15
    %v2004 = vadd.f32 %v1960, 1e-15
    %v2005 = vadd.f32 %v1967, 1e-15
    %v2006 = vadd.f32 %v1974, 1e-15
    %v2007 = vadd.f32 %v1981, 1e-15
    %v2008 = vadd.f32 %v1988, 1e-15
    %v2009 = vadd.f32 %v1995, 1e-15
    %v2010 = vadd.f32 %v2002, 1e-15
    %v2011 = vsel %vm958, %v1915, 0.0
    %v2012 = vsel %vm958, %v1916, 0.0
    %v2013 = vadd.f32 %v2011, %v2012
    %v2014 = vsel %vm958, %v1917, 0.0
    %v2015 = vadd.f32 %v2013, %v2014
    %v2016 = vsel %vm958, %v1918, 0.0
    %v2017 = vadd.f32 %v2015, %v2016
    %v2018 = vsel %vm958, %v1919, 0.0
    %v2019 = vadd.f32 %v2017, %v2018
    %v2020 = vsel %vm958, %v1920, 0.0
    %v2021 = vadd.f32 %v2019, %v2020
    %v2022 = vsel %vm958, %v1921, 0.0
    %v2023 = vadd.f32 %v2021, %v2022
    %v2024 = vsel %vm958, %v1922, 0.0
    %v2025 = vadd.f32 %v2023, %v2024
    %v2026 = vrot.slane %v2025, 4
    %v2027 = vadd.f32 %v2025, %v2026
    %v2028 = vrot.slane %v2027, 2
    %v2029 = vadd.f32 %v2027, %v2028
    %v2030 = vrot.slane %v2029, 1
    %v2031 = vadd.f32 %v2029, %v2030
    %v2032 = vrsqrt.pop %v2031
    %v2033 = vmul.f32 %v2031, %v2032
    %vm2034 = vcmp.eq.f32.partialorder %v2031, inf
    %v2035 = vsel %vm2034, %v2031, %v2033
    %vm2036 = vcmp.eq.f32.partialorder %v2031, 0.0
    %v2037 = vand.u32 %v2031, 2147483648
    %v2038 = vsel %vm2036, %v2037, %v2035
    %v2039 = vadd.f32 %v2038, 1e-15
    %v2040 = vrcp.pop %v2003
    %v2041 = vmul.f32 1.0, %v2040
    %v2042 = vrcp.pop %v2004
    %v2043 = vmul.f32 1.0, %v2042
    %v2044 = vrcp.pop %v2005
    %v2045 = vmul.f32 1.0, %v2044
    %v2046 = vrcp.pop %v2006
    %v2047 = vmul.f32 1.0, %v2046
    %v2048 = vrcp.pop %v2007
    %v2049 = vmul.f32 1.0, %v2048
    %v2050 = vrcp.pop %v2008
    %v2051 = vmul.f32 1.0, %v2050
    %v2052 = vrcp.pop %v2009
    %v2053 = vmul.f32 1.0, %v2052
    %v2054 = vrcp.pop %v2010
    %v2055 = vmul.f32 1.0, %v2054
    %v2056 = vmul.f32 %v1907, %v2041
    %v2057 = vmul.f32 %v1908, %v2043
    %v2058 = vmul.f32 %v1909, %v2045
    %v2059 = vmul.f32 %v1910, %v2047
    %v2060 = vmul.f32 %v1911, %v2049
    %v2061 = vmul.f32 %v1912, %v2051
    %v2062 = vmul.f32 %v1913, %v2053
    %v2063 = vmul.f32 %v1914, %v2055
    %v2064 = vrcp.pop %v2039
    %v2065 = vmul.f32 1.0, %v2064
    %v2066 = vmul.f32 %v2056, %v2065
    %v2067 = vmul.f32 %v2057, %v2065
    %v2068 = vmul.f32 %v2058, %v2065
    %v2069 = vmul.f32 %v2059, %v2065
    %v2070 = vmul.f32 %v2060, %v2065
    %v2071 = vmul.f32 %v2061, %v2065
    %v2072 = vmul.f32 %v2062, %v2065
    %v2073 = vmul.f32 %v2063, %v2065
    %v2074 = vpack.c.bf16 %v1197, %v1194
    %v2075 = vpack.c.bf16 %v1205, %v1202
    %v2076 = vpack.c.bf16 %v1213, %v1210
    %v2077 = vpack.c.bf16 %v1221, %v1218
    %v2079 = vsel %vm958, %v1135, 0
    %v2082 = vsel %vm958, %v1136, 0
    %v2085 = vsel %vm958, %v1137, 0
    %v2088 = vsel %vm958, %v1138, 0
    %v2091 = vsel %vm958, %v1139, 0
    %v2094 = vsel %vm958, %v1140, 0
    %v2097 = vsel %vm958, %v1141, 0
    %v2100 = vsel %vm958, %v1142, 0
    %2102 = vmatprep.subr.bf16.mxu0 0
    %2103 = vmatpush1.bf16.msra.mxu0 0
    %2104 = vmatprep.subr.bf16.mxu0 0
    %2105 = vmatpush1.bf16.msra.mxu0 0
    %2106 = vmatprep.subr.bf16.mxu0 0
    %2107 = vmatpush1.bf16.msra.mxu0 0
    %2108 = vmatprep.subr.bf16.mxu0 0
    %2109 = vmatpush1.bf16.msra.mxu0 0
    %2110 = vmatprep.subr.bf16.mxu0 0
    %2111 = vmatpush1.bf16.msra.mxu0 %v2077
    %2112 = vmatprep.subr.bf16.mxu0 0
    %2113 = vmatpush1.bf16.msra.mxu0 %v2076
    %2114 = vmatprep.subr.bf16.mxu0 0
    %2115 = vmatpush1.bf16.msra.mxu0 %v2075
    %2116 = vmatprep.subr.bf16.mxu0 0
    %2117 = vmatpush1.bf16.msra.mxu0 %v2074
    %2118 = vmatprep.subr.bf16.mxu0 0
    %2119 = vmatpush2.bf16.msra.mxu0 0
    %2120 = vmatprep.subr.bf16.mxu0 0
    %2121 = vmatpush2.bf16.msra.mxu0 0
    %2122 = vmatprep.subr.bf16.mxu0 0
    %2123 = vmatpush2.bf16.msra.mxu0 0
    %2124 = vmatprep.subr.bf16.mxu0 0
    %2125 = vmatpush2.bf16.msra.mxu0 0
    %2126 = vmatprep.subr.bf16.mxu0 0
    %2127 = vmatpush2.bf16.msra.mxu0 0
    %2128 = vmatprep.subr.bf16.mxu0 0
    %2129 = vmatpush2.bf16.msra.mxu0 0
    %2130 = vmatprep.subr.bf16.mxu0 0
    %2131 = vmatpush2.bf16.msra.mxu0 0
    %2132 = vmatprep.subr.bf16.mxu0 0
    %2133 = vmatpush2.bf16.msra.mxu0 0
    %2134 = vmatprep.mubr.bf16.mxu0 0
    %2135 = vmatmul.mubr.bf16.gmra.mxu0 %v2079
    %v2136 = vpop.f32.mrf.mxu0
    %v2137 = vadd.f32 0.0, %v2136
    %v2138 = vpop.f32.mrf.mxu0
    %v2139 = vpop.f32.mrf.mxu0
    %v2140 = vadd.f32 0.0, %v2139
    %v2141 = vpop.f32.mrf.mxu0
    %2142 = vmatprep.mubr.bf16.mxu0 0
    %2143 = vmatmul.mubr.bf16.gmra.mxu0 %v2082
    %v2144 = vpop.f32.mrf.mxu0
    %v2145 = vadd.f32 0.0, %v2144
    %v2146 = vpop.f32.mrf.mxu0
    %v2147 = vpop.f32.mrf.mxu0
    %v2148 = vadd.f32 0.0, %v2147
    %v2149 = vpop.f32.mrf.mxu0
    %2150 = vmatprep.mubr.bf16.mxu0 0
    %2151 = vmatmul.mubr.bf16.gmra.mxu0 %v2085
    %v2152 = vpop.f32.mrf.mxu0
    %v2153 = vadd.f32 0.0, %v2152
    %v2154 = vpop.f32.mrf.mxu0
    %v2155 = vpop.f32.mrf.mxu0
    %v2156 = vadd.f32 0.0, %v2155
    %v2157 = vpop.f32.mrf.mxu0
    %2158 = vmatprep.mubr.bf16.mxu0 0
    %2159 = vmatmul.mubr.bf16.gmra.mxu0 %v2088
    %v2160 = vpop.f32.mrf.mxu0
    %v2161 = vadd.f32 0.0, %v2160
    %v2162 = vpop.f32.mrf.mxu0
    %v2163 = vpop.f32.mrf.mxu0
    %v2164 = vadd.f32 0.0, %v2163
    %v2165 = vpop.f32.mrf.mxu0
    %2166 = vmatprep.mubr.bf16.mxu0 0
    %2167 = vmatmul.mubr.bf16.gmra.mxu0 %v2091
    %v2168 = vpop.f32.mrf.mxu0
    %v2169 = vadd.f32 0.0, %v2168
    %v2170 = vpop.f32.mrf.mxu0
    %v2171 = vpop.f32.mrf.mxu0
    %v2172 = vadd.f32 0.0, %v2171
    %v2173 = vpop.f32.mrf.mxu0
    %2174 = vmatprep.mubr.bf16.mxu0 0
    %2175 = vmatmul.mubr.bf16.gmra.mxu0 %v2094
    %v2176 = vpop.f32.mrf.mxu0
    %v2177 = vadd.f32 0.0, %v2176
    %v2178 = vpop.f32.mrf.mxu0
    %v2179 = vpop.f32.mrf.mxu0
    %v2180 = vadd.f32 0.0, %v2179
    %v2181 = vpop.f32.mrf.mxu0
    %2182 = vmatprep.mubr.bf16.mxu0 0
    %2183 = vmatmul.mubr.bf16.gmra.mxu0 %v2097
    %v2184 = vpop.f32.mrf.mxu0
    %v2185 = vadd.f32 0.0, %v2184
    %v2186 = vpop.f32.mrf.mxu0
    %v2187 = vpop.f32.mrf.mxu0
    %v2188 = vadd.f32 0.0, %v2187
    %v2189 = vpop.f32.mrf.mxu0
    %2190 = vmatprep.mubr.bf16.mxu0 0
    %2191 = vmatmul.mubr.bf16.gmra.mxu0 %v2100
    %v2192 = vpop.f32.mrf.mxu0
    %v2193 = vadd.f32 0.0, %v2192
    %v2194 = vpop.f32.mrf.mxu0
    %v2195 = vpop.f32.mrf.mxu0
    %v2196 = vadd.f32 0.0, %v2195
    %v2197 = vpop.f32.mrf.mxu0
    %2198 = vdwg.mxu0
    %v2199 = vpack.c.bf16 %v2067, %v2066
    %v2200 = vpack.c.bf16 %v2069, %v2068
    %v2201 = vpack.c.bf16 %v2071, %v2070
    %v2202 = vpack.c.bf16 %v2073, %v2072
    %2203 = vmatprep.subr.bf16.mxu0 0
    %2204 = vmatpush1.bf16.msra.mxu0 0
    %2205 = vmatprep.subr.bf16.mxu0 0
    %2206 = vmatpush1.bf16.msra.mxu0 0
    %2207 = vmatprep.subr.bf16.mxu0 0
    %2208 = vmatpush1.bf16.msra.mxu0 0
    %2209 = vmatprep.subr.bf16.mxu0 0
    %2210 = vmatpush1.bf16.msra.mxu0 0
    %2211 = vmatprep.subr.bf16.mxu0 0
    %2212 = vmatpush1.bf16.msra.mxu0 %v2202
    %2213 = vmatprep.subr.bf16.mxu0 0
    %2214 = vmatpush1.bf16.msra.mxu0 %v2201
    %2215 = vmatprep.subr.bf16.mxu0 0
    %2216 = vmatpush1.bf16.msra.mxu0 %v2200
    %2217 = vmatprep.subr.bf16.mxu0 0
    %2218 = vmatpush1.bf16.msra.mxu0 %v2199
    %2219 = vmatprep.subr.bf16.mxu0 0
    %2220 = vmatpush2.bf16.msra.mxu0 0
    %2221 = vmatprep.subr.bf16.mxu0 0
    %2222 = vmatpush2.bf16.msra.mxu0 0
    %2223 = vmatprep.subr.bf16.mxu0 0
    %2224 = vmatpush2.bf16.msra.mxu0 0
    %2225 = vmatprep.subr.bf16.mxu0 0
    %2226 = vmatpush2.bf16.msra.mxu0 0
    %2227 = vmatprep.subr.bf16.mxu0 0
    %2228 = vmatpush2.bf16.msra.mxu0 0
    %2229 = vmatprep.subr.bf16.mxu0 0
    %2230 = vmatpush2.bf16.msra.mxu0 0
    %2231 = vmatprep.subr.bf16.mxu0 0
    %2232 = vmatpush2.bf16.msra.mxu0 0
    %2233 = vmatprep.subr.bf16.mxu0 0
    %2234 = vmatpush2.bf16.msra.mxu0 0
    %2235 = vmatprep.mubr.bf16.mxu0 0
    %2236 = vmatmul.mubr.bf16.gmra.mxu0 %v2079
    %v2237 = vpop.f32.mrf.mxu0
    %v2238 = vadd.f32 0.0, %v2237
    %v2239 = vpop.f32.mrf.mxu0
    %v2240 = vpop.f32.mrf.mxu0
    %v2241 = vadd.f32 0.0, %v2240
    %v2242 = vpop.f32.mrf.mxu0
    %2243 = vmatprep.mubr.bf16.mxu0 0
    %2244 = vmatmul.mubr.bf16.gmra.mxu0 %v2082
    %v2245 = vpop.f32.mrf.mxu0
    %v2246 = vadd.f32 0.0, %v2245
    %v2247 = vpop.f32.mrf.mxu0
    %v2248 = vpop.f32.mrf.mxu0
    %v2249 = vadd.f32 0.0, %v2248
    %v2250 = vpop.f32.mrf.mxu0
    %2251 = vmatprep.mubr.bf16.mxu0 0
    %2252 = vmatmul.mubr.bf16.gmra.mxu0 %v2085
    %v2253 = vpop.f32.mrf.mxu0
    %v2254 = vadd.f32 0.0, %v2253
    %v2255 = vpop.f32.mrf.mxu0
    %v2256 = vpop.f32.mrf.mxu0
    %v2257 = vadd.f32 0.0, %v2256
    %v2258 = vpop.f32.mrf.mxu0
    %2259 = vmatprep.mubr.bf16.mxu0 0
    %2260 = vmatmul.mubr.bf16.gmra.mxu0 %v2088
    %v2261 = vpop.f32.mrf.mxu0
    %v2262 = vadd.f32 0.0, %v2261
    %v2263 = vpop.f32.mrf.mxu0
    %v2264 = vpop.f32.mrf.mxu0
    %v2265 = vadd.f32 0.0, %v2264
    %v2266 = vpop.f32.mrf.mxu0
    %2267 = vmatprep.mubr.bf16.mxu0 0
    %2268 = vmatmul.mubr.bf16.gmra.mxu0 %v2091
    %v2269 = vpop.f32.mrf.mxu0
    %v2270 = vadd.f32 0.0, %v2269
    %v2271 = vpop.f32.mrf.mxu0
    %v2272 = vpop.f32.mrf.mxu0
    %v2273 = vadd.f32 0.0, %v2272
    %v2274 = vpop.f32.mrf.mxu0
    %2275 = vmatprep.mubr.bf16.mxu0 0
    %2276 = vmatmul.mubr.bf16.gmra.mxu0 %v2094
    %v2277 = vpop.f32.mrf.mxu0
    %v2278 = vadd.f32 0.0, %v2277
    %v2279 = vpop.f32.mrf.mxu0
    %v2280 = vpop.f32.mrf.mxu0
    %v2281 = vadd.f32 0.0, %v2280
    %v2282 = vpop.f32.mrf.mxu0
    %2283 = vmatprep.mubr.bf16.mxu0 0
    %2284 = vmatmul.mubr.bf16.gmra.mxu0 %v2097
    %v2285 = vpop.f32.mrf.mxu0
    %v2286 = vadd.f32 0.0, %v2285
    %v2287 = vpop.f32.mrf.mxu0
    %v2288 = vpop.f32.mrf.mxu0
    %v2289 = vadd.f32 0.0, %v2288
    %v2290 = vpop.f32.mrf.mxu0
    %2291 = vmatprep.mubr.bf16.mxu0 0
    %2292 = vmatmul.mubr.bf16.gmra.mxu0 %v2100
    %v2293 = vpop.f32.mrf.mxu0
    %v2294 = vadd.f32 0.0, %v2293
    %v2295 = vpop.f32.mrf.mxu0
    %v2296 = vpop.f32.mrf.mxu0
    %v2297 = vadd.f32 0.0, %v2296
    %v2298 = vpop.f32.mrf.mxu0
    %2299 = vdwg.mxu0
    %v2300 = vpack.c.bf16 %v2241, %v2238
    %v2301 = vpack.c.bf16 %v2249, %v2246
    %v2302 = vpack.c.bf16 %v2257, %v2254
    %v2303 = vpack.c.bf16 %v2265, %v2262
    %v2304 = vpack.c.bf16 %v2273, %v2270
    %v2305 = vpack.c.bf16 %v2281, %v2278
    %v2306 = vpack.c.bf16 %v2289, %v2286
    %v2307 = vpack.c.bf16 %v2297, %v2294
    %v2309 = vsel %vm958, %v2300, 0
    %v2312 = vsel %vm958, %v2301, 0
    %v2315 = vsel %vm958, %v2302, 0
    %v2318 = vsel %vm958, %v2303, 0
    %v2321 = vsel %vm958, %v2304, 0
    %v2324 = vsel %vm958, %v2305, 0
    %v2327 = vsel %vm958, %v2306, 0
    %v2330 = vsel %vm958, %v2307, 0
    %2332 = vmatprep.subr.bf16.mxu0 0
    %2333 = vmatpush1.bf16.xpose.msra.mxu0 %v2100
    %2334 = vmatprep.subr.bf16.mxu0 0
    %2335 = vmatpush1.bf16.xpose.msra.mxu0 %v2097
    %2336 = vmatprep.subr.bf16.mxu0 0
    %2337 = vmatpush1.bf16.xpose.msra.mxu0 %v2094
    %2338 = vmatprep.subr.bf16.mxu0 0
    %2339 = vmatpush1.bf16.xpose.msra.mxu0 %v2091
    %2340 = vmatprep.subr.bf16.mxu0 0
    %2341 = vmatpush1.bf16.xpose.msra.mxu0 %v2088
    %2342 = vmatprep.subr.bf16.mxu0 0
    %2343 = vmatpush1.bf16.xpose.msra.mxu0 %v2085
    %2344 = vmatprep.subr.bf16.mxu0 0
    %2345 = vmatpush1.bf16.xpose.msra.mxu0 %v2082
    %2346 = vmatprep.subr.bf16.mxu0 0
    %2347 = vmatpush1.bf16.xpose.msra.mxu0 %v2079
    %2348 = vmatprep.subr.bf16.mxu0 0
    %2349 = vmatpush2.bf16.xpose.msra.mxu0 0
    %2350 = vmatprep.subr.bf16.mxu0 0
    %2351 = vmatpush2.bf16.xpose.msra.mxu0 0
    %2352 = vmatprep.subr.bf16.mxu0 0
    %2353 = vmatpush2.bf16.xpose.msra.mxu0 0
    %2354 = vmatprep.subr.bf16.mxu0 0
    %2355 = vmatpush2.bf16.xpose.msra.mxu0 0
    %2356 = vmatprep.subr.bf16.mxu0 0
    %2357 = vmatpush2.bf16.xpose.msra.mxu0 0
    %2358 = vmatprep.subr.bf16.mxu0 0
    %2359 = vmatpush2.bf16.xpose.msra.mxu0 0
    %2360 = vmatprep.subr.bf16.mxu0 0
    %2361 = vmatpush2.bf16.xpose.msra.mxu0 0
    %2362 = vmatprep.subr.bf16.mxu0 0
    %2363 = vmatpush2.bf16.xpose.msra.mxu0 0
    %2364 = vmatprep.mubr.bf16.mxu0 0
    %2365 = vmatmul.mubr.bf16.gmra.mxu0 %v2309
    %v2366 = vpop.f32.mrf.mxu0
    %v2367 = vadd.f32 0.0, %v2366
    %v2368 = vpop.f32.mrf.mxu0
    %v2369 = vpop.f32.mrf.mxu0
    %v2370 = vadd.f32 0.0, %v2369
    %v2371 = vpop.f32.mrf.mxu0
    %2372 = vmatprep.mubr.bf16.mxu0 0
    %2373 = vmatmul.mubr.bf16.gmra.mxu0 %v2312
    %v2374 = vpop.f32.mrf.mxu0
    %v2375 = vadd.f32 0.0, %v2374
    %v2376 = vpop.f32.mrf.mxu0
    %v2377 = vpop.f32.mrf.mxu0
    %v2378 = vadd.f32 0.0, %v2377
    %v2379 = vpop.f32.mrf.mxu0
    %2380 = vmatprep.mubr.bf16.mxu0 0
    %2381 = vmatmul.mubr.bf16.gmra.mxu0 %v2315
    %v2382 = vpop.f32.mrf.mxu0
    %v2383 = vadd.f32 0.0, %v2382
    %v2384 = vpop.f32.mrf.mxu0
    %v2385 = vpop.f32.mrf.mxu0
    %v2386 = vadd.f32 0.0, %v2385
    %v2387 = vpop.f32.mrf.mxu0
    %2388 = vmatprep.mubr.bf16.mxu0 0
    %2389 = vmatmul.mubr.bf16.gmra.mxu0 %v2318
    %v2390 = vpop.f32.mrf.mxu0
    %v2391 = vadd.f32 0.0, %v2390
    %v2392 = vpop.f32.mrf.mxu0
    %v2393 = vpop.f32.mrf.mxu0
    %v2394 = vadd.f32 0.0, %v2393
    %v2395 = vpop.f32.mrf.mxu0
    %2396 = vmatprep.mubr.bf16.mxu0 0
    %2397 = vmatmul.mubr.bf16.gmra.mxu0 %v2321
    %v2398 = vpop.f32.mrf.mxu0
    %v2399 = vadd.f32 0.0, %v2398
    %v2400 = vpop.f32.mrf.mxu0
    %v2401 = vpop.f32.mrf.mxu0
    %v2402 = vadd.f32 0.0, %v2401
    %v2403 = vpop.f32.mrf.mxu0
    %2404 = vmatprep.mubr.bf16.mxu0 0
    %2405 = vmatmul.mubr.bf16.gmra.mxu0 %v2324
    %v2406 = vpop.f32.mrf.mxu0
    %v2407 = vadd.f32 0.0, %v2406
    %v2408 = vpop.f32.mrf.mxu0
    %v2409 = vpop.f32.mrf.mxu0
    %v2410 = vadd.f32 0.0, %v2409
    %v2411 = vpop.f32.mrf.mxu0
    %2412 = vmatprep.mubr.bf16.mxu0 0
    %2413 = vmatmul.mubr.bf16.gmra.mxu0 %v2327
    %v2414 = vpop.f32.mrf.mxu0
    %v2415 = vadd.f32 0.0, %v2414
    %v2416 = vpop.f32.mrf.mxu0
    %v2417 = vpop.f32.mrf.mxu0
    %v2418 = vadd.f32 0.0, %v2417
    %v2419 = vpop.f32.mrf.mxu0
    %2420 = vmatprep.mubr.bf16.mxu0 0
    %2421 = vmatmul.mubr.bf16.gmra.mxu0 %v2330
    %v2422 = vpop.f32.mrf.mxu0
    %v2423 = vadd.f32 0.0, %v2422
    %v2424 = vpop.f32.mrf.mxu0
    %v2425 = vpop.f32.mrf.mxu0
    %v2426 = vadd.f32 0.0, %v2425
    %v2427 = vpop.f32.mrf.mxu0
    %2428 = vdwg.mxu0
    %2429 = vst [vmem:[#allocation2] sm:$0xff] %v2367
    %2430 = vst [vmem:[#allocation2 + $0x8] sm:$0xff] %v2370
    %2431 = vst [vmem:[#allocation2 + $0x10] sm:$0xff] %v2375
    %2432 = vst [vmem:[#allocation2 + $0x18] sm:$0xff] %v2378
    %2433 = vst [vmem:[#allocation2 + $0x20] sm:$0xff] %v2383
    %2434 = vst [vmem:[#allocation2 + $0x28] sm:$0xff] %v2386
    %2435 = vst [vmem:[#allocation2 + $0x30] sm:$0xff] %v2391
    %2436 = vst [vmem:[#allocation2 + $0x38] sm:$0xff] %v2394
    %2437 = vst [vmem:[#allocation2 + $0x40] sm:$0xff] %v2399
    %2438 = vst [vmem:[#allocation2 + $0x48] sm:$0xff] %v2402
    %2439 = vst [vmem:[#allocation2 + $0x50] sm:$0xff] %v2407
    %2440 = vst [vmem:[#allocation2 + $0x58] sm:$0xff] %v2410
    %2441 = vst [vmem:[#allocation2 + $0x60] sm:$0xff] %v2415
    %2442 = vst [vmem:[#allocation2 + $0x68] sm:$0xff] %v2418
    %2443 = vst [vmem:[#allocation2 + $0x70] sm:$0xff] %v2423
    %2444 = vst [vmem:[#allocation2 + $0x78] sm:$0xff] %v2426
    %v2445 = vld [vmem:[%s8] sm:$0xff]
    %v2446 = vld [vmem:[%s8 + $0x8] sm:$0xff]
    %v2447 = vld [vmem:[%s9] sm:$0x1]
    %v2448 = vmul.f32 %v150, %v2137
    %v2449 = vmul.f32 %v151, %v2140
    %v2450 = vmul.f32 %v152, %v2145
    %v2451 = vmul.f32 %v153, %v2148
    %v2452 = vmul.f32 %v154, %v2153
    %v2453 = vmul.f32 %v155, %v2156
    %v2454 = vmul.f32 %v156, %v2161
    %v2455 = vmul.f32 %v157, %v2164
    %v2456 = vmul.f32 %v158, %v2169
    %v2457 = vmul.f32 %v159, %v2172
    %v2458 = vmul.f32 %v160, %v2177
    %v2459 = vmul.f32 %v161, %v2180
    %v2460 = vmul.f32 %v162, %v2185
    %v2461 = vmul.f32 %v163, %v2188
    %v2462 = vmul.f32 %v164, %v2193
    %v2463 = vmul.f32 %v165, %v2196
    %v2464 = vpack.c.bf16 %v2449, %v2448
    %v2465 = vpack.c.bf16 %v2451, %v2450
    %v2466 = vpack.c.bf16 %v2453, %v2452
    %v2467 = vpack.c.bf16 %v2455, %v2454
    %v2468 = vpack.c.bf16 %v2457, %v2456
    %v2469 = vpack.c.bf16 %v2459, %v2458
    %v2470 = vpack.c.bf16 %v2461, %v2460
    %v2471 = vpack.c.bf16 %v2463, %v2462
    %v2472 = vpack.c.bf16 %v2446, %v2445
    %v2474 = vsel %vm538, %v2464, 0
    %v2477 = vsel %vm538, %v2465, 0
    %v2480 = vsel %vm538, %v2466, 0
    %v2483 = vsel %vm538, %v2467, 0
    %v2486 = vsel %vm538, %v2468, 0
    %v2489 = vsel %vm538, %v2469, 0
    %v2492 = vsel %vm538, %v2470, 0
    %v2495 = vsel %vm538, %v2471, 0
    %2497 = vmatprep.subr.bf16.mxu0 0
    %2498 = vmatpush1.bf16.msra.mxu0 0
    %2499 = vmatprep.subr.bf16.mxu0 0
    %2500 = vmatpush1.bf16.msra.mxu0 0
    %2501 = vmatprep.subr.bf16.mxu0 0
    %2502 = vmatpush1.bf16.msra.mxu0 0
    %2503 = vmatprep.subr.bf16.mxu0 0
    %2504 = vmatpush1.bf16.msra.mxu0 0
    %2505 = vmatprep.subr.bf16.mxu0 0
    %2506 = vmatpush1.bf16.msra.mxu0 0
    %2507 = vmatprep.subr.bf16.mxu0 0
    %2508 = vmatpush1.bf16.msra.mxu0 0
    %2509 = vmatprep.subr.bf16.mxu0 0
    %2510 = vmatpush1.bf16.msra.mxu0 0
    %2511 = vmatprep.subr.bf16.mxu0 0
    %2512 = vmatpush1.bf16.msra.mxu0 %v2472
    %2513 = vmatprep.subr.bf16.mxu0 0
    %2514 = vmatpush2.bf16.msra.mxu0 0
    %2515 = vmatprep.subr.bf16.mxu0 0
    %2516 = vmatpush2.bf16.msra.mxu0 0
    %2517 = vmatprep.subr.bf16.mxu0 0
    %2518 = vmatpush2.bf16.msra.mxu0 0
    %2519 = vmatprep.subr.bf16.mxu0 0
    %2520 = vmatpush2.bf16.msra.mxu0 0
    %2521 = vmatprep.subr.bf16.mxu0 0
    %2522 = vmatpush2.bf16.msra.mxu0 0
    %2523 = vmatprep.subr.bf16.mxu0 0
    %2524 = vmatpush2.bf16.msra.mxu0 0
    %2525 = vmatprep.subr.bf16.mxu0 0
    %2526 = vmatpush2.bf16.msra.mxu0 0
    %2527 = vmatprep.subr.bf16.mxu0 0
    %2528 = vmatpush2.bf16.msra.mxu0 0
    %2529 = vmatprep.mubr.bf16.mxu0 0
    %2530 = vmatmul.mubr.bf16.gmra.mxu0 %v2474
    %v2531 = vpop.f32.mrf.mxu0
    %v2532 = vadd.f32 0.0, %v2531
    %v2533 = vpop.f32.mrf.mxu0
    %v2534 = vpop.f32.mrf.mxu0
    %v2535 = vadd.f32 0.0, %v2534
    %v2536 = vpop.f32.mrf.mxu0
    %2537 = vmatprep.mubr.bf16.mxu0 0
    %2538 = vmatmul.mubr.bf16.gmra.mxu0 %v2477
    %v2539 = vpop.f32.mrf.mxu0
    %v2540 = vadd.f32 0.0, %v2539
    %v2541 = vpop.f32.mrf.mxu0
    %v2542 = vpop.f32.mrf.mxu0
    %v2543 = vadd.f32 0.0, %v2542
    %v2544 = vpop.f32.mrf.mxu0
    %2545 = vmatprep.mubr.bf16.mxu0 0
    %2546 = vmatmul.mubr.bf16.gmra.mxu0 %v2480
    %v2547 = vpop.f32.mrf.mxu0
    %v2548 = vadd.f32 0.0, %v2547
    %v2549 = vpop.f32.mrf.mxu0
    %v2550 = vpop.f32.mrf.mxu0
    %v2551 = vadd.f32 0.0, %v2550
    %v2552 = vpop.f32.mrf.mxu0
    %2553 = vmatprep.mubr.bf16.mxu0 0
    %2554 = vmatmul.mubr.bf16.gmra.mxu0 %v2483
    %v2555 = vpop.f32.mrf.mxu0
    %v2556 = vadd.f32 0.0, %v2555
    %v2557 = vpop.f32.mrf.mxu0
    %v2558 = vpop.f32.mrf.mxu0
    %v2559 = vadd.f32 0.0, %v2558
    %v2560 = vpop.f32.mrf.mxu0
    %2561 = vmatprep.mubr.bf16.mxu0 0
    %2562 = vmatmul.mubr.bf16.gmra.mxu0 %v2486
    %v2563 = vpop.f32.mrf.mxu0
    %v2564 = vadd.f32 0.0, %v2563
    %v2565 = vpop.f32.mrf.mxu0
    %v2566 = vpop.f32.mrf.mxu0
    %v2567 = vadd.f32 0.0, %v2566
    %v2568 = vpop.f32.mrf.mxu0
    %2569 = vmatprep.mubr.bf16.mxu0 0
    %2570 = vmatmul.mubr.bf16.gmra.mxu0 %v2489
    %v2571 = vpop.f32.mrf.mxu0
    %v2572 = vadd.f32 0.0, %v2571
    %v2573 = vpop.f32.mrf.mxu0
    %v2574 = vpop.f32.mrf.mxu0
    %v2575 = vadd.f32 0.0, %v2574
    %v2576 = vpop.f32.mrf.mxu0
    %2577 = vmatprep.mubr.bf16.mxu0 0
    %2578 = vmatmul.mubr.bf16.gmra.mxu0 %v2492
    %v2579 = vpop.f32.mrf.mxu0
    %v2580 = vadd.f32 0.0, %v2579
    %v2581 = vpop.f32.mrf.mxu0
    %v2582 = vpop.f32.mrf.mxu0
    %v2583 = vadd.f32 0.0, %v2582
    %v2584 = vpop.f32.mrf.mxu0
    %2585 = vmatprep.mubr.bf16.mxu0 0
    %2586 = vmatmul.mubr.bf16.gmra.mxu0 %v2495
    %v2587 = vpop.f32.mrf.mxu0
    %v2588 = vadd.f32 0.0, %v2587
    %v2589 = vpop.f32.mrf.mxu0
    %v2590 = vpop.f32.mrf.mxu0
    %v2591 = vadd.f32 0.0, %v2590
    %v2592 = vpop.f32.mrf.mxu0
    %2593 = vdwg.mxu0
    %v2594 = vpack.c.bf16 %v2535, %v2532
    %v2595 = vpack.c.bf16 %v2543, %v2540
    %v2596 = vpack.c.bf16 %v2551, %v2548
    %v2597 = vpack.c.bf16 %v2559, %v2556
    %v2598 = vpack.c.bf16 %v2567, %v2564
    %v2599 = vpack.c.bf16 %v2575, %v2572
    %v2600 = vpack.c.bf16 %v2583, %v2580
    %v2601 = vpack.c.bf16 %v2591, %v2588
    %2602 = vmatprep.subr.bf16.mxu0 0
    %2603 = vmatpush1.bf16.msra.mxu0 %v2601
    %2604 = vmatprep.subr.bf16.mxu0 0
    %2605 = vmatpush1.bf16.msra.mxu0 %v2600
    %2606 = vmatprep.subr.bf16.mxu0 0
    %2607 = vmatpush1.bf16.msra.mxu0 %v2599
    %2608 = vmatprep.subr.bf16.mxu0 0
    %2609 = vmatpush1.bf16.msra.mxu0 %v2598
    %2610 = vmatprep.subr.bf16.mxu0 0
    %2611 = vmatpush1.bf16.msra.mxu0 %v2597
    %2612 = vmatprep.subr.bf16.mxu0 0
    %2613 = vmatpush1.bf16.msra.mxu0 %v2596
    %2614 = vmatprep.subr.bf16.mxu0 0
    %2615 = vmatpush1.bf16.msra.mxu0 %v2595
    %2616 = vmatprep.subr.bf16.mxu0 0
    %2617 = vmatpush1.bf16.msra.mxu0 %v2594
    %2618 = vmatprep.subr.bf16.mxu0 0
    %2619 = vmatpush2.bf16.msra.mxu0 0
    %2620 = vmatprep.subr.bf16.mxu0 0
    %2621 = vmatpush2.bf16.msra.mxu0 0
    %2622 = vmatprep.subr.bf16.mxu0 0
    %2623 = vmatpush2.bf16.msra.mxu0 0
    %2624 = vmatprep.subr.bf16.mxu0 0
    %2625 = vmatpush2.bf16.msra.mxu0 0
    %2626 = vmatprep.subr.bf16.mxu0 0
    %2627 = vmatpush2.bf16.msra.mxu0 0
    %2628 = vmatprep.subr.bf16.mxu0 0
    %2629 = vmatpush2.bf16.msra.mxu0 0
    %2630 = vmatprep.subr.bf16.mxu0 0
    %2631 = vmatpush2.bf16.msra.mxu0 0
    %2632 = vmatprep.subr.bf16.mxu0 0
    %2633 = vmatpush2.bf16.msra.mxu0 0
    %2634 = vmatprep.mubr.bf16.mxu0 0
    %2635 = vmatmul.mubr.bf16.gmra.mxu0 %v224
    %v2636 = vpop.f32.mrf.mxu0
    %v2637 = vadd.f32 %v2532, %v2636
    %v2638 = vpop.f32.mrf.mxu0
    %v2639 = vpop.f32.mrf.mxu0
    %v2640 = vadd.f32 %v2535, %v2639
    %v2641 = vpop.f32.mrf.mxu0
    %2642 = vmatprep.mubr.bf16.mxu0 0
    %2643 = vmatmul.mubr.bf16.gmra.mxu0 %v225
    %v2644 = vpop.f32.mrf.mxu0
    %v2645 = vadd.f32 %v2540, %v2644
    %v2646 = vpop.f32.mrf.mxu0
    %v2647 = vpop.f32.mrf.mxu0
    %v2648 = vadd.f32 %v2543, %v2647
    %v2649 = vpop.f32.mrf.mxu0
    %2650 = vmatprep.mubr.bf16.mxu0 0
    %2651 = vmatmul.mubr.bf16.gmra.mxu0 %v226
    %v2652 = vpop.f32.mrf.mxu0
    %v2653 = vadd.f32 %v2548, %v2652
    %v2654 = vpop.f32.mrf.mxu0
    %v2655 = vpop.f32.mrf.mxu0
    %v2656 = vadd.f32 %v2551, %v2655
    %v2657 = vpop.f32.mrf.mxu0
    %2658 = vmatprep.mubr.bf16.mxu0 0
    %2659 = vmatmul.mubr.bf16.gmra.mxu0 %v227
    %v2660 = vpop.f32.mrf.mxu0
    %v2661 = vadd.f32 %v2556, %v2660
    %v2662 = vpop.f32.mrf.mxu0
    %v2663 = vpop.f32.mrf.mxu0
    %v2664 = vadd.f32 %v2559, %v2663
    %v2665 = vpop.f32.mrf.mxu0
    %2666 = vmatprep.mubr.bf16.mxu0 0
    %2667 = vmatmul.mubr.bf16.gmra.mxu0 %v228
    %v2668 = vpop.f32.mrf.mxu0
    %v2669 = vadd.f32 %v2564, %v2668
    %v2670 = vpop.f32.mrf.mxu0
    %v2671 = vpop.f32.mrf.mxu0
    %v2672 = vadd.f32 %v2567, %v2671
    %v2673 = vpop.f32.mrf.mxu0
    %2674 = vmatprep.mubr.bf16.mxu0 0
    %2675 = vmatmul.mubr.bf16.gmra.mxu0 %v229
    %v2676 = vpop.f32.mrf.mxu0
    %v2677 = vadd.f32 %v2572, %v2676
    %v2678 = vpop.f32.mrf.mxu0
    %v2679 = vpop.f32.mrf.mxu0
    %v2680 = vadd.f32 %v2575, %v2679
    %v2681 = vpop.f32.mrf.mxu0
    %2682 = vmatprep.mubr.bf16.mxu0 0
    %2683 = vmatmul.mubr.bf16.gmra.mxu0 %v230
    %v2684 = vpop.f32.mrf.mxu0
    %v2685 = vadd.f32 %v2580, %v2684
    %v2686 = vpop.f32.mrf.mxu0
    %v2687 = vpop.f32.mrf.mxu0
    %v2688 = vadd.f32 %v2583, %v2687
    %v2689 = vpop.f32.mrf.mxu0
    %2690 = vmatprep.mubr.bf16.mxu0 0
    %2691 = vmatmul.mubr.bf16.gmra.mxu0 %v231
    %v2692 = vpop.f32.mrf.mxu0
    %v2693 = vadd.f32 %v2588, %v2692
    %v2694 = vpop.f32.mrf.mxu0
    %v2695 = vpop.f32.mrf.mxu0
    %v2696 = vadd.f32 %v2591, %v2695
    %v2697 = vpop.f32.mrf.mxu0
    %2698 = vdwg.mxu0
    %v2699 = vmul.f32 %v150, %v2637
    %v2700 = vmul.f32 %v151, %v2640
    %v2701 = vmul.f32 %v152, %v2645
    %v2702 = vmul.f32 %v153, %v2648
    %v2703 = vmul.f32 %v154, %v2653
    %v2704 = vmul.f32 %v155, %v2656
    %v2705 = vmul.f32 %v156, %v2661
    %v2706 = vmul.f32 %v157, %v2664
    %v2707 = vmul.f32 %v158, %v2669
    %v2708 = vmul.f32 %v159, %v2672
    %v2709 = vmul.f32 %v160, %v2677
    %v2710 = vmul.f32 %v161, %v2680
    %v2711 = vmul.f32 %v162, %v2685
    %v2712 = vmul.f32 %v163, %v2688
    %v2713 = vmul.f32 %v164, %v2693
    %v2714 = vmul.f32 %v165, %v2696
    %v2716 = vlaneseq
    %v2717 = vshrl.u32 %v2716, 7
    %v2718 = vsub.s32 0, %v2717
    %v2719 = vrot.slane %v2447, %v2718
    %v2721 = vadd.f32 %v2699, %v2719
    %v2722 = vadd.f32 %v2700, %v2719
    %v2723 = vadd.f32 %v2701, %v2719
    %v2724 = vadd.f32 %v2702, %v2719
    %v2725 = vadd.f32 %v2703, %v2719
    %v2726 = vadd.f32 %v2704, %v2719
    %v2727 = vadd.f32 %v2705, %v2719
    %v2728 = vadd.f32 %v2706, %v2719
    %v2729 = vadd.f32 %v2707, %v2719
    %v2730 = vadd.f32 %v2708, %v2719
    %v2731 = vadd.f32 %v2709, %v2719
    %v2732 = vadd.f32 %v2710, %v2719
    %v2733 = vadd.f32 %v2711, %v2719
    %v2734 = vadd.f32 %v2712, %v2719
    %v2735 = vadd.f32 %v2713, %v2719
    %v2736 = vadd.f32 %v2714, %v2719
    %v2737 = vtanh.pop %v2721
    %v2738 = vtanh.pop %v2722
    %v2739 = vtanh.pop %v2723
    %v2740 = vtanh.pop %v2724
    %v2741 = vtanh.pop %v2725
    %v2742 = vtanh.pop %v2726
    %v2743 = vtanh.pop %v2727
    %v2744 = vtanh.pop %v2728
    %v2745 = vtanh.pop %v2729
    %v2746 = vtanh.pop %v2730
    %v2747 = vtanh.pop %v2731
    %v2748 = vtanh.pop %v2732
    %v2749 = vtanh.pop %v2733
    %v2750 = vtanh.pop %v2734
    %v2751 = vtanh.pop %v2735
    %v2752 = vtanh.pop %v2736
    %v2753 = vld [vmem:[%s10] sm:$0xff]
    %v2754 = vld [vmem:[%s10 + $0x8] sm:$0xff]
    %v2755 = vld [vmem:[%s11] sm:$0x1]
    %v2756 = vmul.f32 %v150, %v2737
    %v2757 = vmul.f32 %v151, %v2738
    %v2758 = vmul.f32 %v152, %v2739
    %v2759 = vmul.f32 %v153, %v2740
    %v2760 = vmul.f32 %v154, %v2741
    %v2761 = vmul.f32 %v155, %v2742
    %v2762 = vmul.f32 %v156, %v2743
    %v2763 = vmul.f32 %v157, %v2744
    %v2764 = vmul.f32 %v158, %v2745
    %v2765 = vmul.f32 %v159, %v2746
    %v2766 = vmul.f32 %v160, %v2747
    %v2767 = vmul.f32 %v161, %v2748
    %v2768 = vmul.f32 %v162, %v2749
    %v2769 = vmul.f32 %v163, %v2750
    %v2770 = vmul.f32 %v164, %v2751
    %v2771 = vmul.f32 %v165, %v2752
    %v2772 = vpack.c.bf16 %v2757, %v2756
    %v2773 = vpack.c.bf16 %v2759, %v2758
    %v2774 = vpack.c.bf16 %v2761, %v2760
    %v2775 = vpack.c.bf16 %v2763, %v2762
    %v2776 = vpack.c.bf16 %v2765, %v2764
    %v2777 = vpack.c.bf16 %v2767, %v2766
    %v2778 = vpack.c.bf16 %v2769, %v2768
    %v2779 = vpack.c.bf16 %v2771, %v2770
    %v2780 = vpack.c.bf16 %v2754, %v2753
    %v2782 = vsel %vm538, %v2772, 0
    %v2785 = vsel %vm538, %v2773, 0
    %v2788 = vsel %vm538, %v2774, 0
    %v2791 = vsel %vm538, %v2775, 0
    %v2794 = vsel %vm538, %v2776, 0
    %v2797 = vsel %vm538, %v2777, 0
    %v2800 = vsel %vm538, %v2778, 0
    %v2803 = vsel %vm538, %v2779, 0
    %2805 = vmatprep.subr.bf16.mxu0 0
    %2806 = vmatpush1.bf16.msra.mxu0 0
    %2807 = vmatprep.subr.bf16.mxu0 0
    %2808 = vmatpush1.bf16.msra.mxu0 0
    %2809 = vmatprep.subr.bf16.mxu0 0
    %2810 = vmatpush1.bf16.msra.mxu0 0
    %2811 = vmatprep.subr.bf16.mxu0 0
    %2812 = vmatpush1.bf16.msra.mxu0 0
    %2813 = vmatprep.subr.bf16.mxu0 0
    %2814 = vmatpush1.bf16.msra.mxu0 0
    %2815 = vmatprep.subr.bf16.mxu0 0
    %2816 = vmatpush1.bf16.msra.mxu0 0
    %2817 = vmatprep.subr.bf16.mxu0 0
    %2818 = vmatpush1.bf16.msra.mxu0 0
    %2819 = vmatprep.subr.bf16.mxu0 0
    %2820 = vmatpush1.bf16.msra.mxu0 %v2780
    %2821 = vmatprep.subr.bf16.mxu0 0
    %2822 = vmatpush2.bf16.msra.mxu0 0
    %2823 = vmatprep.subr.bf16.mxu0 0
    %2824 = vmatpush2.bf16.msra.mxu0 0
    %2825 = vmatprep.subr.bf16.mxu0 0
    %2826 = vmatpush2.bf16.msra.mxu0 0
    %2827 = vmatprep.subr.bf16.mxu0 0
    %2828 = vmatpush2.bf16.msra.mxu0 0
    %2829 = vmatprep.subr.bf16.mxu0 0
    %2830 = vmatpush2.bf16.msra.mxu0 0
    %2831 = vmatprep.subr.bf16.mxu0 0
    %2832 = vmatpush2.bf16.msra.mxu0 0
    %2833 = vmatprep.subr.bf16.mxu0 0
    %2834 = vmatpush2.bf16.msra.mxu0 0
    %2835 = vmatprep.subr.bf16.mxu0 0
    %2836 = vmatpush2.bf16.msra.mxu0 0
    %2837 = vmatprep.mubr.bf16.mxu0 0
    %2838 = vmatmul.mubr.bf16.gmra.mxu0 %v2782
    %v2839 = vpop.f32.mrf.mxu0
    %v2840 = vadd.f32 0.0, %v2839
    %v2841 = vpop.f32.mrf.mxu0
    %v2842 = vpop.f32.mrf.mxu0
    %v2843 = vadd.f32 0.0, %v2842
    %v2844 = vpop.f32.mrf.mxu0
    %2845 = vmatprep.mubr.bf16.mxu0 0
    %2846 = vmatmul.mubr.bf16.gmra.mxu0 %v2785
    %v2847 = vpop.f32.mrf.mxu0
    %v2848 = vadd.f32 0.0, %v2847
    %v2849 = vpop.f32.mrf.mxu0
    %v2850 = vpop.f32.mrf.mxu0
    %v2851 = vadd.f32 0.0, %v2850
    %v2852 = vpop.f32.mrf.mxu0
    %2853 = vmatprep.mubr.bf16.mxu0 0
    %2854 = vmatmul.mubr.bf16.gmra.mxu0 %v2788
    %v2855 = vpop.f32.mrf.mxu0
    %v2856 = vadd.f32 0.0, %v2855
    %v2857 = vpop.f32.mrf.mxu0
    %v2858 = vpop.f32.mrf.mxu0
    %v2859 = vadd.f32 0.0, %v2858
    %v2860 = vpop.f32.mrf.mxu0
    %2861 = vmatprep.mubr.bf16.mxu0 0
    %2862 = vmatmul.mubr.bf16.gmra.mxu0 %v2791
    %v2863 = vpop.f32.mrf.mxu0
    %v2864 = vadd.f32 0.0, %v2863
    %v2865 = vpop.f32.mrf.mxu0
    %v2866 = vpop.f32.mrf.mxu0
    %v2867 = vadd.f32 0.0, %v2866
    %v2868 = vpop.f32.mrf.mxu0
    %2869 = vmatprep.mubr.bf16.mxu0 0
    %2870 = vmatmul.mubr.bf16.gmra.mxu0 %v2794
    %v2871 = vpop.f32.mrf.mxu0
    %v2872 = vadd.f32 0.0, %v2871
    %v2873 = vpop.f32.mrf.mxu0
    %v2874 = vpop.f32.mrf.mxu0
    %v2875 = vadd.f32 0.0, %v2874
    %v2876 = vpop.f32.mrf.mxu0
    %2877 = vmatprep.mubr.bf16.mxu0 0
    %2878 = vmatmul.mubr.bf16.gmra.mxu0 %v2797
    %v2879 = vpop.f32.mrf.mxu0
    %v2880 = vadd.f32 0.0, %v2879
    %v2881 = vpop.f32.mrf.mxu0
    %v2882 = vpop.f32.mrf.mxu0
    %v2883 = vadd.f32 0.0, %v2882
    %v2884 = vpop.f32.mrf.mxu0
    %2885 = vmatprep.mubr.bf16.mxu0 0
    %2886 = vmatmul.mubr.bf16.gmra.mxu0 %v2800
    %v2887 = vpop.f32.mrf.mxu0
    %v2888 = vadd.f32 0.0, %v2887
    %v2889 = vpop.f32.mrf.mxu0
    %v2890 = vpop.f32.mrf.mxu0
    %v2891 = vadd.f32 0.0, %v2890
    %v2892 = vpop.f32.mrf.mxu0
    %2893 = vmatprep.mubr.bf16.mxu0 0
    %2894 = vmatmul.mubr.bf16.gmra.mxu0 %v2803
    %v2895 = vpop.f32.mrf.mxu0
    %v2896 = vadd.f32 0.0, %v2895
    %v2897 = vpop.f32.mrf.mxu0
    %v2898 = vpop.f32.mrf.mxu0
    %v2899 = vadd.f32 0.0, %v2898
    %v2900 = vpop.f32.mrf.mxu0
    %2901 = vdwg.mxu0
    %v2902 = vpack.c.bf16 %v2843, %v2840
    %v2903 = vpack.c.bf16 %v2851, %v2848
    %v2904 = vpack.c.bf16 %v2859, %v2856
    %v2905 = vpack.c.bf16 %v2867, %v2864
    %v2906 = vpack.c.bf16 %v2875, %v2872
    %v2907 = vpack.c.bf16 %v2883, %v2880
    %v2908 = vpack.c.bf16 %v2891, %v2888
    %v2909 = vpack.c.bf16 %v2899, %v2896
    %2910 = vmatprep.subr.bf16.mxu0 0
    %2911 = vmatpush1.bf16.msra.mxu0 %v2909
    %2912 = vmatprep.subr.bf16.mxu0 0
    %2913 = vmatpush1.bf16.msra.mxu0 %v2908
    %2914 = vmatprep.subr.bf16.mxu0 0
    %2915 = vmatpush1.bf16.msra.mxu0 %v2907
    %2916 = vmatprep.subr.bf16.mxu0 0
    %2917 = vmatpush1.bf16.msra.mxu0 %v2906
    %2918 = vmatprep.subr.bf16.mxu0 0
    %2919 = vmatpush1.bf16.msra.mxu0 %v2905
    %2920 = vmatprep.subr.bf16.mxu0 0
    %2921 = vmatpush1.bf16.msra.mxu0 %v2904
    %2922 = vmatprep.subr.bf16.mxu0 0
    %2923 = vmatpush1.bf16.msra.mxu0 %v2903
    %2924 = vmatprep.subr.bf16.mxu0 0
    %2925 = vmatpush1.bf16.msra.mxu0 %v2902
    %2926 = vmatprep.subr.bf16.mxu0 0
    %2927 = vmatpush2.bf16.msra.mxu0 0
    %2928 = vmatprep.subr.bf16.mxu0 0
    %2929 = vmatpush2.bf16.msra.mxu0 0
    %2930 = vmatprep.subr.bf16.mxu0 0
    %2931 = vmatpush2.bf16.msra.mxu0 0
    %2932 = vmatprep.subr.bf16.mxu0 0
    %2933 = vmatpush2.bf16.msra.mxu0 0
    %2934 = vmatprep.subr.bf16.mxu0 0
    %2935 = vmatpush2.bf16.msra.mxu0 0
    %2936 = vmatprep.subr.bf16.mxu0 0
    %2937 = vmatpush2.bf16.msra.mxu0 0
    %2938 = vmatprep.subr.bf16.mxu0 0
    %2939 = vmatpush2.bf16.msra.mxu0 0
    %2940 = vmatprep.subr.bf16.mxu0 0
    %2941 = vmatpush2.bf16.msra.mxu0 0
    %2942 = vmatprep.mubr.bf16.mxu0 0
    %2943 = vmatmul.mubr.bf16.gmra.mxu0 %v224
    %v2944 = vpop.f32.mrf.mxu0
    %v2945 = vadd.f32 %v2840, %v2944
    %v2946 = vpop.f32.mrf.mxu0
    %v2947 = vpop.f32.mrf.mxu0
    %v2948 = vadd.f32 %v2843, %v2947
    %v2949 = vpop.f32.mrf.mxu0
    %2950 = vmatprep.mubr.bf16.mxu0 0
    %2951 = vmatmul.mubr.bf16.gmra.mxu0 %v225
    %v2952 = vpop.f32.mrf.mxu0
    %v2953 = vadd.f32 %v2848, %v2952
    %v2954 = vpop.f32.mrf.mxu0
    %v2955 = vpop.f32.mrf.mxu0
    %v2956 = vadd.f32 %v2851, %v2955
    %v2957 = vpop.f32.mrf.mxu0
    %2958 = vmatprep.mubr.bf16.mxu0 0
    %2959 = vmatmul.mubr.bf16.gmra.mxu0 %v226
    %v2960 = vpop.f32.mrf.mxu0
    %v2961 = vadd.f32 %v2856, %v2960
    %v2962 = vpop.f32.mrf.mxu0
    %v2963 = vpop.f32.mrf.mxu0
    %v2964 = vadd.f32 %v2859, %v2963
    %v2965 = vpop.f32.mrf.mxu0
    %2966 = vmatprep.mubr.bf16.mxu0 0
    %2967 = vmatmul.mubr.bf16.gmra.mxu0 %v227
    %v2968 = vpop.f32.mrf.mxu0
    %v2969 = vadd.f32 %v2864, %v2968
    %v2970 = vpop.f32.mrf.mxu0
    %v2971 = vpop.f32.mrf.mxu0
    %v2972 = vadd.f32 %v2867, %v2971
    %v2973 = vpop.f32.mrf.mxu0
    %2974 = vmatprep.mubr.bf16.mxu0 0
    %2975 = vmatmul.mubr.bf16.gmra.mxu0 %v228
    %v2976 = vpop.f32.mrf.mxu0
    %v2977 = vadd.f32 %v2872, %v2976
    %v2978 = vpop.f32.mrf.mxu0
    %v2979 = vpop.f32.mrf.mxu0
    %v2980 = vadd.f32 %v2875, %v2979
    %v2981 = vpop.f32.mrf.mxu0
    %2982 = vmatprep.mubr.bf16.mxu0 0
    %2983 = vmatmul.mubr.bf16.gmra.mxu0 %v229
    %v2984 = vpop.f32.mrf.mxu0
    %v2985 = vadd.f32 %v2880, %v2984
    %v2986 = vpop.f32.mrf.mxu0
    %v2987 = vpop.f32.mrf.mxu0
    %v2988 = vadd.f32 %v2883, %v2987
    %v2989 = vpop.f32.mrf.mxu0
    %2990 = vmatprep.mubr.bf16.mxu0 0
    %2991 = vmatmul.mubr.bf16.gmra.mxu0 %v230
    %v2992 = vpop.f32.mrf.mxu0
    %v2993 = vadd.f32 %v2888, %v2992
    %v2994 = vpop.f32.mrf.mxu0
    %v2995 = vpop.f32.mrf.mxu0
    %v2996 = vadd.f32 %v2891, %v2995
    %v2997 = vpop.f32.mrf.mxu0
    %2998 = vmatprep.mubr.bf16.mxu0 0
    %2999 = vmatmul.mubr.bf16.gmra.mxu0 %v231
    %v3000 = vpop.f32.mrf.mxu0
    %v3001 = vadd.f32 %v2896, %v3000
    %v3002 = vpop.f32.mrf.mxu0
    %v3003 = vpop.f32.mrf.mxu0
    %v3004 = vadd.f32 %v2899, %v3003
    %v3005 = vpop.f32.mrf.mxu0
    %3006 = vdwg.mxu0
    %v3007 = vmul.f32 %v150, %v2945
    %v3008 = vmul.f32 %v151, %v2948
    %v3009 = vmul.f32 %v152, %v2953
    %v3010 = vmul.f32 %v153, %v2956
    %v3011 = vmul.f32 %v154, %v2961
    %v3012 = vmul.f32 %v155, %v2964
    %v3013 = vmul.f32 %v156, %v2969
    %v3014 = vmul.f32 %v157, %v2972
    %v3015 = vmul.f32 %v158, %v2977
    %v3016 = vmul.f32 %v159, %v2980
    %v3017 = vmul.f32 %v160, %v2985
    %v3018 = vmul.f32 %v161, %v2988
    %v3019 = vmul.f32 %v162, %v2993
    %v3020 = vmul.f32 %v163, %v2996
    %v3021 = vmul.f32 %v164, %v3001
    %v3022 = vmul.f32 %v165, %v3004
    %v3024 = vlaneseq
    %v3025 = vshrl.u32 %v3024, 7
    %v3026 = vsub.s32 0, %v3025
    %v3027 = vrot.slane %v2755, %v3026
    %v3029 = vadd.f32 %v3007, %v3027
    %v3030 = vadd.f32 %v3008, %v3027
    %v3031 = vadd.f32 %v3009, %v3027
    %v3032 = vadd.f32 %v3010, %v3027
    %v3033 = vadd.f32 %v3011, %v3027
    %v3034 = vadd.f32 %v3012, %v3027
    %v3035 = vadd.f32 %v3013, %v3027
    %v3036 = vadd.f32 %v3014, %v3027
    %v3037 = vadd.f32 %v3015, %v3027
    %v3038 = vadd.f32 %v3016, %v3027
    %v3039 = vadd.f32 %v3017, %v3027
    %v3040 = vadd.f32 %v3018, %v3027
    %v3041 = vadd.f32 %v3019, %v3027
    %v3042 = vadd.f32 %v3020, %v3027
    %v3043 = vadd.f32 %v3021, %v3027
    %v3044 = vadd.f32 %v3022, %v3027
    %v3045 = vtanh.pop %v3029
    %v3046 = vtanh.pop %v3030
    %v3047 = vtanh.pop %v3031
    %v3048 = vtanh.pop %v3032
    %v3049 = vtanh.pop %v3033
    %v3050 = vtanh.pop %v3034
    %v3051 = vtanh.pop %v3035
    %v3052 = vtanh.pop %v3036
    %v3053 = vtanh.pop %v3037
    %v3054 = vtanh.pop %v3038
    %v3055 = vtanh.pop %v3039
    %v3056 = vtanh.pop %v3040
    %v3057 = vtanh.pop %v3041
    %v3058 = vtanh.pop %v3042
    %v3059 = vtanh.pop %v3043
    %v3060 = vtanh.pop %v3044
    %v3061 = vld [vmem:[%s12] sm:$0xff]
    %v3062 = vld [vmem:[%s12 + $0x8] sm:$0xff]
    %v3063 = vld [vmem:[%s13] sm:$0x1]
    %v3064 = vmul.f32 %v150, %v3045
    %v3065 = vmul.f32 %v151, %v3046
    %v3066 = vmul.f32 %v152, %v3047
    %v3067 = vmul.f32 %v153, %v3048
    %v3068 = vmul.f32 %v154, %v3049
    %v3069 = vmul.f32 %v155, %v3050
    %v3070 = vmul.f32 %v156, %v3051
    %v3071 = vmul.f32 %v157, %v3052
    %v3072 = vmul.f32 %v158, %v3053
    %v3073 = vmul.f32 %v159, %v3054
    %v3074 = vmul.f32 %v160, %v3055
    %v3075 = vmul.f32 %v161, %v3056
    %v3076 = vmul.f32 %v162, %v3057
    %v3077 = vmul.f32 %v163, %v3058
    %v3078 = vmul.f32 %v164, %v3059
    %v3079 = vmul.f32 %v165, %v3060
    %v3080 = vpack.c.bf16 %v3065, %v3064
    %v3081 = vpack.c.bf16 %v3067, %v3066
    %v3082 = vpack.c.bf16 %v3069, %v3068
    %v3083 = vpack.c.bf16 %v3071, %v3070
    %v3084 = vpack.c.bf16 %v3073, %v3072
    %v3085 = vpack.c.bf16 %v3075, %v3074
    %v3086 = vpack.c.bf16 %v3077, %v3076
    %v3087 = vpack.c.bf16 %v3079, %v3078
    %v3088 = vpack.c.bf16 %v3062, %v3061
    %v3090 = vsel %vm538, %v3080, 0
    %v3093 = vsel %vm538, %v3081, 0
    %v3096 = vsel %vm538, %v3082, 0
    %v3099 = vsel %vm538, %v3083, 0
    %v3102 = vsel %vm538, %v3084, 0
    %v3105 = vsel %vm538, %v3085, 0
    %v3108 = vsel %vm538, %v3086, 0
    %v3111 = vsel %vm538, %v3087, 0
    %3113 = vmatprep.subr.bf16.mxu0 0
    %3114 = vmatpush1.bf16.msra.mxu0 0
    %3115 = vmatprep.subr.bf16.mxu0 0
    %3116 = vmatpush1.bf16.msra.mxu0 0
    %3117 = vmatprep.subr.bf16.mxu0 0
    %3118 = vmatpush1.bf16.msra.mxu0 0
    %3119 = vmatprep.subr.bf16.mxu0 0
    %3120 = vmatpush1.bf16.msra.mxu0 0
    %3121 = vmatprep.subr.bf16.mxu0 0
    %3122 = vmatpush1.bf16.msra.mxu0 0
    %3123 = vmatprep.subr.bf16.mxu0 0
    %3124 = vmatpush1.bf16.msra.mxu0 0
    %3125 = vmatprep.subr.bf16.mxu0 0
    %3126 = vmatpush1.bf16.msra.mxu0 0
    %3127 = vmatprep.subr.bf16.mxu0 0
    %3128 = vmatpush1.bf16.msra.mxu0 %v3088
    %3129 = vmatprep.subr.bf16.mxu0 0
    %3130 = vmatpush2.bf16.msra.mxu0 0
    %3131 = vmatprep.subr.bf16.mxu0 0
    %3132 = vmatpush2.bf16.msra.mxu0 0
    %3133 = vmatprep.subr.bf16.mxu0 0
    %3134 = vmatpush2.bf16.msra.mxu0 0
    %3135 = vmatprep.subr.bf16.mxu0 0
    %3136 = vmatpush2.bf16.msra.mxu0 0
    %3137 = vmatprep.subr.bf16.mxu0 0
    %3138 = vmatpush2.bf16.msra.mxu0 0
    %3139 = vmatprep.subr.bf16.mxu0 0
    %3140 = vmatpush2.bf16.msra.mxu0 0
    %3141 = vmatprep.subr.bf16.mxu0 0
    %3142 = vmatpush2.bf16.msra.mxu0 0
    %3143 = vmatprep.subr.bf16.mxu0 0
    %3144 = vmatpush2.bf16.msra.mxu0 0
    %3145 = vmatprep.mubr.bf16.mxu0 0
    %3146 = vmatmul.mubr.bf16.gmra.mxu0 %v3090
    %v3147 = vpop.f32.mrf.mxu0
    %v3148 = vadd.f32 0.0, %v3147
    %v3149 = vpop.f32.mrf.mxu0
    %v3150 = vpop.f32.mrf.mxu0
    %v3151 = vadd.f32 0.0, %v3150
    %v3152 = vpop.f32.mrf.mxu0
    %3153 = vmatprep.mubr.bf16.mxu0 0
    %3154 = vmatmul.mubr.bf16.gmra.mxu0 %v3093
    %v3155 = vpop.f32.mrf.mxu0
    %v3156 = vadd.f32 0.0, %v3155
    %v3157 = vpop.f32.mrf.mxu0
    %v3158 = vpop.f32.mrf.mxu0
    %v3159 = vadd.f32 0.0, %v3158
    %v3160 = vpop.f32.mrf.mxu0
    %3161 = vmatprep.mubr.bf16.mxu0 0
    %3162 = vmatmul.mubr.bf16.gmra.mxu0 %v3096
    %v3163 = vpop.f32.mrf.mxu0
    %v3164 = vadd.f32 0.0, %v3163
    %v3165 = vpop.f32.mrf.mxu0
    %v3166 = vpop.f32.mrf.mxu0
    %v3167 = vadd.f32 0.0, %v3166
    %v3168 = vpop.f32.mrf.mxu0
    %3169 = vmatprep.mubr.bf16.mxu0 0
    %3170 = vmatmul.mubr.bf16.gmra.mxu0 %v3099
    %v3171 = vpop.f32.mrf.mxu0
    %v3172 = vadd.f32 0.0, %v3171
    %v3173 = vpop.f32.mrf.mxu0
    %v3174 = vpop.f32.mrf.mxu0
    %v3175 = vadd.f32 0.0, %v3174
    %v3176 = vpop.f32.mrf.mxu0
    %3177 = vmatprep.mubr.bf16.mxu0 0
    %3178 = vmatmul.mubr.bf16.gmra.mxu0 %v3102
    %v3179 = vpop.f32.mrf.mxu0
    %v3180 = vadd.f32 0.0, %v3179
    %v3181 = vpop.f32.mrf.mxu0
    %v3182 = vpop.f32.mrf.mxu0
    %v3183 = vadd.f32 0.0, %v3182
    %v3184 = vpop.f32.mrf.mxu0
    %3185 = vmatprep.mubr.bf16.mxu0 0
    %3186 = vmatmul.mubr.bf16.gmra.mxu0 %v3105
    %v3187 = vpop.f32.mrf.mxu0
    %v3188 = vadd.f32 0.0, %v3187
    %v3189 = vpop.f32.mrf.mxu0
    %v3190 = vpop.f32.mrf.mxu0
    %v3191 = vadd.f32 0.0, %v3190
    %v3192 = vpop.f32.mrf.mxu0
    %3193 = vmatprep.mubr.bf16.mxu0 0
    %3194 = vmatmul.mubr.bf16.gmra.mxu0 %v3108
    %v3195 = vpop.f32.mrf.mxu0
    %v3196 = vadd.f32 0.0, %v3195
    %v3197 = vpop.f32.mrf.mxu0
    %v3198 = vpop.f32.mrf.mxu0
    %v3199 = vadd.f32 0.0, %v3198
    %v3200 = vpop.f32.mrf.mxu0
    %3201 = vmatprep.mubr.bf16.mxu0 0
    %3202 = vmatmul.mubr.bf16.gmra.mxu0 %v3111
    %v3203 = vpop.f32.mrf.mxu0
    %v3204 = vadd.f32 0.0, %v3203
    %v3205 = vpop.f32.mrf.mxu0
    %v3206 = vpop.f32.mrf.mxu0
    %v3207 = vadd.f32 0.0, %v3206
    %v3208 = vpop.f32.mrf.mxu0
    %3209 = vdwg.mxu0
    %v3210 = vpack.c.bf16 %v3151, %v3148
    %v3211 = vpack.c.bf16 %v3159, %v3156
    %v3212 = vpack.c.bf16 %v3167, %v3164
    %v3213 = vpack.c.bf16 %v3175, %v3172
    %v3214 = vpack.c.bf16 %v3183, %v3180
    %v3215 = vpack.c.bf16 %v3191, %v3188
    %v3216 = vpack.c.bf16 %v3199, %v3196
    %v3217 = vpack.c.bf16 %v3207, %v3204
    %3218 = vmatprep.subr.bf16.mxu0 0
    %3219 = vmatpush1.bf16.msra.mxu0 %v3217
    %3220 = vmatprep.subr.bf16.mxu0 0
    %3221 = vmatpush1.bf16.msra.mxu0 %v3216
    %3222 = vmatprep.subr.bf16.mxu0 0
    %3223 = vmatpush1.bf16.msra.mxu0 %v3215
    %3224 = vmatprep.subr.bf16.mxu0 0
    %3225 = vmatpush1.bf16.msra.mxu0 %v3214
    %3226 = vmatprep.subr.bf16.mxu0 0
    %3227 = vmatpush1.bf16.msra.mxu0 %v3213
    %3228 = vmatprep.subr.bf16.mxu0 0
    %3229 = vmatpush1.bf16.msra.mxu0 %v3212
    %3230 = vmatprep.subr.bf16.mxu0 0
    %3231 = vmatpush1.bf16.msra.mxu0 %v3211
    %3232 = vmatprep.subr.bf16.mxu0 0
    %3233 = vmatpush1.bf16.msra.mxu0 %v3210
    %3234 = vmatprep.subr.bf16.mxu0 0
    %3235 = vmatpush2.bf16.msra.mxu0 0
    %3236 = vmatprep.subr.bf16.mxu0 0
    %3237 = vmatpush2.bf16.msra.mxu0 0
    %3238 = vmatprep.subr.bf16.mxu0 0
    %3239 = vmatpush2.bf16.msra.mxu0 0
    %3240 = vmatprep.subr.bf16.mxu0 0
    %3241 = vmatpush2.bf16.msra.mxu0 0
    %3242 = vmatprep.subr.bf16.mxu0 0
    %3243 = vmatpush2.bf16.msra.mxu0 0
    %3244 = vmatprep.subr.bf16.mxu0 0
    %3245 = vmatpush2.bf16.msra.mxu0 0
    %3246 = vmatprep.subr.bf16.mxu0 0
    %3247 = vmatpush2.bf16.msra.mxu0 0
    %3248 = vmatprep.subr.bf16.mxu0 0
    %3249 = vmatpush2.bf16.msra.mxu0 0
    %3250 = vmatprep.mubr.bf16.mxu0 0
    %3251 = vmatmul.mubr.bf16.gmra.mxu0 %v224
    %v3252 = vpop.f32.mrf.mxu0
    %v3253 = vadd.f32 %v3148, %v3252
    %v3254 = vpop.f32.mrf.mxu0
    %v3255 = vpop.f32.mrf.mxu0
    %v3256 = vadd.f32 %v3151, %v3255
    %v3257 = vpop.f32.mrf.mxu0
    %3258 = vmatprep.mubr.bf16.mxu0 0
    %3259 = vmatmul.mubr.bf16.gmra.mxu0 %v225
    %v3260 = vpop.f32.mrf.mxu0
    %v3261 = vadd.f32 %v3156, %v3260
    %v3262 = vpop.f32.mrf.mxu0
    %v3263 = vpop.f32.mrf.mxu0
    %v3264 = vadd.f32 %v3159, %v3263
    %v3265 = vpop.f32.mrf.mxu0
    %3266 = vmatprep.mubr.bf16.mxu0 0
    %3267 = vmatmul.mubr.bf16.gmra.mxu0 %v226
    %v3268 = vpop.f32.mrf.mxu0
    %v3269 = vadd.f32 %v3164, %v3268
    %v3270 = vpop.f32.mrf.mxu0
    %v3271 = vpop.f32.mrf.mxu0
    %v3272 = vadd.f32 %v3167, %v3271
    %v3273 = vpop.f32.mrf.mxu0
    %3274 = vmatprep.mubr.bf16.mxu0 0
    %3275 = vmatmul.mubr.bf16.gmra.mxu0 %v227
    %v3276 = vpop.f32.mrf.mxu0
    %v3277 = vadd.f32 %v3172, %v3276
    %v3278 = vpop.f32.mrf.mxu0
    %v3279 = vpop.f32.mrf.mxu0
    %v3280 = vadd.f32 %v3175, %v3279
    %v3281 = vpop.f32.mrf.mxu0
    %3282 = vmatprep.mubr.bf16.mxu0 0
    %3283 = vmatmul.mubr.bf16.gmra.mxu0 %v228
    %v3284 = vpop.f32.mrf.mxu0
    %v3285 = vadd.f32 %v3180, %v3284
    %v3286 = vpop.f32.mrf.mxu0
    %v3287 = vpop.f32.mrf.mxu0
    %v3288 = vadd.f32 %v3183, %v3287
    %v3289 = vpop.f32.mrf.mxu0
    %3290 = vmatprep.mubr.bf16.mxu0 0
    %3291 = vmatmul.mubr.bf16.gmra.mxu0 %v229
    %v3292 = vpop.f32.mrf.mxu0
    %v3293 = vadd.f32 %v3188, %v3292
    %v3294 = vpop.f32.mrf.mxu0
    %v3295 = vpop.f32.mrf.mxu0
    %v3296 = vadd.f32 %v3191, %v3295
    %v3297 = vpop.f32.mrf.mxu0
    %3298 = vmatprep.mubr.bf16.mxu0 0
    %3299 = vmatmul.mubr.bf16.gmra.mxu0 %v230
    %v3300 = vpop.f32.mrf.mxu0
    %v3301 = vadd.f32 %v3196, %v3300
    %v3302 = vpop.f32.mrf.mxu0
    %v3303 = vpop.f32.mrf.mxu0
    %v3304 = vadd.f32 %v3199, %v3303
    %v3305 = vpop.f32.mrf.mxu0
    %3306 = vmatprep.mubr.bf16.mxu0 0
    %3307 = vmatmul.mubr.bf16.gmra.mxu0 %v231
    %v3308 = vpop.f32.mrf.mxu0
    %v3309 = vadd.f32 %v3204, %v3308
    %v3310 = vpop.f32.mrf.mxu0
    %v3311 = vpop.f32.mrf.mxu0
    %v3312 = vadd.f32 %v3207, %v3311
    %v3313 = vpop.f32.mrf.mxu0
    %3314 = vdwg.mxu0
    %v3315 = vmul.f32 %v150, %v3253
    %v3316 = vmul.f32 %v151, %v3256
    %v3317 = vmul.f32 %v152, %v3261
    %v3318 = vmul.f32 %v153, %v3264
    %v3319 = vmul.f32 %v154, %v3269
    %v3320 = vmul.f32 %v155, %v3272
    %v3321 = vmul.f32 %v156, %v3277
    %v3322 = vmul.f32 %v157, %v3280
    %v3323 = vmul.f32 %v158, %v3285
    %v3324 = vmul.f32 %v159, %v3288
    %v3325 = vmul.f32 %v160, %v3293
    %v3326 = vmul.f32 %v161, %v3296
    %v3327 = vmul.f32 %v162, %v3301
    %v3328 = vmul.f32 %v163, %v3304
    %v3329 = vmul.f32 %v164, %v3309
    %v3330 = vmul.f32 %v165, %v3312
    %v3332 = vlaneseq
    %v3333 = vshrl.u32 %v3332, 7
    %v3334 = vsub.s32 0, %v3333
    %v3335 = vrot.slane %v3063, %v3334
    %v3337 = vadd.f32 %v3315, %v3335
    %v3338 = vadd.f32 %v3316, %v3335
    %v3339 = vadd.f32 %v3317, %v3335
    %v3340 = vadd.f32 %v3318, %v3335
    %v3341 = vadd.f32 %v3319, %v3335
    %v3342 = vadd.f32 %v3320, %v3335
    %v3343 = vadd.f32 %v3321, %v3335
    %v3344 = vadd.f32 %v3322, %v3335
    %v3345 = vadd.f32 %v3323, %v3335
    %v3346 = vadd.f32 %v3324, %v3335
    %v3347 = vadd.f32 %v3325, %v3335
    %v3348 = vadd.f32 %v3326, %v3335
    %v3349 = vadd.f32 %v3327, %v3335
    %v3350 = vadd.f32 %v3328, %v3335
    %v3351 = vadd.f32 %v3329, %v3335
    %v3352 = vadd.f32 %v3330, %v3335
    %3353 = vst.msk [vmem:[%s14] sm:$0xff] %vm368, %v3337
    %3354 = vst.msk [vmem:[%s14 + $0x8] sm:$0xff] %vm368, %v3338
    %3355 = vst.msk [vmem:[%s14 + $0x10] sm:$0xff] %vm368, %v3339
    %3356 = vst.msk [vmem:[%s14 + $0x18] sm:$0xff] %vm368, %v3340
    %3357 = vst.msk [vmem:[%s14 + $0x20] sm:$0xff] %vm368, %v3341
    %3358 = vst.msk [vmem:[%s14 + $0x28] sm:$0xff] %vm368, %v3342
    %3359 = vst.msk [vmem:[%s14 + $0x30] sm:$0xff] %vm368, %v3343
    %3360 = vst.msk [vmem:[%s14 + $0x38] sm:$0xff] %vm368, %v3344
    %3361 = vst.msk [vmem:[%s14 + $0x40] sm:$0xff] %vm368, %v3345
    %3362 = vst.msk [vmem:[%s14 + $0x48] sm:$0xff] %vm368, %v3346
    %3363 = vst.msk [vmem:[%s14 + $0x50] sm:$0xff] %vm368, %v3347
    %3364 = vst.msk [vmem:[%s14 + $0x58] sm:$0xff] %vm368, %v3348
    %3365 = vst.msk [vmem:[%s14 + $0x60] sm:$0xff] %vm368, %v3349
    %3366 = vst.msk [vmem:[%s14 + $0x68] sm:$0xff] %vm368, %v3350
    %3367 = vst.msk [vmem:[%s14 + $0x70] sm:$0xff] %vm368, %v3351
    %3368 = vst.msk [vmem:[%s14 + $0x78] sm:$0xff] %vm368, %v3352
    // Predicated region
    $region58: #{tpu_custom_call.1} parent=1 // pred_check
      _
    $region59: #{tpu_custom_call.1} parent=1 // pred_check_branch
      %3370 = sbr.rel (0) target = $region61
    $region60: #{tpu_custom_call.1} parent=1 // pred_region
      _
    $region61: #{tpu_custom_call.1} parent=1 // pred_fallthru
      _
    // Predicated region
    $region62: #{tpu_custom_call.1} parent=1 // pred_check
      _
    $region63: #{tpu_custom_call.1} parent=1 // pred_check_branch
      %3372 = sbr.rel (0) target = $region65
    $region64: #{tpu_custom_call.1} parent=1 // pred_region
      %s3374 = ssub.s32 2048, 2048
      %3375 = vsyncadd [#allocation3], %s3374
      %s3376 = sshll.u32 [#allocation2], 4
      %s3377 = int_to_ptr.vmem [resolvable:$true] %s3376
      %3382 = dma.vmem_to_hbm [thread:$0]  %s3377, 2048, %s15, [#allocation3], 128, 128, 8
    $region65: #{tpu_custom_call.1} parent=1 // pred_fallthru
      _
    // Predicated region
    $region66: #{tpu_custom_call.1} parent=1 // pred_check
      _
    $region67: #{tpu_custom_call.1} parent=1 // pred_check_branch
      %3384 = sbr.rel (0) target = $region69
    $region68: #{tpu_custom_call.1} parent=1 // pred_region
      %s3386 = ssub.s32 16, 16
      %3387 = vsyncadd [#allocation5], %s3386
      %s3389 = sshll.u32 [#allocation4], 4
      %s3390 = int_to_ptr.vmem [resolvable:$true] %s3389
      %3392 = dma.vmem_to_hbm [thread:$0]  %s3390, 16, %s16, [#allocation5]
    $region69: #{tpu_custom_call.1} parent=1 // pred_fallthru
      _
    // Predicated region
    $region70: #{tpu_custom_call.1} parent=1 // pred_check
      _
    $region71: #{tpu_custom_call.1} parent=1 // pred_check_branch
      %3394 = sbr.rel (0) target = $region73
    $region72: #{tpu_custom_call.1} parent=1 // pred_region
      %s3396 = ssub.s32 16, 16
      %3397 = vsyncadd [#allocation5], %s3396
      %s3399 = sshll.u32 [#allocation6], 4
      %s3400 = int_to_ptr.vmem [resolvable:$true] %s3399
      %3402 = dma.vmem_to_hbm [thread:$0]  %s3400, 16, %s17, [#allocation5]
    $region73: #{tpu_custom_call.1} parent=1 // pred_fallthru
      _
    // Predicated region
    $region74: #{tpu_custom_call.1} parent=1 // pred_check
      _
    $region75: #{tpu_custom_call.1} parent=1 // pred_check_branch
      %3404 = sbr.rel (0) target = $region77
    $region76: #{tpu_custom_call.1} parent=1 // pred_region
      _
    $region77: #{tpu_custom_call.1} parent=1 // pred_fallthru
      _
    // Predicated region
    $region78: #{tpu_custom_call.1} parent=1 // pred_check
      _
    $region79: #{tpu_custom_call.1} parent=1 // pred_check_branch
      %3406 = sbr.rel (0) target = $region81
    $region80: #{tpu_custom_call.1} parent=1 // pred_region
      %3407 = dma.done [#allocation3], 2048
    $region81: #{tpu_custom_call.1} parent=1 // pred_fallthru
      _
    // Predicated region
    $region82: #{tpu_custom_call.1} parent=1 // pred_check
      _
    $region83: #{tpu_custom_call.1} parent=1 // pred_check_branch
      %3409 = sbr.rel (0) target = $region85
    $region84: #{tpu_custom_call.1} parent=1 // pred_region
      %3410 = dma.done [#allocation5], 16
    $region85: #{tpu_custom_call.1} parent=1 // pred_fallthru
      _
    // Predicated region
    $region86: #{tpu_custom_call.1} parent=1 // pred_check
      _
    $region87: #{tpu_custom_call.1} parent=1 // pred_check_branch
      %3412 = sbr.rel (0) target = $region89
    $region88: #{tpu_custom_call.1} parent=1 // pred_region
      %3413 = dma.done [#allocation5], 16
    $region89: #{tpu_custom_call.1} parent=1 // pred_fallthru
      _
    %3414 = vsyncpa [#allocation3], 1
    %3415 = vsyncpa [#allocation5], 1

</llo_original>
